<compile_context>
chip_gen: v6e
topology: v6e:2x2x1
jax: 0.10.0
libtpu: 0.0.40
codegen_flags: <defaults>
</compile_context>

<pallas_src>
import jax
import jax.numpy as jnp
from jax.experimental import pallas as pl
from jax.experimental.pallas import tpu as pltpu


def _round_up(x, m):
    return (x + m - 1) // m * m


def _max_tile():
    """256-wide tiles on v6e/v7x (2x256x256 MXU); 128 on v5e and older."""
    try:
        kind = jax.devices()[0].device_kind.lower()
        for tag in ("v2", "v3", "v4", "v5"):
            if tag in kind:
                return 128
    except Exception:
        pass
    return 256


_TILE_MAX = _max_tile()


# ----------------------------- Pallas matmul ------------------------------ #
def _mm_stats_kernel(a_ref, b_ref, o_ref, sum_ref, sq_ref):
    # bf16 x bf16 -> f32 accumulation on the MXU; single full-K block so no
    # k-grid / accumulator scratch is needed.
    acc = jnp.dot(a_ref[...], b_ref[...], preferred_element_type=jnp.float32)
    o_ref[...] = acc
    # Fused BN-statistics epilogue (per-channel sum / sum-of-squares). Padded
    # rows of A are zeros, so they contribute nothing to either statistic.
    sum_ref[...] = jnp.sum(acc, axis=0, keepdims=True)[None]
    sq_ref[...] = jnp.sum(acc * acc, axis=0, keepdims=True)[None]


def matmul_with_stats(a, b):
    """(M,K) @ (K,N) -> (out_f32, per-col sum, per-col sum of squares)."""
    M, K = a.shape
    K2, N = b.shape
    assert K == K2
    a = a.astype(jnp.bfloat16)
    b = b.astype(jnp.bfloat16)

    # Tiny matmuls (fc head, deep layers at toy batch sizes): plain XLA dot.
    if M < 32 or N < 64:
        out = jnp.dot(a, b, preferred_element_type=jnp.float32)
        return out, jnp.sum(out, axis=0), jnp.sum(out * out, axis=0)

    tmax = _TILE_MAX
    if M >= tmax:
        tm = tmax
        mp = _round_up(M, tm)
    else:
        tm = _round_up(M, 8)      # block == full (padded) dim is allowed
        mp = tm
    tn = min(tmax, N) if N % 128 == 0 else N
    if N % tn:
        tn = N
    m_blocks, n_blocks = mp // tm, N // tn

    a_p = a if mp == M else jnp.pad(a, ((0, mp - M), (0, 0)))

    cost = pl.CostEstimate(
        flops=2 * mp * K * N,
        transcendentals=0,
        bytes_accessed=mp * K * 2 + K * N * 2 + mp * N * 4 + 2 * m_blocks * N * 4,
    )

    out, csum, csq = pl.pallas_call(
        _mm_stats_kernel,
        out_shape=(
            jax.ShapeDtypeStruct((mp, N), jnp.float32),
            jax.ShapeDtypeStruct((m_blocks, 1, N), jnp.float32),
            jax.ShapeDtypeStruct((m_blocks, 1, N), jnp.float32),
        ),
        grid_spec=pltpu.PrefetchScalarGridSpec(
            num_scalar_prefetch=0,
            # Grid order (n, m): the inner M sweep keeps the weight block (B)
            # index constant -> it stays resident in VMEM (no re-DMA per tile).
            grid=(n_blocks, m_blocks),
            in_specs=[
                pl.BlockSpec((tm, K), lambda j, i: (i, 0)),
                pl.BlockSpec((K, tn), lambda j, i: (0, j)),
            ],
            out_specs=(
                pl.BlockSpec((tm, tn), lambda j, i: (i, j)),
                pl.BlockSpec((1, 1, tn), lambda j, i: (i, 0, j)),
                pl.BlockSpec((1, 1, tn), lambda j, i: (i, 0, j)),
            ),
        ),
        compiler_params=pltpu.CompilerParams(
            dimension_semantics=("parallel", "parallel"),
            vmem_limit_bytes=32 * 1024 * 1024,  # worst-case footprint ~10 MiB
        ),
        cost_estimate=cost,
    )(a_p, b)

    chan_sum = jnp.sum(csum, axis=(0, 1))
    chan_sq = jnp.sum(csq, axis=(0, 1))
    if mp != M:
        out = out[:M]
    return out, chan_sum, chan_sq


# --------------------------- conv / bn / pooling --------------------------- #
def conv2d(x, w_kc, ksize, stride, padding):
    """x: NHWC f32; w_kc: (kh*kw*Cin, Cout) bf16 (pre-reshaped at init).

    Returns (out NHWC f32, per-channel sum, per-channel sum of squares).
    """
    kh = kw = ksize
    n, h, wd, cin = x.shape
    K, cout = w_kc.shape
    assert K == kh * kw * cin
    xb = x.astype(jnp.bfloat16)          # build im2col directly in bf16
    xp = jnp.pad(xb, ((0, 0), (padding, padding), (padding, padding), (0, 0)))
    ho = (h + 2 * padding - kh) // stride + 1
    wo = (wd + 2 * padding - kw) // stride + 1
    patches = []
    for i in range(kh):
        for j in range(kw):
            patches.append(
                xp[:, i : i + stride * ho : stride, j : j + stride * wo : stride, :]
            )
    # (n, ho, wo, taps, cin) -> (n*ho*wo, taps*cin); matches (kh,kw,cin,cout)
    # weight flattening order.
    cols = jnp.stack(patches, axis=3).reshape(n * ho * wo, K)
    out, s, ss = matmul_with_stats(cols, w_kc)  # hot path: Pallas MXU kernel
    return out.reshape(n, ho, wo, cout), s, ss


def bn_apply(x, chan_sum, chan_sumsq, eps=1e-5):
    # nn.BatchNorm2d in (default) training mode: per-channel batch statistics,
    # biased variance, weight=1, bias=0. Stats come from the matmul kernel.
    count = x.shape[0] * x.shape[1] * x.shape[2]
    mean = chan_sum / count
    var = jnp.maximum(chan_sumsq / count - mean * mean, 0.0)
    return (x - mean) * jax.lax.rsqrt(var + eps)


def maxpool_3x3_s2_p1(x):
    return jax.lax.reduce_window(
        x,
        -jnp.inf,
        jax.lax.max,
        window_dimensions=(1, 3, 3, 1),
        window_strides=(1, 2, 2, 1),
        padding=((0, 0), (1, 1), (1, 1), (0, 0)),
    )


# ------------------------------ ResNet blocks ------------------------------ #
def basic_block(x, p, stride):
    identity = x
    out, s, ss = conv2d(x, p["conv1"], 3, stride, 1)
    out = jnp.maximum(bn_apply(out, s, ss), 0.0)
    out, s, ss = conv2d(out, p["conv2"], 3, 1, 1)
    out = bn_apply(out, s, ss)
    if "down" in p:
        d, ds, dss = conv2d(x, p["down"], 1, stride, 0)
        identity = bn_apply(d, ds, dss)
    return jnp.maximum(out + identity, 0.0)


def resnet18_forward(x_nchw, params):
    x = jnp.transpose(x_nchw, (0, 2, 3, 1))  # NCHW -> NHWC
    out, s, ss = conv2d(x, params["conv1"], 7, 2, 3)
    x = jnp.maximum(bn_apply(out, s, ss), 0.0)
    x = maxpool_3x3_s2_p1(x)
    for li, layer in enumerate(params["layers"]):
        for bi, bp in enumerate(layer):
            stride = 2 if (li > 0 and bi == 0) else 1
            x = basic_block(x, bp, stride)
    x = jnp.mean(x, axis=(1, 2))  # AdaptiveAvgPool2d((1,1)) + flatten -> (N, 512)
    # fc head is tiny (e.g. 2x512 @ 512x10): far below MXU tile size -> XLA dot.
    logits = jnp.dot(x, params["fc_w"]) + params["fc_b"]
    return logits


# ------------------------------ parameter init ----------------------------- #
def init_params(key, num_classes=10):
    layers_cfg = [2, 2, 2, 2]  # ResNet-18 with BasicBlock (expansion = 1)
    planes_cfg = [64, 128, 256, 512]
    keys = iter(jax.random.split(key, 64))

    def conv_w(k, kh, kw, cin, cout):
        # kaiming_normal_(mode='fan_out', nonlinearity='relu'), then pre-reshape
        # HWIO -> (K, Cout) and pre-cast to bf16 once (weights are static).
        std = (2.0 / (kh * kw * cout)) ** 0.5
        w = std * jax.random.normal(k, (kh, kw, cin, cout), jnp.float32)
        return w.reshape(kh * kw * cin, cout).astype(jnp.bfloat16)

    params = {"conv1": conv_w(next(keys), 7, 7, 3, 64)}
    inplanes = 64
    layers = []
    for li, (blocks, planes) in enumerate(zip(layers_cfg, planes_cfg)):
        layer = []
        for bi in range(blocks):
            stride = 2 if (li > 0 and bi == 0) else 1
            bp = {
                "conv1": conv_w(next(keys), 3, 3, inplanes, planes),
                "conv2": conv_w(next(keys), 3, 3, planes, planes),
            }
            if stride != 1 or inplanes != planes:
                bp["down"] = conv_w(next(keys), 1, 1, inplanes, planes)
            inplanes = planes
            layer.append(bp)
        layers.append(layer)
    params["layers"] = layers

    fc_in = 512  # 512 * BasicBlock.expansion
    bound = 1.0 / (fc_in ** 0.5)
    params["fc_w"] = jax.random.uniform(
        next(keys), (fc_in, num_classes), jnp.float32, -bound, bound
    )
    params["fc_b"] = jax.random.uniform(
        next(keys), (num_classes,), jnp.float32, -bound, bound
    )
    return params


# ---------------------------------- main ----------------------------------- #
if __name__ == "__main__":
    key = jax.random.PRNGKey(0)
    pkey, xkey = jax.random.split(key)
    params = init_params(pkey, num_classes=10)
    # Small synthetic input: batch=2, 3 channels (required by conv1), 32x32.
    x = jax.random.normal(xkey, (2, 3, 32, 32), jnp.float32)

    fwd = jax.jit(resnet18_forward)
    logits = fwd(x, params)
    jax.block_until_ready(logits)
    assert logits.shape == (2, 10) and logits.dtype == jnp.float32
    print("KERNEL_OK")
</pallas_src>

<mosaic_0001>
module attributes {stable_mosaic.version = 11 : i64} {
  func.func @_mm_stats_kernel(%arg0: i32, %arg1: i32, %arg2: memref<256x147xbf16, #tpu.memory_space<vmem>>, %arg3: memref<147x64xbf16, #tpu.memory_space<vmem>>, %arg4: memref<256x64xf32, #tpu.memory_space<vmem>>, %arg5: memref<1x1x64xf32, #tpu.memory_space<vmem>>, %arg6: memref<1x1x64xf32, #tpu.memory_space<vmem>>) attributes {dimension_semantics = [#tpu.dimension_semantics<parallel>, #tpu.dimension_semantics<parallel>], iteration_bounds = array<i64: 1, 2>, scalar_prefetch = 0 : i64, scratch_operands = 0 : i64, tpu.core_type = #tpu.core_type<tc>, window_params = [{transform_indices = @transform_0, window_bounds = array<i64: 256, 147>}, {transform_indices = @transform_1, window_bounds = array<i64: 147, 64>}, {transform_indices = @transform_2, window_bounds = array<i64: 256, 64>}, {transform_indices = @transform_3, window_bounds = array<i64: 1, 1, 64>}, {transform_indices = @transform_4, window_bounds = array<i64: 1, 1, 64>}]} {
    %c0 = arith.constant 0 : index
    %c0_0 = arith.constant 0 : index
    %0 = vector.load %arg2[%c0, %c0_0] : memref<256x147xbf16, #tpu.memory_space<vmem>>, vector<256x147xbf16>
    %c0_1 = arith.constant 0 : index
    %c0_2 = arith.constant 0 : index
    %1 = vector.load %arg3[%c0_1, %c0_2] : memref<147x64xbf16, #tpu.memory_space<vmem>>, vector<147x64xbf16>
    %cst = arith.constant dense<0.000000e+00> : vector<256x64xf32>
    %2 = tpu.matmul %0, %1, %cst {dimension_numbers = #tpu.dot_dimension_numbers<[1], [0], [0], [1], [0, 0, 1, 1], [], []>} : vector<256x147xbf16>, vector<147x64xbf16>, vector<256x64xf32> -> vector<256x64xf32>
    %c0_3 = arith.constant 0 : index
    %c0_4 = arith.constant 0 : index
    %3 = vector.load %arg4[%c0_3, %c0_4] : memref<256x64xf32, #tpu.memory_space<vmem>>, vector<256x64xf32>
    tpu.vector_store %arg4[%c0_3, %c0_4], %2 {strides = array<i32>} : memref<256x64xf32, #tpu.memory_space<vmem>>, vector<256x64xf32>,
    %cst_5 = arith.constant dense<0.000000e+00> : vector<64xf32>
    %4 = vector.multi_reduction <add>, %2, %cst_5 [0] : vector<256x64xf32> to vector<64xf32>
    %5 = vector.shape_cast %4 : vector<64xf32> to vector<1x64xf32>
    %6 = vector.shape_cast %5 : vector<1x64xf32> to vector<1x1x64xf32>
    %c0_6 = arith.constant 0 : index
    %c0_7 = arith.constant 0 : index
    %c0_8 = arith.constant 0 : index
    %7 = vector.load %arg5[%c0_6, %c0_7, %c0_8] : memref<1x1x64xf32, #tpu.memory_space<vmem>>, vector<1x1x64xf32>
    tpu.vector_store %arg5[%c0_6, %c0_7, %c0_8], %6 {strides = array<i32>} : memref<1x1x64xf32, #tpu.memory_space<vmem>>, vector<1x1x64xf32>,
    %8 = arith.mulf %2, %2 : vector<256x64xf32>
    %cst_9 = arith.constant dense<0.000000e+00> : vector<64xf32>
    %9 = vector.multi_reduction <add>, %8, %cst_9 [0] : vector<256x64xf32> to vector<64xf32>
    %10 = vector.shape_cast %9 : vector<64xf32> to vector<1x64xf32>
    %11 = vector.shape_cast %10 : vector<1x64xf32> to vector<1x1x64xf32>
    %c0_10 = arith.constant 0 : index
    %c0_11 = arith.constant 0 : index
    %c0_12 = arith.constant 0 : index
    %12 = vector.load %arg6[%c0_10, %c0_11, %c0_12] : memref<1x1x64xf32, #tpu.memory_space<vmem>>, vector<1x1x64xf32>
    tpu.vector_store %arg6[%c0_10, %c0_11, %c0_12], %11 {strides = array<i32>} : memref<1x1x64xf32, #tpu.memory_space<vmem>>, vector<1x1x64xf32>,
    return
  }
  func.func @transform_0(%arg0: i32, %arg1: i32) -> (i32, i32) {
    %c0_i32 = arith.constant 0 : i32
    %c0_i32_0 = arith.constant 0 : i32
    return %arg1, %c0_i32 : i32, i32
  }
  func.func @transform_1(%arg0: i32, %arg1: i32) -> (i32, i32) {
    %c0_i32 = arith.constant 0 : i32
    %c0_i32_0 = arith.constant 0 : i32
    return %c0_i32, %arg0 : i32, i32
  }
  func.func @transform_2(%arg0: i32, %arg1: i32) -> (i32, i32) {
    %c0_i32 = arith.constant 0 : i32
    return %arg1, %arg0 : i32, i32
  }
  func.func @transform_3(%arg0: i32, %arg1: i32) -> (i32, i32, i32) {
    %c0_i32 = arith.constant 0 : i32
    %c0_i32_0 = arith.constant 0 : i32
    return %arg1, %c0_i32, %arg0 : i32, i32, i32
  }
  func.func @transform_4(%arg0: i32, %arg1: i32) -> (i32, i32, i32) {
    %c0_i32 = arith.constant 0 : i32
    %c0_i32_0 = arith.constant 0 : i32
    return %arg1, %c0_i32, %arg0 : i32, i32, i32
  }
}

module attributes {stable_mosaic.version = 11 : i64} {
  func.func @_mm_stats_kernel(%arg0: i32, %arg1: i32, %arg2: memref<128x576xbf16, #tpu.memory_space<vmem>>, %arg3: memref<576x64xbf16, #tpu.memory_space<vmem>>, %arg4: memref<128x64xf32, #tpu.memory_space<vmem>>, %arg5: memref<1x1x64xf32, #tpu.memory_space<vmem>>, %arg6: memref<1x1x64xf32, #tpu.memory_space<vmem>>) attributes {dimension_semantics = [#tpu.dimension_semantics<parallel>, #tpu.dimension_semantics<parallel>], iteration_bounds = array<i64: 1, 1>, scalar_prefetch = 0 : i64, scratch_operands = 0 : i64, tpu.core_type = #tpu.core_type<tc>, window_params = [{transform_indices = @transform_0, window_bounds = array<i64: 128, 576>}, {transform_indices = @transform_1, window_bounds = array<i64: 576, 64>}, {transform_indices = @transform_2, window_bounds = array<i64: 128, 64>}, {transform_indices = @transform_3, window_bounds = array<i64: 1, 1, 64>}, {transform_indices = @transform_4, window_bounds = array<i64: 1, 1, 64>}]} {
    %c0 = arith.constant 0 : index
    %c0_0 = arith.constant 0 : index
    %0 = vector.load %arg2[%c0, %c0_0] : memref<128x576xbf16, #tpu.memory_space<vmem>>, vector<128x576xbf16>
    %c0_1 = arith.constant 0 : index
    %c0_2 = arith.constant 0 : index
    %1 = vector.load %arg3[%c0_1, %c0_2] : memref<576x64xbf16, #tpu.memory_space<vmem>>, vector<576x64xbf16>
    %cst = arith.constant dense<0.000000e+00> : vector<128x64xf32>
    %2 = tpu.matmul %0, %1, %cst {dimension_numbers = #tpu.dot_dimension_numbers<[1], [0], [0], [1], [0, 0, 1, 1], [], []>} : vector<128x576xbf16>, vector<576x64xbf16>, vector<128x64xf32> -> vector<128x64xf32>
    %c0_3 = arith.constant 0 : index
    %c0_4 = arith.constant 0 : index
    %3 = vector.load %arg4[%c0_3, %c0_4] : memref<128x64xf32, #tpu.memory_space<vmem>>, vector<128x64xf32>
    tpu.vector_store %arg4[%c0_3, %c0_4], %2 {strides = array<i32>} : memref<128x64xf32, #tpu.memory_space<vmem>>, vector<128x64xf32>,
    %cst_5 = arith.constant dense<0.000000e+00> : vector<64xf32>
    %4 = vector.multi_reduction <add>, %2, %cst_5 [0] : vector<128x64xf32> to vector<64xf32>
    %5 = vector.shape_cast %4 : vector<64xf32> to vector<1x64xf32>
    %6 = vector.shape_cast %5 : vector<1x64xf32> to vector<1x1x64xf32>
    %c0_6 = arith.constant 0 : index
    %c0_7 = arith.constant 0 : index
    %c0_8 = arith.constant 0 : index
    %7 = vector.load %arg5[%c0_6, %c0_7, %c0_8] : memref<1x1x64xf32, #tpu.memory_space<vmem>>, vector<1x1x64xf32>
    tpu.vector_store %arg5[%c0_6, %c0_7, %c0_8], %6 {strides = array<i32>} : memref<1x1x64xf32, #tpu.memory_space<vmem>>, vector<1x1x64xf32>,
    %8 = arith.mulf %2, %2 : vector<128x64xf32>
    %cst_9 = arith.constant dense<0.000000e+00> : vector<64xf32>
    %9 = vector.multi_reduction <add>, %8, %cst_9 [0] : vector<128x64xf32> to vector<64xf32>
    %10 = vector.shape_cast %9 : vector<64xf32> to vector<1x64xf32>
    %11 = vector.shape_cast %10 : vector<1x64xf32> to vector<1x1x64xf32>
    %c0_10 = arith.constant 0 : index
    %c0_11 = arith.constant 0 : index
    %c0_12 = arith.constant 0 : index
    %12 = vector.load %arg6[%c0_10, %c0_11, %c0_12] : memref<1x1x64xf32, #tpu.memory_space<vmem>>, vector<1x1x64xf32>
    tpu.vector_store %arg6[%c0_10, %c0_11, %c0_12], %11 {strides = array<i32>} : memref<1x1x64xf32, #tpu.memory_space<vmem>>, vector<1x1x64xf32>,
    return
  }
  func.func @transform_0(%arg0: i32, %arg1: i32) -> (i32, i32) {
    %c0_i32 = arith.constant 0 : i32
    %c0_i32_0 = arith.constant 0 : i32
    return %arg1, %c0_i32 : i32, i32
  }
  func.func @transform_1(%arg0: i32, %arg1: i32) -> (i32, i32) {
    %c0_i32 = arith.constant 0 : i32
    %c0_i32_0 = arith.constant 0 : i32
    return %c0_i32, %arg0 : i32, i32
  }
  func.func @transform_2(%arg0: i32, %arg1: i32) -> (i32, i32) {
    %c0_i32 = arith.constant 0 : i32
    return %arg1, %arg0 : i32, i32
  }
  func.func @transform_3(%arg0: i32, %arg1: i32) -> (i32, i32, i32) {
    %c0_i32 = arith.constant 0 : i32
    %c0_i32_0 = arith.constant 0 : i32
    return %arg1, %c0_i32, %arg0 : i32, i32, i32
  }
  func.func @transform_4(%arg0: i32, %arg1: i32) -> (i32, i32, i32) {
    %c0_i32 = arith.constant 0 : i32
    %c0_i32_0 = arith.constant 0 : i32
    return %arg1, %c0_i32, %arg0 : i32, i32, i32
  }
}

module attributes {stable_mosaic.version = 11 : i64} {
  func.func @_mm_stats_kernel(%arg0: i32, %arg1: i32, %arg2: memref<32x576xbf16, #tpu.memory_space<vmem>>, %arg3: memref<576x128xbf16, #tpu.memory_space<vmem>>, %arg4: memref<32x128xf32, #tpu.memory_space<vmem>>, %arg5: memref<1x1x128xf32, #tpu.memory_space<vmem>>, %arg6: memref<1x1x128xf32, #tpu.memory_space<vmem>>) attributes {dimension_semantics = [#tpu.dimension_semantics<parallel>, #tpu.dimension_semantics<parallel>], iteration_bounds = array<i64: 1, 1>, scalar_prefetch = 0 : i64, scratch_operands = 0 : i64, tpu.core_type = #tpu.core_type<tc>, window_params = [{transform_indices = @transform_0, window_bounds = array<i64: 32, 576>}, {transform_indices = @transform_1, window_bounds = array<i64: 576, 128>}, {transform_indices = @transform_2, window_bounds = array<i64: 32, 128>}, {transform_indices = @transform_3, window_bounds = array<i64: 1, 1, 128>}, {transform_indices = @transform_4, window_bounds = array<i64: 1, 1, 128>}]} {
    %c0 = arith.constant 0 : index
    %c0_0 = arith.constant 0 : index
    %0 = vector.load %arg2[%c0, %c0_0] : memref<32x576xbf16, #tpu.memory_space<vmem>>, vector<32x576xbf16>
    %c0_1 = arith.constant 0 : index
    %c0_2 = arith.constant 0 : index
    %1 = vector.load %arg3[%c0_1, %c0_2] : memref<576x128xbf16, #tpu.memory_space<vmem>>, vector<576x128xbf16>
    %cst = arith.constant dense<0.000000e+00> : vector<32x128xf32>
    %2 = tpu.matmul %0, %1, %cst {dimension_numbers = #tpu.dot_dimension_numbers<[1], [0], [0], [1], [0, 0, 1, 1], [], []>} : vector<32x576xbf16>, vector<576x128xbf16>, vector<32x128xf32> -> vector<32x128xf32>
    %c0_3 = arith.constant 0 : index
    %c0_4 = arith.constant 0 : index
    %3 = vector.load %arg4[%c0_3, %c0_4] : memref<32x128xf32, #tpu.memory_space<vmem>>, vector<32x128xf32>
    tpu.vector_store %arg4[%c0_3, %c0_4], %2 {strides = array<i32>} : memref<32x128xf32, #tpu.memory_space<vmem>>, vector<32x128xf32>,
    %cst_5 = arith.constant dense<0.000000e+00> : vector<128xf32>
    %4 = vector.multi_reduction <add>, %2, %cst_5 [0] : vector<32x128xf32> to vector<128xf32>
    %5 = vector.shape_cast %4 : vector<128xf32> to vector<1x128xf32>
    %6 = vector.shape_cast %5 : vector<1x128xf32> to vector<1x1x128xf32>
    %c0_6 = arith.constant 0 : index
    %c0_7 = arith.constant 0 : index
    %c0_8 = arith.constant 0 : index
    %7 = vector.load %arg5[%c0_6, %c0_7, %c0_8] : memref<1x1x128xf32, #tpu.memory_space<vmem>>, vector<1x1x128xf32>
    tpu.vector_store %arg5[%c0_6, %c0_7, %c0_8], %6 {strides = array<i32>} : memref<1x1x128xf32, #tpu.memory_space<vmem>>, vector<1x1x128xf32>,
    %8 = arith.mulf %2, %2 : vector<32x128xf32>
    %cst_9 = arith.constant dense<0.000000e+00> : vector<128xf32>
    %9 = vector.multi_reduction <add>, %8, %cst_9 [0] : vector<32x128xf32> to vector<128xf32>
    %10 = vector.shape_cast %9 : vector<128xf32> to vector<1x128xf32>
    %11 = vector.shape_cast %10 : vector<1x128xf32> to vector<1x1x128xf32>
    %c0_10 = arith.constant 0 : index
    %c0_11 = arith.constant 0 : index
    %c0_12 = arith.constant 0 : index
    %12 = vector.load %arg6[%c0_10, %c0_11, %c0_12] : memref<1x1x128xf32, #tpu.memory_space<vmem>>, vector<1x1x128xf32>
    tpu.vector_store %arg6[%c0_10, %c0_11, %c0_12], %11 {strides = array<i32>} : memref<1x1x128xf32, #tpu.memory_space<vmem>>, vector<1x1x128xf32>,
    return
  }
  func.func @transform_0(%arg0: i32, %arg1: i32) -> (i32, i32) {
    %c0_i32 = arith.constant 0 : i32
    %c0_i32_0 = arith.constant 0 : i32
    return %arg1, %c0_i32 : i32, i32
  }
  func.func @transform_1(%arg0: i32, %arg1: i32) -> (i32, i32) {
    %c0_i32 = arith.constant 0 : i32
    %c0_i32_0 = arith.constant 0 : i32
    return %c0_i32, %arg0 : i32, i32
  }
  func.func @transform_2(%arg0: i32, %arg1: i32) -> (i32, i32) {
    %c0_i32 = arith.constant 0 : i32
    return %arg1, %arg0 : i32, i32
  }
  func.func @transform_3(%arg0: i32, %arg1: i32) -> (i32, i32, i32) {
    %c0_i32 = arith.constant 0 : i32
    %c0_i32_0 = arith.constant 0 : i32
    return %arg1, %c0_i32, %arg0 : i32, i32, i32
  }
  func.func @transform_4(%arg0: i32, %arg1: i32) -> (i32, i32, i32) {
    %c0_i32 = arith.constant 0 : i32
    %c0_i32_0 = arith.constant 0 : i32
    return %arg1, %c0_i32, %arg0 : i32, i32, i32
  }
}

module attributes {stable_mosaic.version = 11 : i64} {
  func.func @_mm_stats_kernel(%arg0: i32, %arg1: i32, %arg2: memref<32x64xbf16, #tpu.memory_space<vmem>>, %arg3: memref<64x128xbf16, #tpu.memory_space<vmem>>, %arg4: memref<32x128xf32, #tpu.memory_space<vmem>>, %arg5: memref<1x1x128xf32, #tpu.memory_space<vmem>>, %arg6: memref<1x1x128xf32, #tpu.memory_space<vmem>>) attributes {dimension_semantics = [#tpu.dimension_semantics<parallel>, #tpu.dimension_semantics<parallel>], iteration_bounds = array<i64: 1, 1>, scalar_prefetch = 0 : i64, scratch_operands = 0 : i64, tpu.core_type = #tpu.core_type<tc>, window_params = [{transform_indices = @transform_0, window_bounds = array<i64: 32, 64>}, {transform_indices = @transform_1, window_bounds = array<i64: 64, 128>}, {transform_indices = @transform_2, window_bounds = array<i64: 32, 128>}, {transform_indices = @transform_3, window_bounds = array<i64: 1, 1, 128>}, {transform_indices = @transform_4, window_bounds = array<i64: 1, 1, 128>}]} {
    %c0 = arith.constant 0 : index
    %c0_0 = arith.constant 0 : index
    %0 = vector.load %arg2[%c0, %c0_0] : memref<32x64xbf16, #tpu.memory_space<vmem>>, vector<32x64xbf16>
    %c0_1 = arith.constant 0 : index
    %c0_2 = arith.constant 0 : index
    %1 = vector.load %arg3[%c0_1, %c0_2] : memref<64x128xbf16, #tpu.memory_space<vmem>>, vector<64x128xbf16>
    %cst = arith.constant dense<0.000000e+00> : vector<32x128xf32>
    %2 = tpu.matmul %0, %1, %cst {dimension_numbers = #tpu.dot_dimension_numbers<[1], [0], [0], [1], [0, 0, 1, 1], [], []>} : vector<32x64xbf16>, vector<64x128xbf16>, vector<32x128xf32> -> vector<32x128xf32>
    %c0_3 = arith.constant 0 : index
    %c0_4 = arith.constant 0 : index
    %3 = vector.load %arg4[%c0_3, %c0_4] : memref<32x128xf32, #tpu.memory_space<vmem>>, vector<32x128xf32>
    tpu.vector_store %arg4[%c0_3, %c0_4], %2 {strides = array<i32>} : memref<32x128xf32, #tpu.memory_space<vmem>>, vector<32x128xf32>,
    %cst_5 = arith.constant dense<0.000000e+00> : vector<128xf32>
    %4 = vector.multi_reduction <add>, %2, %cst_5 [0] : vector<32x128xf32> to vector<128xf32>
    %5 = vector.shape_cast %4 : vector<128xf32> to vector<1x128xf32>
    %6 = vector.shape_cast %5 : vector<1x128xf32> to vector<1x1x128xf32>
    %c0_6 = arith.constant 0 : index
    %c0_7 = arith.constant 0 : index
    %c0_8 = arith.constant 0 : index
    %7 = vector.load %arg5[%c0_6, %c0_7, %c0_8] : memref<1x1x128xf32, #tpu.memory_space<vmem>>, vector<1x1x128xf32>
    tpu.vector_store %arg5[%c0_6, %c0_7, %c0_8], %6 {strides = array<i32>} : memref<1x1x128xf32, #tpu.memory_space<vmem>>, vector<1x1x128xf32>,
    %8 = arith.mulf %2, %2 : vector<32x128xf32>
    %cst_9 = arith.constant dense<0.000000e+00> : vector<128xf32>
    %9 = vector.multi_reduction <add>, %8, %cst_9 [0] : vector<32x128xf32> to vector<128xf32>
    %10 = vector.shape_cast %9 : vector<128xf32> to vector<1x128xf32>
    %11 = vector.shape_cast %10 : vector<1x128xf32> to vector<1x1x128xf32>
    %c0_10 = arith.constant 0 : index
    %c0_11 = arith.constant 0 : index
    %c0_12 = arith.constant 0 : index
    %12 = vector.load %arg6[%c0_10, %c0_11, %c0_12] : memref<1x1x128xf32, #tpu.memory_space<vmem>>, vector<1x1x128xf32>
    tpu.vector_store %arg6[%c0_10, %c0_11, %c0_12], %11 {strides = array<i32>} : memref<1x1x128xf32, #tpu.memory_space<vmem>>, vector<1x1x128xf32>,
    return
  }
  func.func @transform_0(%arg0: i32, %arg1: i32) -> (i32, i32) {
    %c0_i32 = arith.constant 0 : i32
    %c0_i32_0 = arith.constant 0 : i32
    return %arg1, %c0_i32 : i32, i32
  }
  func.func @transform_1(%arg0: i32, %arg1: i32) -> (i32, i32) {
    %c0_i32 = arith.constant 0 : i32
    %c0_i32_0 = arith.constant 0 : i32
    return %c0_i32, %arg0 : i32, i32
  }
  func.func @transform_2(%arg0: i32, %arg1: i32) -> (i32, i32) {
    %c0_i32 = arith.constant 0 : i32
    return %arg1, %arg0 : i32, i32
  }
  func.func @transform_3(%arg0: i32, %arg1: i32) -> (i32, i32, i32) {
    %c0_i32 = arith.constant 0 : i32
    %c0_i32_0 = arith.constant 0 : i32
    return %arg1, %c0_i32, %arg0 : i32, i32, i32
  }
  func.func @transform_4(%arg0: i32, %arg1: i32) -> (i32, i32, i32) {
    %c0_i32 = arith.constant 0 : i32
    %c0_i32_0 = arith.constant 0 : i32
    return %arg1, %c0_i32, %arg0 : i32, i32, i32
  }
}

module attributes {stable_mosaic.version = 11 : i64} {
  func.func @_mm_stats_kernel(%arg0: i32, %arg1: i32, %arg2: memref<32x1152xbf16, #tpu.memory_space<vmem>>, %arg3: memref<1152x128xbf16, #tpu.memory_space<vmem>>, %arg4: memref<32x128xf32, #tpu.memory_space<vmem>>, %arg5: memref<1x1x128xf32, #tpu.memory_space<vmem>>, %arg6: memref<1x1x128xf32, #tpu.memory_space<vmem>>) attributes {dimension_semantics = [#tpu.dimension_semantics<parallel>, #tpu.dimension_semantics<parallel>], iteration_bounds = array<i64: 1, 1>, scalar_prefetch = 0 : i64, scratch_operands = 0 : i64, tpu.core_type = #tpu.core_type<tc>, window_params = [{transform_indices = @transform_0, window_bounds = array<i64: 32, 1152>}, {transform_indices = @transform_1, window_bounds = array<i64: 1152, 128>}, {transform_indices = @transform_2, window_bounds = array<i64: 32, 128>}, {transform_indices = @transform_3, window_bounds = array<i64: 1, 1, 128>}, {transform_indices = @transform_4, window_bounds = array<i64: 1, 1, 128>}]} {
    %c0 = arith.constant 0 : index
    %c0_0 = arith.constant 0 : index
    %0 = vector.load %arg2[%c0, %c0_0] : memref<32x1152xbf16, #tpu.memory_space<vmem>>, vector<32x1152xbf16>
    %c0_1 = arith.constant 0 : index
    %c0_2 = arith.constant 0 : index
    %1 = vector.load %arg3[%c0_1, %c0_2] : memref<1152x128xbf16, #tpu.memory_space<vmem>>, vector<1152x128xbf16>
    %cst = arith.constant dense<0.000000e+00> : vector<32x128xf32>
    %2 = tpu.matmul %0, %1, %cst {dimension_numbers = #tpu.dot_dimension_numbers<[1], [0], [0], [1], [0, 0, 1, 1], [], []>} : vector<32x1152xbf16>, vector<1152x128xbf16>, vector<32x128xf32> -> vector<32x128xf32>
    %c0_3 = arith.constant 0 : index
    %c0_4 = arith.constant 0 : index
    %3 = vector.load %arg4[%c0_3, %c0_4] : memref<32x128xf32, #tpu.memory_space<vmem>>, vector<32x128xf32>
    tpu.vector_store %arg4[%c0_3, %c0_4], %2 {strides = array<i32>} : memref<32x128xf32, #tpu.memory_space<vmem>>, vector<32x128xf32>,
    %cst_5 = arith.constant dense<0.000000e+00> : vector<128xf32>
    %4 = vector.multi_reduction <add>, %2, %cst_5 [0] : vector<32x128xf32> to vector<128xf32>
    %5 = vector.shape_cast %4 : vector<128xf32> to vector<1x128xf32>
    %6 = vector.shape_cast %5 : vector<1x128xf32> to vector<1x1x128xf32>
    %c0_6 = arith.constant 0 : index
    %c0_7 = arith.constant 0 : index
    %c0_8 = arith.constant 0 : index
    %7 = vector.load %arg5[%c0_6, %c0_7, %c0_8] : memref<1x1x128xf32, #tpu.memory_space<vmem>>, vector<1x1x128xf32>
    tpu.vector_store %arg5[%c0_6, %c0_7, %c0_8], %6 {strides = array<i32>} : memref<1x1x128xf32, #tpu.memory_space<vmem>>, vector<1x1x128xf32>,
    %8 = arith.mulf %2, %2 : vector<32x128xf32>
    %cst_9 = arith.constant dense<0.000000e+00> : vector<128xf32>
    %9 = vector.multi_reduction <add>, %8, %cst_9 [0] : vector<32x128xf32> to vector<128xf32>
    %10 = vector.shape_cast %9 : vector<128xf32> to vector<1x128xf32>
    %11 = vector.shape_cast %10 : vector<1x128xf32> to vector<1x1x128xf32>
    %c0_10 = arith.constant 0 : index
    %c0_11 = arith.constant 0 : index
    %c0_12 = arith.constant 0 : index
    %12 = vector.load %arg6[%c0_10, %c0_11, %c0_12] : memref<1x1x128xf32, #tpu.memory_space<vmem>>, vector<1x1x128xf32>
    tpu.vector_store %arg6[%c0_10, %c0_11, %c0_12], %11 {strides = array<i32>} : memref<1x1x128xf32, #tpu.memory_space<vmem>>, vector<1x1x128xf32>,
    return
  }
  func.func @transform_0(%arg0: i32, %arg1: i32) -> (i32, i32) {
    %c0_i32 = arith.constant 0 : i32
    %c0_i32_0 = arith.constant 0 : i32
    return %arg1, %c0_i32 : i32, i32
  }
  func.func @transform_1(%arg0: i32, %arg1: i32) -> (i32, i32) {
    %c0_i32 = arith.constant 0 : i32
    %c0_i32_0 = arith.constant 0 : i32
    return %c0_i32, %arg0 : i32, i32
  }
  func.func @transform_2(%arg0: i32, %arg1: i32) -> (i32, i32) {
    %c0_i32 = arith.constant 0 : i32
    return %arg1, %arg0 : i32, i32
  }
  func.func @transform_3(%arg0: i32, %arg1: i32) -> (i32, i32, i32) {
    %c0_i32 = arith.constant 0 : i32
    %c0_i32_0 = arith.constant 0 : i32
    return %arg1, %c0_i32, %arg0 : i32, i32, i32
  }
  func.func @transform_4(%arg0: i32, %arg1: i32) -> (i32, i32, i32) {
    %c0_i32 = arith.constant 0 : i32
    %c0_i32_0 = arith.constant 0 : i32
    return %arg1, %c0_i32, %arg0 : i32, i32, i32
  }
}

</mosaic_0001>

<llo_original>
// kernel: resnet18_forward.10
$region0: #{resnet18_forward.10}
  #allocation0 [shape = 'u32[]', space=smem, size = 0x4, offset = 0x4, fixed_abs, tag = 'smem constant byte address 0x4 - core index']
  #allocation1 [shape = 'u32[144,128]{1,0:T(1,128)}', space=vmem, size = 0x12000, scoped, tag = 'internal scratch']
  %s0 = inlined_call_operand.vmem [shape: bf16[512,147], index: 0, kind: input, shape index: {}]
  %s1 = inlined_call_operand.vmem [shape: bf16[147,64], index: 1, kind: input, shape index: {}]
  %s2 = inlined_call_operand.vmem [shape: f32[512,64], index: 2, kind: output, shape index: {0}]
  %s3 = inlined_call_operand.vmem [shape: f32[2,1,64], index: 3, kind: output, shape index: {1}]
  %s4 = inlined_call_operand.vmem [shape: f32[2,1,64], index: 4, kind: output, shape index: {2}]
  %5 = xla_tuple %s2, %s3, %s4
  %s6 = sld [smem:[#allocation0]]
  $region57: #{resnet18_forward.10} parent=0
    _
  %s8 = ssub.s32 1, %s6
  %s9 = scalar_select 0, %s8, %s6
  loop: start=0, step=1, limit=4
  $region2: #{resnet18_forward.10} parent=0 // loop_pre_header
    _
  $region3: #{resnet18_forward.10} parent=0 // loop_header
    %s11 = sphi 0, %s15
    %p12 = scmp.ge.s32.totalorder %s11, 4
    %s18 = sphi 0, %s30
    %s19 = sphi 0, %s26
    %s20 = sphi 0, %s18
    %s21 = sphi 0, %s19
    %s22 = sphi 0, %s20
    %s23 = sphi 0, %s21
    %s33 = sphi 0, %s35
    %s36 = sphi 0, %s33
    %s37 = sphi 0, %s36
    %s53 = sphi 0, %s37
    %s59 = sphi 0, %s61
    %s62 = sphi 0, %s59
    %s63 = sphi 0, %s62
    %s79 = sphi 0, %s63
    %s87 = sphi 0, %s89
    %s90 = sphi 0, %s87
    %s91 = sphi 0, %s90
    %s107 = sphi 0, %s91
    %s115 = sphi 0, %s117
    %s118 = sphi 0, %s115
    %s119 = sphi 0, %s118
    %s135 = sphi 0, %s119
    %s143 = sphi 0, %s145
    %s146 = sphi 0, %s143
    %s147 = sphi 0, %s146
    %s163 = sphi 0, %s147
  $region4: #{resnet18_forward.10} parent=0 // loop_header_branch
    %14 = sbr.rel (%p12) target = $region8
  $region5: #{resnet18_forward.10} parent=0 // loop_body
    %s16 = ssub.s32 %s11, 1
    %s17 = ssub.s32 %s11, 2
    %s24 = sadd.s32 1, %s19
    %p25 = scmp.ge.s32.totalorder %s24, 2
    %s26 = scalar_select %p25, 0, %s24
    %s27 = sadd.s32 1, %s18
    %s28 = scalar_select %p25, %s27, %s18
    %p29 = scmp.ge.s32.totalorder %s28, 1
    %s30 = scalar_select %p29, 0, %s28
    %s31 = ssub.s32 %s19, %s26
    %p32 = scmp.eq.s32.totalorder %s31, 0
    %s34 = sadd.s32 %s33, 1
    %s35 = scalar_select %p32, %s33, %s34
    %p38 = pneg %p32
    %p39 = scmp.eq.s32.totalorder %s11, 1
    %p40 = por %p38, %p39
    %p41 = scmp.ne.s32.totalorder %s33, %s36
    %p42 = scmp.eq.s32.totalorder %s11, 0
    %p43 = por %p41, %p42
    %p44 = scmp.ne.s32.totalorder %s33, %s36
    %p45 = scmp.eq.s32.totalorder %s16, 1
    %p46 = por %p44, %p45
    %p47 = scmp.ne.s32.totalorder %s36, %s37
    %p48 = scmp.eq.s32.totalorder %s16, 0
    %p49 = por %p47, %p48
    %p50 = scmp.ne.s32.totalorder %s36, %s37
    %p51 = scmp.eq.s32.totalorder %s17, 1
    %p52 = por %p50, %p51
    %p54 = scmp.ne.s32.totalorder %s37, %s53
    %p55 = scmp.eq.s32.totalorder %s17, 0
    %p56 = por %p54, %p55
    %s57 = ssub.s32 %s18, %s30
    %p58 = scmp.eq.s32.totalorder %s57, 0
    %s60 = sadd.s32 %s59, 1
    %s61 = scalar_select %p58, %s59, %s60
    %p64 = pneg %p58
    %p65 = scmp.eq.s32.totalorder %s11, 1
    %p66 = por %p64, %p65
    %p67 = scmp.ne.s32.totalorder %s59, %s62
    %p68 = scmp.eq.s32.totalorder %s11, 0
    %p69 = por %p67, %p68
    %p70 = scmp.ne.s32.totalorder %s59, %s62
    %p71 = scmp.eq.s32.totalorder %s16, 1
    %p72 = por %p70, %p71
    %p73 = scmp.ne.s32.totalorder %s62, %s63
    %p74 = scmp.eq.s32.totalorder %s16, 0
    %p75 = por %p73, %p74
    %p76 = scmp.ne.s32.totalorder %s62, %s63
    %p77 = scmp.eq.s32.totalorder %s17, 1
    %p78 = por %p76, %p77
    %p80 = scmp.ne.s32.totalorder %s63, %s79
    %p81 = scmp.eq.s32.totalorder %s17, 0
    %p82 = por %p80, %p81
    %s83 = ssub.s32 %s19, %s26
    %s84 = ssub.s32 %s18, %s30
    %s85 = sor.u32 %s83, %s84
    %p86 = scmp.eq.s32.totalorder %s85, 0
    %s88 = sadd.s32 %s87, 1
    %s89 = scalar_select %p86, %s87, %s88
    %p92 = pneg %p86
    %p93 = scmp.eq.s32.totalorder %s11, 1
    %p94 = por %p92, %p93
    %p95 = scmp.ne.s32.totalorder %s87, %s90
    %p96 = scmp.eq.s32.totalorder %s11, 0
    %p97 = por %p95, %p96
    %p98 = scmp.ne.s32.totalorder %s87, %s90
    %p99 = scmp.eq.s32.totalorder %s16, 1
    %p100 = por %p98, %p99
    %p101 = scmp.ne.s32.totalorder %s90, %s91
    %p102 = scmp.eq.s32.totalorder %s16, 0
    %p103 = por %p101, %p102
    %p104 = scmp.ne.s32.totalorder %s90, %s91
    %p105 = scmp.eq.s32.totalorder %s17, 1
    %p106 = por %p104, %p105
    %p108 = scmp.ne.s32.totalorder %s91, %s107
    %p109 = scmp.eq.s32.totalorder %s17, 0
    %p110 = por %p108, %p109
    %s111 = ssub.s32 %s19, %s26
    %s112 = ssub.s32 %s18, %s30
    %s113 = sor.u32 %s111, %s112
    %p114 = scmp.eq.s32.totalorder %s113, 0
    %s116 = sadd.s32 %s115, 1
    %s117 = scalar_select %p114, %s115, %s116
    %p120 = pneg %p114
    %p121 = scmp.eq.s32.totalorder %s11, 1
    %p122 = por %p120, %p121
    %p123 = scmp.ne.s32.totalorder %s115, %s118
    %p124 = scmp.eq.s32.totalorder %s11, 0
    %p125 = por %p123, %p124
    %p126 = scmp.ne.s32.totalorder %s115, %s118
    %p127 = scmp.eq.s32.totalorder %s16, 1
    %p128 = por %p126, %p127
    %p129 = scmp.ne.s32.totalorder %s118, %s119
    %p130 = scmp.eq.s32.totalorder %s16, 0
    %p131 = por %p129, %p130
    %p132 = scmp.ne.s32.totalorder %s118, %s119
    %p133 = scmp.eq.s32.totalorder %s17, 1
    %p134 = por %p132, %p133
    %p136 = scmp.ne.s32.totalorder %s119, %s135
    %p137 = scmp.eq.s32.totalorder %s17, 0
    %p138 = por %p136, %p137
    %s139 = ssub.s32 %s19, %s26
    %s140 = ssub.s32 %s18, %s30
    %s141 = sor.u32 %s139, %s140
    %p142 = scmp.eq.s32.totalorder %s141, 0
    %s144 = sadd.s32 %s143, 1
    %s145 = scalar_select %p142, %s143, %s144
    %p148 = pneg %p142
    %p149 = scmp.eq.s32.totalorder %s11, 1
    %p150 = por %p148, %p149
    %p151 = scmp.ne.s32.totalorder %s143, %s146
    %p152 = scmp.eq.s32.totalorder %s11, 0
    %p153 = por %p151, %p152
    %p154 = scmp.ne.s32.totalorder %s143, %s146
    %p155 = scmp.eq.s32.totalorder %s16, 1
    %p156 = por %p154, %p155
    %p157 = scmp.ne.s32.totalorder %s146, %s147
    %p158 = scmp.eq.s32.totalorder %s16, 0
    %p159 = por %p157, %p158
    %p160 = scmp.ne.s32.totalorder %s146, %s147
    %p161 = scmp.eq.s32.totalorder %s17, 1
    %p162 = por %p160, %p161
    %p164 = scmp.ne.s32.totalorder %s147, %s163
    %p165 = scmp.eq.s32.totalorder %s17, 0
    %p166 = por %p164, %p165
    %p167 = scmp.le.s32.totalorder 1, %s11
    %p168 = scmp.lt.s32.totalorder %s11, 3
    %p169 = pnand %p167, %p168
    %p170 = pneg %p169
    // Predicated region
    $region9: #{resnet18_forward.10} parent=5 // pred_check
      _
    $region10: #{resnet18_forward.10} parent=5 // pred_check_branch
      %172 = sbr.rel (%p169) target = $region12
    $region11: #{resnet18_forward.10} parent=5 // pred_region
      %s173 = ssub.s32 %s11, 1
      // Predicated region
      $region13: #{resnet18_forward.10} parent=11 // pred_check
        %p174 = pneg %p75
      $region14: #{resnet18_forward.10} parent=11 // pred_check_branch
        %176 = sbr.rel (%p174) target = $region16
      $region15: #{resnet18_forward.10} parent=11 // pred_region
        %p177 = scmp.lt.s32.totalorder %s20, 0
        %s178 = scalar_select %p177, %s20, 0
        %s179 = smul.addr %s178, 4
        %s180 = scalar_lea.vmem %s1, %s179
      $region16: #{resnet18_forward.10} parent=11 // pred_fallthru
        _
    $region12: #{resnet18_forward.10} parent=5 // pred_fallthru
      _
    %p181 = scmp.lt.s32.totalorder %s11, 2
    // Predicated region
    $region17: #{resnet18_forward.10} parent=5 // pred_check
      %p182 = pneg %p181
    $region18: #{resnet18_forward.10} parent=5 // pred_check_branch
      %184 = sbr.rel (%p182) target = $region20
    $region19: #{resnet18_forward.10} parent=5 // pred_region
      // Predicated region
      $region21: #{resnet18_forward.10} parent=19 // pred_check
        %p185 = pneg %p43
      $region22: #{resnet18_forward.10} parent=19 // pred_check_branch
        %187 = sbr.rel (%p185) target = $region24
      $region23: #{resnet18_forward.10} parent=19 // pred_region
        %s188 = smul.u32 32, %s19
        %p189 = scmp.lt.s32.totalorder %s188, 63
        %s190 = scalar_select %p189, %s188, 63
        %s191 = smul.addr %s190, 2
        %s192 = smul.addr %s191, 4
        %s193 = scalar_lea.vmem %s0, %s192
        %s194 = smul.u32 32, %s19
      $region24: #{resnet18_forward.10} parent=19 // pred_fallthru
        _
    $region20: #{resnet18_forward.10} parent=5 // pred_fallthru
      _
    %p195 = scmp.le.s32.totalorder 1, %s11
    %p196 = scmp.lt.s32.totalorder %s11, 3
    %p197 = pnand %p195, %p196
    %p198 = pneg %p197
    // Predicated region
    $region25: #{resnet18_forward.10} parent=5 // pred_check
      _
    $region26: #{resnet18_forward.10} parent=5 // pred_check_branch
      %200 = sbr.rel (%p197) target = $region28
    $region27: #{resnet18_forward.10} parent=5 // pred_region
      %s201 = ssub.s32 %s11, 1
      %s202 = smul.u32 32, %s21
      %p203 = scmp.lt.s32.totalorder %s202, 63
      %s204 = scalar_select %p203, %s202, 63
      %s205 = smul.addr %s204, 2
      %s206 = smul.addr %s205, 4
      %s207 = scalar_lea.vmem %s0, %s206
      %p208 = pneg %p49
      %p209 = pneg %p46
      %p210 = scmp.lt.s32.totalorder %s20, 0
      %s211 = scalar_select %p210, %s20, 0
      %s212 = smul.addr %s211, 4
      %s213 = scalar_lea.vmem %s1, %s212
      %p214 = pneg %p75
      %p215 = pneg %p72
      %p216 = pneg %p103
      %p217 = pneg %p100
      %s218 = smul.u32 32, %s21
      %p219 = scmp.lt.s32.totalorder %s218, 63
      %s220 = scalar_select %p219, %s218, 63
      %p221 = scmp.lt.s32.totalorder %s20, 0
      %s222 = scalar_select %p221, %s20, 0
      %s223 = sadd.s32 %s222, %s220
      %s224 = smul.addr %s223, 8
      %s225 = scalar_lea.vmem %s2, %s224
      %p226 = pneg %p131
      %p227 = pneg %p128
      %p228 = scmp.lt.s32.totalorder %s21, 1
      %s229 = scalar_select %p228, %s21, 1
      %p230 = scmp.lt.s32.totalorder %s20, 0
      %s231 = scalar_select %p230, %s20, 0
      %s232 = sadd.s32 %s231, %s229
      %s233 = scalar_lea.vmem %s3, %s232
      %p234 = pneg %p159
      %p235 = pneg %p156
      %p236 = scmp.lt.s32.totalorder %s21, 1
      %s237 = scalar_select %p236, %s21, 1
      %p238 = scmp.lt.s32.totalorder %s20, 0
      %s239 = scalar_select %p238, %s20, 0
      %s240 = sadd.s32 %s239, %s237
      %s241 = scalar_lea.vmem %s4, %s240
      %s242 = smul.u32 32, %s21
      %p243 = scmp.lt.s32.totalorder %s242, 63
      %s244 = scalar_select %p243, %s242, 63
      %s245 = smul.addr %s244, 2
      %s246 = smul.addr %s245, 4
      %s247 = scalar_lea.vmem %s0, %s246
      %s248 = smul.u32 32, %s21
      %p249 = scmp.lt.s32.totalorder %s20, 0
      %s250 = scalar_select %p249, %s20, 0
      %s251 = smul.addr %s250, 4
      %s252 = scalar_lea.vmem %s1, %s251
      %s253 = smul.u32 32, %s21
      %p254 = scmp.lt.s32.totalorder %s253, 63
      %s255 = scalar_select %p254, %s253, 63
      %p256 = scmp.lt.s32.totalorder %s20, 0
      %s257 = scalar_select %p256, %s20, 0
      %s258 = sadd.s32 %s257, %s255
      %s259 = smul.addr %s258, 8
      %s260 = scalar_lea.vmem %s2, %s259
      %s261 = smul.u32 32, %s21
      %p262 = scmp.lt.s32.totalorder %s21, 1
      %s263 = scalar_select %p262, %s21, 1
      %p264 = scmp.lt.s32.totalorder %s20, 0
      %s265 = scalar_select %p264, %s20, 0
      %s266 = sadd.s32 %s265, %s263
      %s267 = scalar_lea.vmem %s3, %s266
      %p268 = scmp.lt.s32.totalorder %s21, 1
      %s269 = scalar_select %p268, %s21, 1
      %p270 = scmp.lt.s32.totalorder %s20, 0
      %s271 = scalar_select %p270, %s20, 0
      %s272 = sadd.s32 %s271, %s269
      %s273 = scalar_lea.vmem %s4, %s272
      %v275 = vld [vmem:[%s247] sm:$0xff]
      %v276 = vld [vmem:[%s247 + $0x8] sm:$0xff]
      %v277 = vld [vmem:[%s247 + $0x10] sm:$0xff]
      %v278 = vld [vmem:[%s247 + $0x18] sm:$0xff]
      %v279 = vld [vmem:[%s247 + $0x20] sm:$0xff]
      %v280 = vld [vmem:[%s247 + $0x28] sm:$0xff]
      %v281 = vld [vmem:[%s247 + $0x30] sm:$0xff]
      %v282 = vld [vmem:[%s247 + $0x38] sm:$0xff]
      %v283 = vld [vmem:[%s247 + $0x40] sm:$0xff]
      %v284 = vld [vmem:[%s247 + $0x48] sm:$0xff]
      %v285 = vld [vmem:[%s247 + $0x50] sm:$0xff]
      %v286 = vld [vmem:[%s247 + $0x58] sm:$0xff]
      %v287 = vld [vmem:[%s247 + $0x60] sm:$0xff]
      %v288 = vld [vmem:[%s247 + $0x68] sm:$0xff]
      %v289 = vld [vmem:[%s247 + $0x70] sm:$0xff]
      %v290 = vld [vmem:[%s247 + $0x78] sm:$0xff]
      %v291 = vld [vmem:[%s247 + $0x80] sm:$0xff]
      %v292 = vld [vmem:[%s247 + $0x88] sm:$0xff]
      %v293 = vld [vmem:[%s247 + $0x90] sm:$0xff]
      %v294 = vld [vmem:[%s247 + $0x98] sm:$0xff]
      %v295 = vld [vmem:[%s247 + $0xa0] sm:$0xff]
      %v296 = vld [vmem:[%s247 + $0xa8] sm:$0xff]
      %v297 = vld [vmem:[%s247 + $0xb0] sm:$0xff]
      %v298 = vld [vmem:[%s247 + $0xb8] sm:$0xff]
      %v299 = vld [vmem:[%s247 + $0xc0] sm:$0xff]
      %v300 = vld [vmem:[%s247 + $0xc8] sm:$0xff]
      %v301 = vld [vmem:[%s247 + $0xd0] sm:$0xff]
      %v302 = vld [vmem:[%s247 + $0xd8] sm:$0xff]
      %v303 = vld [vmem:[%s247 + $0xe0] sm:$0xff]
      %v304 = vld [vmem:[%s247 + $0xe8] sm:$0xff]
      %v305 = vld [vmem:[%s247 + $0xf0] sm:$0xff]
      %v306 = vld [vmem:[%s247 + $0xf8] sm:$0xff]
      %v307 = vld [vmem:[%s252] sm:$0xf]
      %v308 = vld [vmem:[%s252 + $0x4] sm:$0xf]
      %v309 = vld [vmem:[%s252 + $0x8] sm:$0xf]
      %v310 = vld [vmem:[%s252 + $0xc] sm:$0xf]
      %v311 = vld [vmem:[%s252 + $0x10] sm:$0xf]
      %v312 = vld [vmem:[%s252 + $0x14] sm:$0xf]
      %v313 = vld [vmem:[%s252 + $0x18] sm:$0xf]
      %v314 = vld [vmem:[%s252 + $0x1c] sm:$0xf]
      %v315 = vld [vmem:[%s252 + $0x20] sm:$0xf]
      %v316 = vld [vmem:[%s252 + $0x24] sm:$0xf]
      %v317 = vld [vmem:[%s252 + $0x28] sm:$0xf]
      %v318 = vld [vmem:[%s252 + $0x2c] sm:$0xf]
      %v319 = vld [vmem:[%s252 + $0x30] sm:$0xf]
      %v320 = vld [vmem:[%s252 + $0x34] sm:$0xf]
      %v321 = vld [vmem:[%s252 + $0x38] sm:$0xf]
      %v322 = vld [vmem:[%s252 + $0x3c] sm:$0xf]
      %v323 = vld [vmem:[%s252 + $0x40] sm:$0xf]
      %v324 = vld [vmem:[%s252 + $0x44] sm:$0xf]
      %v325 = vld [vmem:[%s252 + $0x48] sm:$0x3]
      %v358 = vunpack.c.l.b16 %v275
      %v359 = vunpack.c.h.b16 %v275
      %v360 = vunpack.c.l.b16 %v276
      %v361 = vunpack.c.h.b16 %v276
      %v362 = vunpack.c.l.b16 %v277
      %v363 = vunpack.c.h.b16 %v277
      %v364 = vunpack.c.l.b16 %v278
      %v365 = vunpack.c.h.b16 %v278
      %v366 = vunpack.c.l.b16 %v279
      %v367 = vunpack.c.h.b16 %v279
      %v368 = vunpack.c.l.b16 %v280
      %v369 = vunpack.c.h.b16 %v280
      %v370 = vunpack.c.l.b16 %v281
      %v371 = vunpack.c.h.b16 %v281
      %v372 = vunpack.c.l.b16 %v282
      %v373 = vunpack.c.h.b16 %v282
      %v374 = vunpack.c.l.b16 %v283
      %v375 = vunpack.c.h.b16 %v283
      %v376 = vunpack.c.l.b16 %v284
      %v377 = vunpack.c.h.b16 %v284
      %v378 = vunpack.c.l.b16 %v285
      %v379 = vunpack.c.h.b16 %v285
      %v380 = vunpack.c.l.b16 %v286
      %v381 = vunpack.c.h.b16 %v286
      %v382 = vunpack.c.l.b16 %v287
      %v383 = vunpack.c.h.b16 %v287
      %v384 = vunpack.c.l.b16 %v288
      %v385 = vunpack.c.h.b16 %v288
      %v386 = vunpack.c.l.b16 %v289
      %v387 = vunpack.c.h.b16 %v289
      %v388 = vunpack.c.l.b16 %v290
      %v389 = vunpack.c.h.b16 %v290
      %v390 = vunpack.c.l.b16 %v291
      %v391 = vunpack.c.h.b16 %v291
      %v392 = vunpack.c.l.b16 %v292
      %v393 = vunpack.c.h.b16 %v292
      %v394 = vunpack.c.l.b16 %v293
      %v395 = vunpack.c.h.b16 %v293
      %v396 = vunpack.c.l.b16 %v294
      %v397 = vunpack.c.h.b16 %v294
      %v398 = vunpack.c.l.b16 %v295
      %v399 = vunpack.c.h.b16 %v295
      %v400 = vunpack.c.l.b16 %v296
      %v401 = vunpack.c.h.b16 %v296
      %v402 = vunpack.c.l.b16 %v297
      %v403 = vunpack.c.h.b16 %v297
      %v404 = vunpack.c.l.b16 %v298
      %v405 = vunpack.c.h.b16 %v298
      %v406 = vunpack.c.l.b16 %v299
      %v407 = vunpack.c.h.b16 %v299
      %v408 = vunpack.c.l.b16 %v300
      %v409 = vunpack.c.h.b16 %v300
      %v410 = vunpack.c.l.b16 %v301
      %v411 = vunpack.c.h.b16 %v301
      %v412 = vunpack.c.l.b16 %v302
      %v413 = vunpack.c.h.b16 %v302
      %v414 = vunpack.c.l.b16 %v303
      %v415 = vunpack.c.h.b16 %v303
      %v416 = vunpack.c.l.b16 %v304
      %v417 = vunpack.c.h.b16 %v304
      %v418 = vunpack.c.l.b16 %v305
      %v419 = vunpack.c.h.b16 %v305
      %v420 = vunpack.c.l.b16 %v306
      %v421 = vunpack.c.h.b16 %v306
      %v422 = vpack.c.b16 %v360, %v358
      %v423 = vpack.c.b16 %v361, %v359
      %v424 = vpack.c.b16 %v364, %v362
      %v425 = vpack.c.b16 %v365, %v363
      %v426 = vpack.c.b16 %v368, %v366
      %v427 = vpack.c.b16 %v369, %v367
      %v428 = vpack.c.b16 %v372, %v370
      %v429 = vpack.c.b16 %v373, %v371
      %v430 = vpack.c.b16 %v376, %v374
      %v431 = vpack.c.b16 %v377, %v375
      %v432 = vpack.c.b16 %v380, %v378
      %v433 = vpack.c.b16 %v381, %v379
      %v434 = vpack.c.b16 %v384, %v382
      %v435 = vpack.c.b16 %v385, %v383
      %v436 = vpack.c.b16 %v388, %v386
      %v437 = vpack.c.b16 %v389, %v387
      %v438 = vpack.c.b16 %v392, %v390
      %v439 = vpack.c.b16 %v393, %v391
      %v440 = vpack.c.b16 %v396, %v394
      %v441 = vpack.c.b16 %v397, %v395
      %v442 = vpack.c.b16 %v400, %v398
      %v443 = vpack.c.b16 %v401, %v399
      %v444 = vpack.c.b16 %v404, %v402
      %v445 = vpack.c.b16 %v405, %v403
      %v446 = vpack.c.b16 %v408, %v406
      %v447 = vpack.c.b16 %v409, %v407
      %v448 = vpack.c.b16 %v412, %v410
      %v449 = vpack.c.b16 %v413, %v411
      %v450 = vpack.c.b16 %v416, %v414
      %v451 = vpack.c.b16 %v417, %v415
      %v452 = vpack.c.b16 %v420, %v418
      %v453 = vpack.c.b16 %v421, %v419
      %v489 = vunpack.c.l.b16 %v307
      %v490 = vunpack.c.l.b16 %v308
      %v491 = vunpack.c.l.b16 %v309
      %v492 = vunpack.c.l.b16 %v310
      %v493 = vunpack.c.l.b16 %v311
      %v494 = vunpack.c.l.b16 %v312
      %v495 = vunpack.c.l.b16 %v313
      %v496 = vunpack.c.l.b16 %v314
      %v497 = vunpack.c.l.b16 %v315
      %v498 = vunpack.c.l.b16 %v316
      %v499 = vunpack.c.l.b16 %v317
      %v500 = vunpack.c.l.b16 %v318
      %v501 = vunpack.c.l.b16 %v319
      %v502 = vunpack.c.l.b16 %v320
      %v503 = vunpack.c.l.b16 %v321
      %v504 = vunpack.c.l.b16 %v322
      %v505 = vunpack.c.l.b16 %v323
      %v506 = vunpack.c.l.b16 %v324
      %v507 = vunpack.c.l.b16 %v325
      %v508 = vpack.c.b16 %v490, %v489
      %v509 = vpack.c.b16 %v492, %v491
      %v510 = vpack.c.b16 %v494, %v493
      %v511 = vpack.c.b16 %v496, %v495
      %v512 = vpack.c.b16 %v498, %v497
      %v513 = vpack.c.b16 %v500, %v499
      %v514 = vpack.c.b16 %v502, %v501
      %v515 = vpack.c.b16 %v504, %v503
      %v516 = vpack.c.b16 %v506, %v505
      %v517 = vpack.c.b16 %v507, %v507
      %vm527 = vcmask 154624
      %v529 = vsel %vm527, %v423, 0
      %v532 = vsel %vm527, %v425, 0
      %v535 = vsel %vm527, %v427, 0
      %v538 = vsel %vm527, %v429, 0
      %v541 = vsel %vm527, %v431, 0
      %v544 = vsel %vm527, %v433, 0
      %v547 = vsel %vm527, %v435, 0
      %v550 = vsel %vm527, %v437, 0
      %v553 = vsel %vm527, %v439, 0
      %v556 = vsel %vm527, %v441, 0
      %v559 = vsel %vm527, %v443, 0
      %v562 = vsel %vm527, %v445, 0
      %v565 = vsel %vm527, %v447, 0
      %v568 = vsel %vm527, %v449, 0
      %v571 = vsel %vm527, %v451, 0
      %v574 = vsel %vm527, %v453, 0
      %vm576 = vcmask 1040384
      %vm577 = vcmask 1041408
      %v578 = vsel %vm576, 4294967295, 65535
      %v579 = vsel %vm577, %v578, 0
      %v581 = vand.u32 %v517, %v579
      %583 = vmatprep.subr.bf16.mxu0 0
      %584 = vmatpush1.bf16.msra.mxu0 %v515
      %585 = vmatprep.subr.bf16.mxu0 0
      %586 = vmatpush1.bf16.msra.mxu0 %v514
      %587 = vmatprep.subr.bf16.mxu0 0
      %588 = vmatpush1.bf16.msra.mxu0 %v513
      %589 = vmatprep.subr.bf16.mxu0 0
      %590 = vmatpush1.bf16.msra.mxu0 %v512
      %591 = vmatprep.subr.bf16.mxu0 0
      %592 = vmatpush1.bf16.msra.mxu0 %v511
      %593 = vmatprep.subr.bf16.mxu0 0
      %594 = vmatpush1.bf16.msra.mxu0 %v510
      %595 = vmatprep.subr.bf16.mxu0 0
      %596 = vmatpush1.bf16.msra.mxu0 %v509
      %597 = vmatprep.subr.bf16.mxu0 0
      %598 = vmatpush1.bf16.msra.mxu0 %v508
      %599 = vmatprep.subr.bf16.mxu0 0
      %600 = vmatpush2.bf16.msra.mxu0 0
      %601 = vmatprep.subr.bf16.mxu0 0
      %602 = vmatpush2.bf16.msra.mxu0 0
      %603 = vmatprep.subr.bf16.mxu0 0
      %604 = vmatpush2.bf16.msra.mxu0 0
      %605 = vmatprep.subr.bf16.mxu0 0
      %606 = vmatpush2.bf16.msra.mxu0 0
      %607 = vmatprep.subr.bf16.mxu0 0
      %608 = vmatpush2.bf16.msra.mxu0 0
      %609 = vmatprep.subr.bf16.mxu0 0
      %610 = vmatpush2.bf16.msra.mxu0 0
      %611 = vmatprep.subr.bf16.mxu0 0
      %612 = vmatpush2.bf16.msra.mxu0 %v581
      %613 = vmatprep.subr.bf16.mxu0 0
      %614 = vmatpush2.bf16.msra.mxu0 %v516
      %615 = vmatprep.mubr.bf16.mxu0 %v529
      %616 = vmatmul.mubr.bf16.gmra.mxu0 %v422
      %v617 = vpop.f32.mrf.mxu0
      %v618 = vadd.f32 0.0, %v617
      %v619 = vpop.f32.mrf.mxu0
      %v620 = vpop.f32.mrf.mxu0
      %v621 = vadd.f32 0.0, %v620
      %v622 = vpop.f32.mrf.mxu0
      %623 = vmatprep.mubr.bf16.mxu0 %v532
      %624 = vmatmul.mubr.bf16.gmra.mxu0 %v424
      %v625 = vpop.f32.mrf.mxu0
      %v626 = vadd.f32 0.0, %v625
      %v627 = vpop.f32.mrf.mxu0
      %v628 = vpop.f32.mrf.mxu0
      %v629 = vadd.f32 0.0, %v628
      %v630 = vpop.f32.mrf.mxu0
      %631 = vmatprep.mubr.bf16.mxu0 %v535
      %632 = vmatmul.mubr.bf16.gmra.mxu0 %v426
      %v633 = vpop.f32.mrf.mxu0
      %v634 = vadd.f32 0.0, %v633
      %v635 = vpop.f32.mrf.mxu0
      %v636 = vpop.f32.mrf.mxu0
      %v637 = vadd.f32 0.0, %v636
      %v638 = vpop.f32.mrf.mxu0
      %639 = vmatprep.mubr.bf16.mxu0 %v538
      %640 = vmatmul.mubr.bf16.gmra.mxu0 %v428
      %v641 = vpop.f32.mrf.mxu0
      %v642 = vadd.f32 0.0, %v641
      %v643 = vpop.f32.mrf.mxu0
      %v644 = vpop.f32.mrf.mxu0
      %v645 = vadd.f32 0.0, %v644
      %v646 = vpop.f32.mrf.mxu0
      %647 = vmatprep.mubr.bf16.mxu0 %v541
      %648 = vmatmul.mubr.bf16.gmra.mxu0 %v430
      %v649 = vpop.f32.mrf.mxu0
      %v650 = vadd.f32 0.0, %v649
      %v651 = vpop.f32.mrf.mxu0
      %v652 = vpop.f32.mrf.mxu0
      %v653 = vadd.f32 0.0, %v652
      %v654 = vpop.f32.mrf.mxu0
      %655 = vmatprep.mubr.bf16.mxu0 %v544
      %656 = vmatmul.mubr.bf16.gmra.mxu0 %v432
      %v657 = vpop.f32.mrf.mxu0
      %v658 = vadd.f32 0.0, %v657
      %v659 = vpop.f32.mrf.mxu0
      %v660 = vpop.f32.mrf.mxu0
      %v661 = vadd.f32 0.0, %v660
      %v662 = vpop.f32.mrf.mxu0
      %663 = vmatprep.mubr.bf16.mxu0 %v547
      %664 = vmatmul.mubr.bf16.gmra.mxu0 %v434
      %v665 = vpop.f32.mrf.mxu0
      %v666 = vadd.f32 0.0, %v665
      %v667 = vpop.f32.mrf.mxu0
      %v668 = vpop.f32.mrf.mxu0
      %v669 = vadd.f32 0.0, %v668
      %v670 = vpop.f32.mrf.mxu0
      %671 = vmatprep.mubr.bf16.mxu0 %v550
      %672 = vmatmul.mubr.bf16.gmra.mxu0 %v436
      %v673 = vpop.f32.mrf.mxu0
      %v674 = vadd.f32 0.0, %v673
      %v675 = vpop.f32.mrf.mxu0
      %v676 = vpop.f32.mrf.mxu0
      %v677 = vadd.f32 0.0, %v676
      %v678 = vpop.f32.mrf.mxu0
      %679 = vmatprep.mubr.bf16.mxu0 %v553
      %680 = vmatmul.mubr.bf16.gmra.mxu0 %v438
      %v681 = vpop.f32.mrf.mxu0
      %v682 = vadd.f32 0.0, %v681
      %v683 = vpop.f32.mrf.mxu0
      %v684 = vpop.f32.mrf.mxu0
      %v685 = vadd.f32 0.0, %v684
      %v686 = vpop.f32.mrf.mxu0
      %687 = vmatprep.mubr.bf16.mxu0 %v556
      %688 = vmatmul.mubr.bf16.gmra.mxu0 %v440
      %v689 = vpop.f32.mrf.mxu0
      %v690 = vadd.f32 0.0, %v689
      %v691 = vpop.f32.mrf.mxu0
      %v692 = vpop.f32.mrf.mxu0
      %v693 = vadd.f32 0.0, %v692
      %v694 = vpop.f32.mrf.mxu0
      %695 = vmatprep.mubr.bf16.mxu0 %v559
      %696 = vmatmul.mubr.bf16.gmra.mxu0 %v442
      %v697 = vpop.f32.mrf.mxu0
      %v698 = vadd.f32 0.0, %v697
      %v699 = vpop.f32.mrf.mxu0
      %v700 = vpop.f32.mrf.mxu0
      %v701 = vadd.f32 0.0, %v700
      %v702 = vpop.f32.mrf.mxu0
      %703 = vmatprep.mubr.bf16.mxu0 %v562
      %704 = vmatmul.mubr.bf16.gmra.mxu0 %v444
      %v705 = vpop.f32.mrf.mxu0
      %v706 = vadd.f32 0.0, %v705
      %v707 = vpop.f32.mrf.mxu0
      %v708 = vpop.f32.mrf.mxu0
      %v709 = vadd.f32 0.0, %v708
      %v710 = vpop.f32.mrf.mxu0
      %711 = vmatprep.mubr.bf16.mxu0 %v565
      %712 = vmatmul.mubr.bf16.gmra.mxu0 %v446
      %v713 = vpop.f32.mrf.mxu0
      %v714 = vadd.f32 0.0, %v713
      %v715 = vpop.f32.mrf.mxu0
      %v716 = vpop.f32.mrf.mxu0
      %v717 = vadd.f32 0.0, %v716
      %v718 = vpop.f32.mrf.mxu0
      %719 = vmatprep.mubr.bf16.mxu0 %v568
      %720 = vmatmul.mubr.bf16.gmra.mxu0 %v448
      %v721 = vpop.f32.mrf.mxu0
      %v722 = vadd.f32 0.0, %v721
      %v723 = vpop.f32.mrf.mxu0
      %v724 = vpop.f32.mrf.mxu0
      %v725 = vadd.f32 0.0, %v724
      %v726 = vpop.f32.mrf.mxu0
      %727 = vmatprep.mubr.bf16.mxu0 %v571
      %728 = vmatmul.mubr.bf16.gmra.mxu0 %v450
      %v729 = vpop.f32.mrf.mxu0
      %v730 = vadd.f32 0.0, %v729
      %v731 = vpop.f32.mrf.mxu0
      %v732 = vpop.f32.mrf.mxu0
      %v733 = vadd.f32 0.0, %v732
      %v734 = vpop.f32.mrf.mxu0
      %735 = vmatprep.mubr.bf16.mxu0 %v574
      %736 = vmatmul.mubr.bf16.gmra.mxu0 %v452
      %v737 = vpop.f32.mrf.mxu0
      %v738 = vadd.f32 0.0, %v737
      %v739 = vpop.f32.mrf.mxu0
      %v740 = vpop.f32.mrf.mxu0
      %v741 = vadd.f32 0.0, %v740
      %v742 = vpop.f32.mrf.mxu0
      %743 = vdwg.mxu0
      %vm744 = vcmask 523264
      %745 = vst.msk [vmem:[%s260] sm:$0xff] %vm744, %v618
      %746 = vst.msk [vmem:[%s260 + $0x8] sm:$0xff] %vm744, %v621
      %747 = vst.msk [vmem:[%s260 + $0x10] sm:$0xff] %vm744, %v626
      %748 = vst.msk [vmem:[%s260 + $0x18] sm:$0xff] %vm744, %v629
      %749 = vst.msk [vmem:[%s260 + $0x20] sm:$0xff] %vm744, %v634
      %750 = vst.msk [vmem:[%s260 + $0x28] sm:$0xff] %vm744, %v637
      %751 = vst.msk [vmem:[%s260 + $0x30] sm:$0xff] %vm744, %v642
      %752 = vst.msk [vmem:[%s260 + $0x38] sm:$0xff] %vm744, %v645
      %753 = vst.msk [vmem:[%s260 + $0x40] sm:$0xff] %vm744, %v650
      %754 = vst.msk [vmem:[%s260 + $0x48] sm:$0xff] %vm744, %v653
      %755 = vst.msk [vmem:[%s260 + $0x50] sm:$0xff] %vm744, %v658
      %756 = vst.msk [vmem:[%s260 + $0x58] sm:$0xff] %vm744, %v661
      %757 = vst.msk [vmem:[%s260 + $0x60] sm:$0xff] %vm744, %v666
      %758 = vst.msk [vmem:[%s260 + $0x68] sm:$0xff] %vm744, %v669
      %759 = vst.msk [vmem:[%s260 + $0x70] sm:$0xff] %vm744, %v674
      %760 = vst.msk [vmem:[%s260 + $0x78] sm:$0xff] %vm744, %v677
      %761 = vst.msk [vmem:[%s260 + $0x80] sm:$0xff] %vm744, %v682
      %762 = vst.msk [vmem:[%s260 + $0x88] sm:$0xff] %vm744, %v685
      %763 = vst.msk [vmem:[%s260 + $0x90] sm:$0xff] %vm744, %v690
      %764 = vst.msk [vmem:[%s260 + $0x98] sm:$0xff] %vm744, %v693
      %765 = vst.msk [vmem:[%s260 + $0xa0] sm:$0xff] %vm744, %v698
      %766 = vst.msk [vmem:[%s260 + $0xa8] sm:$0xff] %vm744, %v701
      %767 = vst.msk [vmem:[%s260 + $0xb0] sm:$0xff] %vm744, %v706
      %768 = vst.msk [vmem:[%s260 + $0xb8] sm:$0xff] %vm744, %v709
      %769 = vst.msk [vmem:[%s260 + $0xc0] sm:$0xff] %vm744, %v714
      %770 = vst.msk [vmem:[%s260 + $0xc8] sm:$0xff] %vm744, %v717
      %771 = vst.msk [vmem:[%s260 + $0xd0] sm:$0xff] %vm744, %v722
      %772 = vst.msk [vmem:[%s260 + $0xd8] sm:$0xff] %vm744, %v725
      %773 = vst.msk [vmem:[%s260 + $0xe0] sm:$0xff] %vm744, %v730
      %774 = vst.msk [vmem:[%s260 + $0xe8] sm:$0xff] %vm744, %v733
      %775 = vst.msk [vmem:[%s260 + $0xf0] sm:$0xff] %vm744, %v738
      %776 = vst.msk [vmem:[%s260 + $0xf8] sm:$0xff] %vm744, %v741
      %v777 = vsel %vm744, %v618, 0.0
      %v778 = vsel %vm744, %v621, 0.0
      %v779 = vadd.f32 %v777, %v778
      %v780 = vsel %vm744, %v626, 0.0
      %v781 = vadd.f32 %v779, %v780
      %v782 = vsel %vm744, %v629, 0.0
      %v783 = vadd.f32 %v781, %v782
      %v784 = vsel %vm744, %v634, 0.0
      %v785 = vadd.f32 %v783, %v784
      %v786 = vsel %vm744, %v637, 0.0
      %v787 = vadd.f32 %v785, %v786
      %v788 = vsel %vm744, %v642, 0.0
      %v789 = vadd.f32 %v787, %v788
      %v790 = vsel %vm744, %v645, 0.0
      %v791 = vadd.f32 %v789, %v790
      %v792 = vsel %vm744, %v650, 0.0
      %v793 = vadd.f32 %v791, %v792
      %v794 = vsel %vm744, %v653, 0.0
      %v795 = vadd.f32 %v793, %v794
      %v796 = vsel %vm744, %v658, 0.0
      %v797 = vadd.f32 %v795, %v796
      %v798 = vsel %vm744, %v661, 0.0
      %v799 = vadd.f32 %v797, %v798
      %v800 = vsel %vm744, %v666, 0.0
      %v801 = vadd.f32 %v799, %v800
      %v802 = vsel %vm744, %v669, 0.0
      %v803 = vadd.f32 %v801, %v802
      %v804 = vsel %vm744, %v674, 0.0
      %v805 = vadd.f32 %v803, %v804
      %v806 = vsel %vm744, %v677, 0.0
      %v807 = vadd.f32 %v805, %v806
      %v808 = vsel %vm744, %v682, 0.0
      %v809 = vadd.f32 %v807, %v808
      %v810 = vsel %vm744, %v685, 0.0
      %v811 = vadd.f32 %v809, %v810
      %v812 = vsel %vm744, %v690, 0.0
      %v813 = vadd.f32 %v811, %v812
      %v814 = vsel %vm744, %v693, 0.0
      %v815 = vadd.f32 %v813, %v814
      %v816 = vsel %vm744, %v698, 0.0
      %v817 = vadd.f32 %v815, %v816
      %v818 = vsel %vm744, %v701, 0.0
      %v819 = vadd.f32 %v817, %v818
      %v820 = vsel %vm744, %v706, 0.0
      %v821 = vadd.f32 %v819, %v820
      %v822 = vsel %vm744, %v709, 0.0
      %v823 = vadd.f32 %v821, %v822
      %v824 = vsel %vm744, %v714, 0.0
      %v825 = vadd.f32 %v823, %v824
      %v826 = vsel %vm744, %v717, 0.0
      %v827 = vadd.f32 %v825, %v826
      %v828 = vsel %vm744, %v722, 0.0
      %v829 = vadd.f32 %v827, %v828
      %v830 = vsel %vm744, %v725, 0.0
      %v831 = vadd.f32 %v829, %v830
      %v832 = vsel %vm744, %v730, 0.0
      %v833 = vadd.f32 %v831, %v832
      %v834 = vsel %vm744, %v733, 0.0
      %v835 = vadd.f32 %v833, %v834
      %v836 = vsel %vm744, %v738, 0.0
      %v837 = vadd.f32 %v835, %v836
      %v838 = vsel %vm744, %v741, 0.0
      %v839 = vadd.f32 %v837, %v838
      %v840 = vrot.slane %v839, 4
      %v841 = vadd.f32 %v839, %v840
      %v842 = vrot.slane %v841, 2
      %v843 = vadd.f32 %v841, %v842
      %v844 = vrot.slane %v843, 1
      %v845 = vadd.f32 %v843, %v844
      %vm846 = vcmask 516096
      %847 = vst.msk [vmem:[%s267] sm:$0x1] %vm846, %v845
      %v848 = vmul.f32 %v618, %v618
      %v849 = vmul.f32 %v621, %v621
      %v850 = vmul.f32 %v626, %v626
      %v851 = vmul.f32 %v629, %v629
      %v852 = vmul.f32 %v634, %v634
      %v853 = vmul.f32 %v637, %v637
      %v854 = vmul.f32 %v642, %v642
      %v855 = vmul.f32 %v645, %v645
      %v856 = vmul.f32 %v650, %v650
      %v857 = vmul.f32 %v653, %v653
      %v858 = vmul.f32 %v658, %v658
      %v859 = vmul.f32 %v661, %v661
      %v860 = vmul.f32 %v666, %v666
      %v861 = vmul.f32 %v669, %v669
      %v862 = vmul.f32 %v674, %v674
      %v863 = vmul.f32 %v677, %v677
      %v864 = vmul.f32 %v682, %v682
      %v865 = vmul.f32 %v685, %v685
      %v866 = vmul.f32 %v690, %v690
      %v867 = vmul.f32 %v693, %v693
      %v868 = vmul.f32 %v698, %v698
      %v869 = vmul.f32 %v701, %v701
      %v870 = vmul.f32 %v706, %v706
      %v871 = vmul.f32 %v709, %v709
      %v872 = vmul.f32 %v714, %v714
      %v873 = vmul.f32 %v717, %v717
      %v874 = vmul.f32 %v722, %v722
      %v875 = vmul.f32 %v725, %v725
      %v876 = vmul.f32 %v730, %v730
      %v877 = vmul.f32 %v733, %v733
      %v878 = vmul.f32 %v738, %v738
      %v879 = vmul.f32 %v741, %v741
      %v880 = vsel %vm744, %v848, 0.0
      %v881 = vsel %vm744, %v849, 0.0
      %v882 = vadd.f32 %v880, %v881
      %v883 = vsel %vm744, %v850, 0.0
      %v884 = vadd.f32 %v882, %v883
      %v885 = vsel %vm744, %v851, 0.0
      %v886 = vadd.f32 %v884, %v885
      %v887 = vsel %vm744, %v852, 0.0
      %v888 = vadd.f32 %v886, %v887
      %v889 = vsel %vm744, %v853, 0.0
      %v890 = vadd.f32 %v888, %v889
      %v891 = vsel %vm744, %v854, 0.0
      %v892 = vadd.f32 %v890, %v891
      %v893 = vsel %vm744, %v855, 0.0
      %v894 = vadd.f32 %v892, %v893
      %v895 = vsel %vm744, %v856, 0.0
      %v896 = vadd.f32 %v894, %v895
      %v897 = vsel %vm744, %v857, 0.0
      %v898 = vadd.f32 %v896, %v897
      %v899 = vsel %vm744, %v858, 0.0
      %v900 = vadd.f32 %v898, %v899
      %v901 = vsel %vm744, %v859, 0.0
      %v902 = vadd.f32 %v900, %v901
      %v903 = vsel %vm744, %v860, 0.0
      %v904 = vadd.f32 %v902, %v903
      %v905 = vsel %vm744, %v861, 0.0
      %v906 = vadd.f32 %v904, %v905
      %v907 = vsel %vm744, %v862, 0.0
      %v908 = vadd.f32 %v906, %v907
      %v909 = vsel %vm744, %v863, 0.0
      %v910 = vadd.f32 %v908, %v909
      %v911 = vsel %vm744, %v864, 0.0
      %v912 = vadd.f32 %v910, %v911
      %v913 = vsel %vm744, %v865, 0.0
      %v914 = vadd.f32 %v912, %v913
      %v915 = vsel %vm744, %v866, 0.0
      %v916 = vadd.f32 %v914, %v915
      %v917 = vsel %vm744, %v867, 0.0
      %v918 = vadd.f32 %v916, %v917
      %v919 = vsel %vm744, %v868, 0.0
      %v920 = vadd.f32 %v918, %v919
      %v921 = vsel %vm744, %v869, 0.0
      %v922 = vadd.f32 %v920, %v921
      %v923 = vsel %vm744, %v870, 0.0
      %v924 = vadd.f32 %v922, %v923
      %v925 = vsel %vm744, %v871, 0.0
      %v926 = vadd.f32 %v924, %v925
      %v927 = vsel %vm744, %v872, 0.0
      %v928 = vadd.f32 %v926, %v927
      %v929 = vsel %vm744, %v873, 0.0
      %v930 = vadd.f32 %v928, %v929
      %v931 = vsel %vm744, %v874, 0.0
      %v932 = vadd.f32 %v930, %v931
      %v933 = vsel %vm744, %v875, 0.0
      %v934 = vadd.f32 %v932, %v933
      %v935 = vsel %vm744, %v876, 0.0
      %v936 = vadd.f32 %v934, %v935
      %v937 = vsel %vm744, %v877, 0.0
      %v938 = vadd.f32 %v936, %v937
      %v939 = vsel %vm744, %v878, 0.0
      %v940 = vadd.f32 %v938, %v939
      %v941 = vsel %vm744, %v879, 0.0
      %v942 = vadd.f32 %v940, %v941
      %v943 = vrot.slane %v942, 4
      %v944 = vadd.f32 %v942, %v943
      %v945 = vrot.slane %v944, 2
      %v946 = vadd.f32 %v944, %v945
      %v947 = vrot.slane %v946, 1
      %v948 = vadd.f32 %v946, %v947
      %949 = vst.msk [vmem:[%s273] sm:$0x1] %vm846, %v948
      %s950 = smul.u32 32, %s21
      %p951 = scmp.lt.s32.totalorder %s950, 63
      %s952 = scalar_select %p951, %s950, 63
      %p953 = scmp.lt.s32.totalorder %s20, 0
      %s954 = scalar_select %p953, %s20, 0
      %s955 = sadd.s32 %s954, %s952
      %s956 = smul.addr %s955, 8
      %s957 = scalar_lea.vmem %s2, %s956
      %p958 = scmp.lt.s32.totalorder %s21, 1
      %s959 = scalar_select %p958, %s21, 1
      %p960 = scmp.lt.s32.totalorder %s20, 0
      %s961 = scalar_select %p960, %s20, 0
      %s962 = sadd.s32 %s961, %s959
      %s963 = scalar_lea.vmem %s3, %s962
      %p964 = scmp.lt.s32.totalorder %s21, 1
      %s965 = scalar_select %p964, %s21, 1
      %p966 = scmp.lt.s32.totalorder %s20, 0
      %s967 = scalar_select %p966, %s20, 0
      %s968 = sadd.s32 %s967, %s965
      %s969 = scalar_lea.vmem %s4, %s968
      // Predicated region
      $region29: #{resnet18_forward.10} parent=27 // pred_check
        %p970 = pneg %p100
      $region30: #{resnet18_forward.10} parent=27 // pred_check_branch
        %972 = sbr.rel (%p970) target = $region32
      $region31: #{resnet18_forward.10} parent=27 // pred_region
        %s973 = smul.u32 32, %s21
      $region32: #{resnet18_forward.10} parent=27 // pred_fallthru
        _
      // Predicated region
      $region33: #{resnet18_forward.10} parent=27 // pred_check
        %p974 = pneg %p128
      $region34: #{resnet18_forward.10} parent=27 // pred_check_branch
        %976 = sbr.rel (%p974) target = $region36
      $region35: #{resnet18_forward.10} parent=27 // pred_region
        _
      $region36: #{resnet18_forward.10} parent=27 // pred_fallthru
        _
      // Predicated region
      $region37: #{resnet18_forward.10} parent=27 // pred_check
        %p977 = pneg %p156
      $region38: #{resnet18_forward.10} parent=27 // pred_check_branch
        %979 = sbr.rel (%p977) target = $region40
      $region39: #{resnet18_forward.10} parent=27 // pred_region
        _
      $region40: #{resnet18_forward.10} parent=27 // pred_fallthru
        _
    $region28: #{resnet18_forward.10} parent=5 // pred_fallthru
      _
    %p980 = scmp.le.s32.totalorder 2, %s11
    // Predicated region
    $region41: #{resnet18_forward.10} parent=5 // pred_check
      %p981 = pneg %p980
    $region42: #{resnet18_forward.10} parent=5 // pred_check_branch
      %983 = sbr.rel (%p981) target = $region44
    $region43: #{resnet18_forward.10} parent=5 // pred_region
      %s984 = ssub.s32 %s11, 2
      // Predicated region
      $region45: #{resnet18_forward.10} parent=43 // pred_check
        %p985 = pneg %p106
      $region46: #{resnet18_forward.10} parent=43 // pred_check_branch
        %987 = sbr.rel (%p985) target = $region48
      $region47: #{resnet18_forward.10} parent=43 // pred_region
        %s988 = smul.u32 32, %s23
        %p989 = scmp.lt.s32.totalorder %s988, 63
        %s990 = scalar_select %p989, %s988, 63
        %p991 = scmp.lt.s32.totalorder %s22, 0
        %s992 = scalar_select %p991, %s22, 0
        %s993 = sadd.s32 %s992, %s990
        %s994 = smul.addr %s993, 8
        %s995 = scalar_lea.vmem %s2, %s994
      $region48: #{resnet18_forward.10} parent=43 // pred_fallthru
        _
      // Predicated region
      $region49: #{resnet18_forward.10} parent=43 // pred_check
        %p996 = pneg %p134
      $region50: #{resnet18_forward.10} parent=43 // pred_check_branch
        %998 = sbr.rel (%p996) target = $region52
      $region51: #{resnet18_forward.10} parent=43 // pred_region
        %p999 = scmp.lt.s32.totalorder %s23, 1
        %s1000 = scalar_select %p999, %s23, 1
        %p1001 = scmp.lt.s32.totalorder %s22, 0
        %s1002 = scalar_select %p1001, %s22, 0
        %s1003 = sadd.s32 %s1002, %s1000
        %s1004 = scalar_lea.vmem %s3, %s1003
      $region52: #{resnet18_forward.10} parent=43 // pred_fallthru
        _
      // Predicated region
      $region53: #{resnet18_forward.10} parent=43 // pred_check
        %p1005 = pneg %p162
      $region54: #{resnet18_forward.10} parent=43 // pred_check_branch
        %1007 = sbr.rel (%p1005) target = $region56
      $region55: #{resnet18_forward.10} parent=43 // pred_region
        %p1008 = scmp.lt.s32.totalorder %s23, 1
        %s1009 = scalar_select %p1008, %s23, 1
        %p1010 = scmp.lt.s32.totalorder %s22, 0
        %s1011 = scalar_select %p1010, %s22, 0
        %s1012 = sadd.s32 %s1011, %s1009
        %s1013 = scalar_lea.vmem %s4, %s1012
      $region56: #{resnet18_forward.10} parent=43 // pred_fallthru
        _
    $region44: #{resnet18_forward.10} parent=5 // pred_fallthru
      _
  $region6: #{resnet18_forward.10} parent=0 // loop_footer
    %s15 = sadd.s32 1, %s11
  $region7: #{resnet18_forward.10} parent=0 // loop_footer_branch
    %10 = sbr.rel target = $region3
  $region8: #{resnet18_forward.10} parent=0 // loop_exit
    _

// kernel: resnet18_forward.11
$region0: #{resnet18_forward.11}
  #allocation0 [shape = 'u32[]', space=smem, size = 0x4, offset = 0x4, fixed_abs, tag = 'smem constant byte address 0x4 - core index']
  #allocation1 [shape = 'u32[144,128]{1,0:T(1,128)}', space=vmem, size = 0x12000, scoped, tag = 'internal scratch']
  %s0 = inlined_call_operand.vmem [shape: bf16[128,576], index: 0, kind: input, shape index: {}]
  %s1 = inlined_call_operand.vmem [shape: bf16[576,64], index: 1, kind: input, shape index: {}]
  %s2 = inlined_call_operand.vmem [shape: f32[128,64], index: 2, kind: output, shape index: {0}]
  %s3 = inlined_call_operand.vmem [shape: f32[1,1,64], index: 3, kind: output, shape index: {1}]
  %s4 = inlined_call_operand.vmem [shape: f32[1,1,64], index: 4, kind: output, shape index: {2}]
  %5 = xla_tuple %s2, %s3, %s4
  %s6 = sld [smem:[#allocation0]]
  $region34: #{resnet18_forward.11} parent=0
    _
  %s8 = ssub.s32 1, %s6
  %s9 = scalar_select 0, %s8, %s6
  // Predicated region
  $region2: #{resnet18_forward.11} parent=0 // pred_check
    _
  $region3: #{resnet18_forward.11} parent=0 // pred_check_branch
    %11 = sbr.rel (0) target = $region5
  $region4: #{resnet18_forward.11} parent=0 // pred_region
    _
  $region5: #{resnet18_forward.11} parent=0 // pred_fallthru
    _
  // Predicated region
  $region6: #{resnet18_forward.11} parent=0 // pred_check
    _
  $region7: #{resnet18_forward.11} parent=0 // pred_check_branch
    %13 = sbr.rel (0) target = $region9
  $region8: #{resnet18_forward.11} parent=0 // pred_region
    _
  $region9: #{resnet18_forward.11} parent=0 // pred_fallthru
    _
  %v15 = vld [vmem:[%s0] sm:$0xff]
  %v16 = vld [vmem:[%s0 + $0x8] sm:$0xff]
  %v17 = vld [vmem:[%s0 + $0x10] sm:$0xf]
  %v18 = vld [vmem:[%s0 + $0x14] sm:$0xff]
  %v19 = vld [vmem:[%s0 + $0x1c] sm:$0xff]
  %v20 = vld [vmem:[%s0 + $0x24] sm:$0xf]
  %v21 = vld [vmem:[%s0 + $0x28] sm:$0xff]
  %v22 = vld [vmem:[%s0 + $0x30] sm:$0xff]
  %v23 = vld [vmem:[%s0 + $0x38] sm:$0xf]
  %v24 = vld [vmem:[%s0 + $0x3c] sm:$0xff]
  %v25 = vld [vmem:[%s0 + $0x44] sm:$0xff]
  %v26 = vld [vmem:[%s0 + $0x4c] sm:$0xf]
  %v27 = vld [vmem:[%s0 + $0x50] sm:$0xff]
  %v28 = vld [vmem:[%s0 + $0x58] sm:$0xff]
  %v29 = vld [vmem:[%s0 + $0x60] sm:$0xf]
  %v30 = vld [vmem:[%s0 + $0x64] sm:$0xff]
  %v31 = vld [vmem:[%s0 + $0x6c] sm:$0xff]
  %v32 = vld [vmem:[%s0 + $0x74] sm:$0xf]
  %v33 = vld [vmem:[%s0 + $0x78] sm:$0xff]
  %v34 = vld [vmem:[%s0 + $0x80] sm:$0xff]
  %v35 = vld [vmem:[%s0 + $0x88] sm:$0xf]
  %v36 = vld [vmem:[%s0 + $0x8c] sm:$0xff]
  %v37 = vld [vmem:[%s0 + $0x94] sm:$0xff]
  %v38 = vld [vmem:[%s0 + $0x9c] sm:$0xf]
  %v39 = vld [vmem:[%s0 + $0xa0] sm:$0xff]
  %v40 = vld [vmem:[%s0 + $0xa8] sm:$0xff]
  %v41 = vld [vmem:[%s0 + $0xb0] sm:$0xf]
  %v42 = vld [vmem:[%s0 + $0xb4] sm:$0xff]
  %v43 = vld [vmem:[%s0 + $0xbc] sm:$0xff]
  %v44 = vld [vmem:[%s0 + $0xc4] sm:$0xf]
  %v45 = vld [vmem:[%s0 + $0xc8] sm:$0xff]
  %v46 = vld [vmem:[%s0 + $0xd0] sm:$0xff]
  %v47 = vld [vmem:[%s0 + $0xd8] sm:$0xf]
  %v48 = vld [vmem:[%s0 + $0xdc] sm:$0xff]
  %v49 = vld [vmem:[%s0 + $0xe4] sm:$0xff]
  %v50 = vld [vmem:[%s0 + $0xec] sm:$0xf]
  %v51 = vld [vmem:[%s0 + $0xf0] sm:$0xff]
  %v52 = vld [vmem:[%s0 + $0xf8] sm:$0xff]
  %v53 = vld [vmem:[%s0 + $0x100] sm:$0xf]
  %v54 = vld [vmem:[%s0 + $0x104] sm:$0xff]
  %v55 = vld [vmem:[%s0 + $0x10c] sm:$0xff]
  %v56 = vld [vmem:[%s0 + $0x114] sm:$0xf]
  %v57 = vld [vmem:[%s0 + $0x118] sm:$0xff]
  %v58 = vld [vmem:[%s0 + $0x120] sm:$0xff]
  %v59 = vld [vmem:[%s0 + $0x128] sm:$0xf]
  %v60 = vld [vmem:[%s0 + $0x12c] sm:$0xff]
  %v61 = vld [vmem:[%s0 + $0x134] sm:$0xff]
  %v62 = vld [vmem:[%s0 + $0x13c] sm:$0xf]
  %v63 = vld [vmem:[%s1] sm:$0xf]
  %v64 = vld [vmem:[%s1 + $0x4] sm:$0xf]
  %v65 = vld [vmem:[%s1 + $0x8] sm:$0xf]
  %v66 = vld [vmem:[%s1 + $0xc] sm:$0xf]
  %v67 = vld [vmem:[%s1 + $0x10] sm:$0xf]
  %v68 = vld [vmem:[%s1 + $0x14] sm:$0xf]
  %v69 = vld [vmem:[%s1 + $0x18] sm:$0xf]
  %v70 = vld [vmem:[%s1 + $0x1c] sm:$0xf]
  %v71 = vld [vmem:[%s1 + $0x20] sm:$0xf]
  %v72 = vld [vmem:[%s1 + $0x24] sm:$0xf]
  %v73 = vld [vmem:[%s1 + $0x28] sm:$0xf]
  %v74 = vld [vmem:[%s1 + $0x2c] sm:$0xf]
  %v75 = vld [vmem:[%s1 + $0x30] sm:$0xf]
  %v76 = vld [vmem:[%s1 + $0x34] sm:$0xf]
  %v77 = vld [vmem:[%s1 + $0x38] sm:$0xf]
  %v78 = vld [vmem:[%s1 + $0x3c] sm:$0xf]
  %v79 = vld [vmem:[%s1 + $0x40] sm:$0xf]
  %v80 = vld [vmem:[%s1 + $0x44] sm:$0xf]
  %v81 = vld [vmem:[%s1 + $0x48] sm:$0xf]
  %v82 = vld [vmem:[%s1 + $0x4c] sm:$0xf]
  %v83 = vld [vmem:[%s1 + $0x50] sm:$0xf]
  %v84 = vld [vmem:[%s1 + $0x54] sm:$0xf]
  %v85 = vld [vmem:[%s1 + $0x58] sm:$0xf]
  %v86 = vld [vmem:[%s1 + $0x5c] sm:$0xf]
  %v87 = vld [vmem:[%s1 + $0x60] sm:$0xf]
  %v88 = vld [vmem:[%s1 + $0x64] sm:$0xf]
  %v89 = vld [vmem:[%s1 + $0x68] sm:$0xf]
  %v90 = vld [vmem:[%s1 + $0x6c] sm:$0xf]
  %v91 = vld [vmem:[%s1 + $0x70] sm:$0xf]
  %v92 = vld [vmem:[%s1 + $0x74] sm:$0xf]
  %v93 = vld [vmem:[%s1 + $0x78] sm:$0xf]
  %v94 = vld [vmem:[%s1 + $0x7c] sm:$0xf]
  %v95 = vld [vmem:[%s1 + $0x80] sm:$0xf]
  %v96 = vld [vmem:[%s1 + $0x84] sm:$0xf]
  %v97 = vld [vmem:[%s1 + $0x88] sm:$0xf]
  %v98 = vld [vmem:[%s1 + $0x8c] sm:$0xf]
  %v99 = vld [vmem:[%s1 + $0x90] sm:$0xf]
  %v100 = vld [vmem:[%s1 + $0x94] sm:$0xf]
  %v101 = vld [vmem:[%s1 + $0x98] sm:$0xf]
  %v102 = vld [vmem:[%s1 + $0x9c] sm:$0xf]
  %v103 = vld [vmem:[%s1 + $0xa0] sm:$0xf]
  %v104 = vld [vmem:[%s1 + $0xa4] sm:$0xf]
  %v105 = vld [vmem:[%s1 + $0xa8] sm:$0xf]
  %v106 = vld [vmem:[%s1 + $0xac] sm:$0xf]
  %v107 = vld [vmem:[%s1 + $0xb0] sm:$0xf]
  %v108 = vld [vmem:[%s1 + $0xb4] sm:$0xf]
  %v109 = vld [vmem:[%s1 + $0xb8] sm:$0xf]
  %v110 = vld [vmem:[%s1 + $0xbc] sm:$0xf]
  %v111 = vld [vmem:[%s1 + $0xc0] sm:$0xf]
  %v112 = vld [vmem:[%s1 + $0xc4] sm:$0xf]
  %v113 = vld [vmem:[%s1 + $0xc8] sm:$0xf]
  %v114 = vld [vmem:[%s1 + $0xcc] sm:$0xf]
  %v115 = vld [vmem:[%s1 + $0xd0] sm:$0xf]
  %v116 = vld [vmem:[%s1 + $0xd4] sm:$0xf]
  %v117 = vld [vmem:[%s1 + $0xd8] sm:$0xf]
  %v118 = vld [vmem:[%s1 + $0xdc] sm:$0xf]
  %v119 = vld [vmem:[%s1 + $0xe0] sm:$0xf]
  %v120 = vld [vmem:[%s1 + $0xe4] sm:$0xf]
  %v121 = vld [vmem:[%s1 + $0xe8] sm:$0xf]
  %v122 = vld [vmem:[%s1 + $0xec] sm:$0xf]
  %v123 = vld [vmem:[%s1 + $0xf0] sm:$0xf]
  %v124 = vld [vmem:[%s1 + $0xf4] sm:$0xf]
  %v125 = vld [vmem:[%s1 + $0xf8] sm:$0xf]
  %v126 = vld [vmem:[%s1 + $0xfc] sm:$0xf]
  %v127 = vld [vmem:[%s1 + $0x100] sm:$0xf]
  %v128 = vld [vmem:[%s1 + $0x104] sm:$0xf]
  %v129 = vld [vmem:[%s1 + $0x108] sm:$0xf]
  %v130 = vld [vmem:[%s1 + $0x10c] sm:$0xf]
  %v131 = vld [vmem:[%s1 + $0x110] sm:$0xf]
  %v132 = vld [vmem:[%s1 + $0x114] sm:$0xf]
  %v133 = vld [vmem:[%s1 + $0x118] sm:$0xf]
  %v134 = vld [vmem:[%s1 + $0x11c] sm:$0xf]
  %v183 = vunpack.c.l.b16 %v15
  %v184 = vunpack.c.h.b16 %v15
  %v185 = vunpack.c.l.b16 %v16
  %v186 = vunpack.c.h.b16 %v16
  %v187 = vunpack.c.l.b16 %v17
  %v188 = vunpack.c.l.b16 %v18
  %v189 = vunpack.c.h.b16 %v18
  %v190 = vunpack.c.l.b16 %v19
  %v191 = vunpack.c.h.b16 %v19
  %v192 = vunpack.c.l.b16 %v20
  %v193 = vunpack.c.l.b16 %v21
  %v194 = vunpack.c.h.b16 %v21
  %v195 = vunpack.c.l.b16 %v22
  %v196 = vunpack.c.h.b16 %v22
  %v197 = vunpack.c.l.b16 %v23
  %v198 = vunpack.c.l.b16 %v24
  %v199 = vunpack.c.h.b16 %v24
  %v200 = vunpack.c.l.b16 %v25
  %v201 = vunpack.c.h.b16 %v25
  %v202 = vunpack.c.l.b16 %v26
  %v203 = vunpack.c.l.b16 %v27
  %v204 = vunpack.c.h.b16 %v27
  %v205 = vunpack.c.l.b16 %v28
  %v206 = vunpack.c.h.b16 %v28
  %v207 = vunpack.c.l.b16 %v29
  %v208 = vunpack.c.l.b16 %v30
  %v209 = vunpack.c.h.b16 %v30
  %v210 = vunpack.c.l.b16 %v31
  %v211 = vunpack.c.h.b16 %v31
  %v212 = vunpack.c.l.b16 %v32
  %v213 = vunpack.c.l.b16 %v33
  %v214 = vunpack.c.h.b16 %v33
  %v215 = vunpack.c.l.b16 %v34
  %v216 = vunpack.c.h.b16 %v34
  %v217 = vunpack.c.l.b16 %v35
  %v218 = vunpack.c.l.b16 %v36
  %v219 = vunpack.c.h.b16 %v36
  %v220 = vunpack.c.l.b16 %v37
  %v221 = vunpack.c.h.b16 %v37
  %v222 = vunpack.c.l.b16 %v38
  %v223 = vunpack.c.l.b16 %v39
  %v224 = vunpack.c.h.b16 %v39
  %v225 = vunpack.c.l.b16 %v40
  %v226 = vunpack.c.h.b16 %v40
  %v227 = vunpack.c.l.b16 %v41
  %v228 = vunpack.c.l.b16 %v42
  %v229 = vunpack.c.h.b16 %v42
  %v230 = vunpack.c.l.b16 %v43
  %v231 = vunpack.c.h.b16 %v43
  %v232 = vunpack.c.l.b16 %v44
  %v233 = vunpack.c.l.b16 %v45
  %v234 = vunpack.c.h.b16 %v45
  %v235 = vunpack.c.l.b16 %v46
  %v236 = vunpack.c.h.b16 %v46
  %v237 = vunpack.c.l.b16 %v47
  %v238 = vunpack.c.l.b16 %v48
  %v239 = vunpack.c.h.b16 %v48
  %v240 = vunpack.c.l.b16 %v49
  %v241 = vunpack.c.h.b16 %v49
  %v242 = vunpack.c.l.b16 %v50
  %v243 = vunpack.c.l.b16 %v51
  %v244 = vunpack.c.h.b16 %v51
  %v245 = vunpack.c.l.b16 %v52
  %v246 = vunpack.c.h.b16 %v52
  %v247 = vunpack.c.l.b16 %v53
  %v248 = vunpack.c.l.b16 %v54
  %v249 = vunpack.c.h.b16 %v54
  %v250 = vunpack.c.l.b16 %v55
  %v251 = vunpack.c.h.b16 %v55
  %v252 = vunpack.c.l.b16 %v56
  %v253 = vunpack.c.l.b16 %v57
  %v254 = vunpack.c.h.b16 %v57
  %v255 = vunpack.c.l.b16 %v58
  %v256 = vunpack.c.h.b16 %v58
  %v257 = vunpack.c.l.b16 %v59
  %v258 = vunpack.c.l.b16 %v60
  %v259 = vunpack.c.h.b16 %v60
  %v260 = vunpack.c.l.b16 %v61
  %v261 = vunpack.c.h.b16 %v61
  %v262 = vunpack.c.l.b16 %v62
  %v263 = vpack.c.b16 %v188, %v183
  %v264 = vpack.c.b16 %v189, %v184
  %v265 = vpack.c.b16 %v190, %v185
  %v266 = vpack.c.b16 %v191, %v186
  %v267 = vpack.c.b16 %v192, %v187
  %v268 = vpack.c.b16 %v198, %v193
  %v269 = vpack.c.b16 %v199, %v194
  %v270 = vpack.c.b16 %v200, %v195
  %v271 = vpack.c.b16 %v201, %v196
  %v272 = vpack.c.b16 %v202, %v197
  %v273 = vpack.c.b16 %v208, %v203
  %v274 = vpack.c.b16 %v209, %v204
  %v275 = vpack.c.b16 %v210, %v205
  %v276 = vpack.c.b16 %v211, %v206
  %v277 = vpack.c.b16 %v212, %v207
  %v278 = vpack.c.b16 %v218, %v213
  %v279 = vpack.c.b16 %v219, %v214
  %v280 = vpack.c.b16 %v220, %v215
  %v281 = vpack.c.b16 %v221, %v216
  %v282 = vpack.c.b16 %v222, %v217
  %v283 = vpack.c.b16 %v228, %v223
  %v284 = vpack.c.b16 %v229, %v224
  %v285 = vpack.c.b16 %v230, %v225
  %v286 = vpack.c.b16 %v231, %v226
  %v287 = vpack.c.b16 %v232, %v227
  %v288 = vpack.c.b16 %v238, %v233
  %v289 = vpack.c.b16 %v239, %v234
  %v290 = vpack.c.b16 %v240, %v235
  %v291 = vpack.c.b16 %v241, %v236
  %v292 = vpack.c.b16 %v242, %v237
  %v293 = vpack.c.b16 %v248, %v243
  %v294 = vpack.c.b16 %v249, %v244
  %v295 = vpack.c.b16 %v250, %v245
  %v296 = vpack.c.b16 %v251, %v246
  %v297 = vpack.c.b16 %v252, %v247
  %v298 = vpack.c.b16 %v258, %v253
  %v299 = vpack.c.b16 %v259, %v254
  %v300 = vpack.c.b16 %v260, %v255
  %v301 = vpack.c.b16 %v261, %v256
  %v302 = vpack.c.b16 %v262, %v257
  %v407 = vunpack.c.l.b16 %v63
  %v408 = vunpack.c.l.b16 %v64
  %v409 = vunpack.c.l.b16 %v65
  %v410 = vunpack.c.l.b16 %v66
  %v411 = vunpack.c.l.b16 %v67
  %v412 = vunpack.c.l.b16 %v68
  %v413 = vunpack.c.l.b16 %v69
  %v414 = vunpack.c.l.b16 %v70
  %v415 = vunpack.c.l.b16 %v71
  %v416 = vunpack.c.l.b16 %v72
  %v417 = vunpack.c.l.b16 %v73
  %v418 = vunpack.c.l.b16 %v74
  %v419 = vunpack.c.l.b16 %v75
  %v420 = vunpack.c.l.b16 %v76
  %v421 = vunpack.c.l.b16 %v77
  %v422 = vunpack.c.l.b16 %v78
  %v423 = vunpack.c.l.b16 %v79
  %v424 = vunpack.c.l.b16 %v80
  %v425 = vunpack.c.l.b16 %v81
  %v426 = vunpack.c.l.b16 %v82
  %v427 = vunpack.c.l.b16 %v83
  %v428 = vunpack.c.l.b16 %v84
  %v429 = vunpack.c.l.b16 %v85
  %v430 = vunpack.c.l.b16 %v86
  %v431 = vunpack.c.l.b16 %v87
  %v432 = vunpack.c.l.b16 %v88
  %v433 = vunpack.c.l.b16 %v89
  %v434 = vunpack.c.l.b16 %v90
  %v435 = vunpack.c.l.b16 %v91
  %v436 = vunpack.c.l.b16 %v92
  %v437 = vunpack.c.l.b16 %v93
  %v438 = vunpack.c.l.b16 %v94
  %v439 = vunpack.c.l.b16 %v95
  %v440 = vunpack.c.l.b16 %v96
  %v441 = vunpack.c.l.b16 %v97
  %v442 = vunpack.c.l.b16 %v98
  %v443 = vunpack.c.l.b16 %v99
  %v444 = vunpack.c.l.b16 %v100
  %v445 = vunpack.c.l.b16 %v101
  %v446 = vunpack.c.l.b16 %v102
  %v447 = vunpack.c.l.b16 %v103
  %v448 = vunpack.c.l.b16 %v104
  %v449 = vunpack.c.l.b16 %v105
  %v450 = vunpack.c.l.b16 %v106
  %v451 = vunpack.c.l.b16 %v107
  %v452 = vunpack.c.l.b16 %v108
  %v453 = vunpack.c.l.b16 %v109
  %v454 = vunpack.c.l.b16 %v110
  %v455 = vunpack.c.l.b16 %v111
  %v456 = vunpack.c.l.b16 %v112
  %v457 = vunpack.c.l.b16 %v113
  %v458 = vunpack.c.l.b16 %v114
  %v459 = vunpack.c.l.b16 %v115
  %v460 = vunpack.c.l.b16 %v116
  %v461 = vunpack.c.l.b16 %v117
  %v462 = vunpack.c.l.b16 %v118
  %v463 = vunpack.c.l.b16 %v119
  %v464 = vunpack.c.l.b16 %v120
  %v465 = vunpack.c.l.b16 %v121
  %v466 = vunpack.c.l.b16 %v122
  %v467 = vunpack.c.l.b16 %v123
  %v468 = vunpack.c.l.b16 %v124
  %v469 = vunpack.c.l.b16 %v125
  %v470 = vunpack.c.l.b16 %v126
  %v471 = vunpack.c.l.b16 %v127
  %v472 = vunpack.c.l.b16 %v128
  %v473 = vunpack.c.l.b16 %v129
  %v474 = vunpack.c.l.b16 %v130
  %v475 = vunpack.c.l.b16 %v131
  %v476 = vunpack.c.l.b16 %v132
  %v477 = vunpack.c.l.b16 %v133
  %v478 = vunpack.c.l.b16 %v134
  %v479 = vpack.c.b16 %v408, %v407
  %v480 = vpack.c.b16 %v410, %v409
  %v481 = vpack.c.b16 %v412, %v411
  %v482 = vpack.c.b16 %v414, %v413
  %v483 = vpack.c.b16 %v416, %v415
  %v484 = vpack.c.b16 %v418, %v417
  %v485 = vpack.c.b16 %v420, %v419
  %v486 = vpack.c.b16 %v422, %v421
  %v487 = vpack.c.b16 %v424, %v423
  %v488 = vpack.c.b16 %v426, %v425
  %v489 = vpack.c.b16 %v428, %v427
  %v490 = vpack.c.b16 %v430, %v429
  %v491 = vpack.c.b16 %v432, %v431
  %v492 = vpack.c.b16 %v434, %v433
  %v493 = vpack.c.b16 %v436, %v435
  %v494 = vpack.c.b16 %v438, %v437
  %v495 = vpack.c.b16 %v440, %v439
  %v496 = vpack.c.b16 %v442, %v441
  %v497 = vpack.c.b16 %v444, %v443
  %v498 = vpack.c.b16 %v446, %v445
  %v499 = vpack.c.b16 %v448, %v447
  %v500 = vpack.c.b16 %v450, %v449
  %v501 = vpack.c.b16 %v452, %v451
  %v502 = vpack.c.b16 %v454, %v453
  %v503 = vpack.c.b16 %v456, %v455
  %v504 = vpack.c.b16 %v458, %v457
  %v505 = vpack.c.b16 %v460, %v459
  %v506 = vpack.c.b16 %v462, %v461
  %v507 = vpack.c.b16 %v464, %v463
  %v508 = vpack.c.b16 %v466, %v465
  %v509 = vpack.c.b16 %v468, %v467
  %v510 = vpack.c.b16 %v470, %v469
  %v511 = vpack.c.b16 %v472, %v471
  %v512 = vpack.c.b16 %v474, %v473
  %v513 = vpack.c.b16 %v476, %v475
  %v514 = vpack.c.b16 %v478, %v477
  %vm551 = vcmask 523264
  %v553 = vsel %vm551, %v267, 0
  %v556 = vsel %vm551, %v272, 0
  %v559 = vsel %vm551, %v277, 0
  %v562 = vsel %vm551, %v282, 0
  %v565 = vsel %vm551, %v287, 0
  %v568 = vsel %vm551, %v292, 0
  %v571 = vsel %vm551, %v297, 0
  %v574 = vsel %vm551, %v302, 0
  %576 = vmatprep.subr.bf16.mxu0 0
  %577 = vmatpush1.bf16.msra.mxu0 %v486
  %578 = vmatprep.subr.bf16.mxu0 0
  %579 = vmatpush1.bf16.msra.mxu0 %v485
  %580 = vmatprep.subr.bf16.mxu0 0
  %581 = vmatpush1.bf16.msra.mxu0 %v484
  %582 = vmatprep.subr.bf16.mxu0 0
  %583 = vmatpush1.bf16.msra.mxu0 %v483
  %584 = vmatprep.subr.bf16.mxu0 0
  %585 = vmatpush1.bf16.msra.mxu0 %v482
  %586 = vmatprep.subr.bf16.mxu0 0
  %587 = vmatpush1.bf16.msra.mxu0 %v481
  %588 = vmatprep.subr.bf16.mxu0 0
  %589 = vmatpush1.bf16.msra.mxu0 %v480
  %590 = vmatprep.subr.bf16.mxu0 0
  %591 = vmatpush1.bf16.msra.mxu0 %v479
  %592 = vmatprep.subr.bf16.mxu0 0
  %593 = vmatpush2.bf16.msra.mxu0 %v494
  %594 = vmatprep.subr.bf16.mxu0 0
  %595 = vmatpush2.bf16.msra.mxu0 %v493
  %596 = vmatprep.subr.bf16.mxu0 0
  %597 = vmatpush2.bf16.msra.mxu0 %v492
  %598 = vmatprep.subr.bf16.mxu0 0
  %599 = vmatpush2.bf16.msra.mxu0 %v491
  %600 = vmatprep.subr.bf16.mxu0 0
  %601 = vmatpush2.bf16.msra.mxu0 %v490
  %602 = vmatprep.subr.bf16.mxu0 0
  %603 = vmatpush2.bf16.msra.mxu0 %v489
  %604 = vmatprep.subr.bf16.mxu0 0
  %605 = vmatpush2.bf16.msra.mxu0 %v488
  %606 = vmatprep.subr.bf16.mxu0 0
  %607 = vmatpush2.bf16.msra.mxu0 %v487
  %608 = vmatprep.mubr.bf16.mxu0 %v264
  %609 = vmatmul.mubr.bf16.gmra.mxu0 %v263
  %v610 = vpop.f32.mrf.mxu0
  %v611 = vadd.f32 0.0, %v610
  %v612 = vpop.f32.mrf.mxu0
  %v613 = vpop.f32.mrf.mxu0
  %v614 = vadd.f32 0.0, %v613
  %v615 = vpop.f32.mrf.mxu0
  %616 = vmatprep.mubr.bf16.mxu0 %v269
  %617 = vmatmul.mubr.bf16.gmra.mxu0 %v268
  %v618 = vpop.f32.mrf.mxu0
  %v619 = vadd.f32 0.0, %v618
  %v620 = vpop.f32.mrf.mxu0
  %v621 = vpop.f32.mrf.mxu0
  %v622 = vadd.f32 0.0, %v621
  %v623 = vpop.f32.mrf.mxu0
  %624 = vmatprep.mubr.bf16.mxu0 %v274
  %625 = vmatmul.mubr.bf16.gmra.mxu0 %v273
  %v626 = vpop.f32.mrf.mxu0
  %v627 = vadd.f32 0.0, %v626
  %v628 = vpop.f32.mrf.mxu0
  %v629 = vpop.f32.mrf.mxu0
  %v630 = vadd.f32 0.0, %v629
  %v631 = vpop.f32.mrf.mxu0
  %632 = vmatprep.mubr.bf16.mxu0 %v279
  %633 = vmatmul.mubr.bf16.gmra.mxu0 %v278
  %v634 = vpop.f32.mrf.mxu0
  %v635 = vadd.f32 0.0, %v634
  %v636 = vpop.f32.mrf.mxu0
  %v637 = vpop.f32.mrf.mxu0
  %v638 = vadd.f32 0.0, %v637
  %v639 = vpop.f32.mrf.mxu0
  %640 = vmatprep.mubr.bf16.mxu0 %v284
  %641 = vmatmul.mubr.bf16.gmra.mxu0 %v283
  %v642 = vpop.f32.mrf.mxu0
  %v643 = vadd.f32 0.0, %v642
  %v644 = vpop.f32.mrf.mxu0
  %v645 = vpop.f32.mrf.mxu0
  %v646 = vadd.f32 0.0, %v645
  %v647 = vpop.f32.mrf.mxu0
  %648 = vmatprep.mubr.bf16.mxu0 %v289
  %649 = vmatmul.mubr.bf16.gmra.mxu0 %v288
  %v650 = vpop.f32.mrf.mxu0
  %v651 = vadd.f32 0.0, %v650
  %v652 = vpop.f32.mrf.mxu0
  %v653 = vpop.f32.mrf.mxu0
  %v654 = vadd.f32 0.0, %v653
  %v655 = vpop.f32.mrf.mxu0
  %656 = vmatprep.mubr.bf16.mxu0 %v294
  %657 = vmatmul.mubr.bf16.gmra.mxu0 %v293
  %v658 = vpop.f32.mrf.mxu0
  %v659 = vadd.f32 0.0, %v658
  %v660 = vpop.f32.mrf.mxu0
  %v661 = vpop.f32.mrf.mxu0
  %v662 = vadd.f32 0.0, %v661
  %v663 = vpop.f32.mrf.mxu0
  %664 = vmatprep.mubr.bf16.mxu0 %v299
  %665 = vmatmul.mubr.bf16.gmra.mxu0 %v298
  %v666 = vpop.f32.mrf.mxu0
  %v667 = vadd.f32 0.0, %v666
  %v668 = vpop.f32.mrf.mxu0
  %v669 = vpop.f32.mrf.mxu0
  %v670 = vadd.f32 0.0, %v669
  %v671 = vpop.f32.mrf.mxu0
  %672 = vdwg.mxu0
  %673 = vmatprep.subr.bf16.mxu0 0
  %674 = vmatpush1.bf16.msra.mxu0 %v502
  %675 = vmatprep.subr.bf16.mxu0 0
  %676 = vmatpush1.bf16.msra.mxu0 %v501
  %677 = vmatprep.subr.bf16.mxu0 0
  %678 = vmatpush1.bf16.msra.mxu0 %v500
  %679 = vmatprep.subr.bf16.mxu0 0
  %680 = vmatpush1.bf16.msra.mxu0 %v499
  %681 = vmatprep.subr.bf16.mxu0 0
  %682 = vmatpush1.bf16.msra.mxu0 %v498
  %683 = vmatprep.subr.bf16.mxu0 0
  %684 = vmatpush1.bf16.msra.mxu0 %v497
  %685 = vmatprep.subr.bf16.mxu0 0
  %686 = vmatpush1.bf16.msra.mxu0 %v496
  %687 = vmatprep.subr.bf16.mxu0 0
  %688 = vmatpush1.bf16.msra.mxu0 %v495
  %689 = vmatprep.subr.bf16.mxu0 0
  %690 = vmatpush2.bf16.msra.mxu0 %v510
  %691 = vmatprep.subr.bf16.mxu0 0
  %692 = vmatpush2.bf16.msra.mxu0 %v509
  %693 = vmatprep.subr.bf16.mxu0 0
  %694 = vmatpush2.bf16.msra.mxu0 %v508
  %695 = vmatprep.subr.bf16.mxu0 0
  %696 = vmatpush2.bf16.msra.mxu0 %v507
  %697 = vmatprep.subr.bf16.mxu0 0
  %698 = vmatpush2.bf16.msra.mxu0 %v506
  %699 = vmatprep.subr.bf16.mxu0 0
  %700 = vmatpush2.bf16.msra.mxu0 %v505
  %701 = vmatprep.subr.bf16.mxu0 0
  %702 = vmatpush2.bf16.msra.mxu0 %v504
  %703 = vmatprep.subr.bf16.mxu0 0
  %704 = vmatpush2.bf16.msra.mxu0 %v503
  %705 = vmatprep.mubr.bf16.mxu0 %v266
  %706 = vmatmul.mubr.bf16.gmra.mxu0 %v265
  %v707 = vpop.f32.mrf.mxu0
  %v708 = vadd.f32 %v611, %v707
  %v709 = vpop.f32.mrf.mxu0
  %v710 = vpop.f32.mrf.mxu0
  %v711 = vadd.f32 %v614, %v710
  %v712 = vpop.f32.mrf.mxu0
  %713 = vmatprep.mubr.bf16.mxu0 %v271
  %714 = vmatmul.mubr.bf16.gmra.mxu0 %v270
  %v715 = vpop.f32.mrf.mxu0
  %v716 = vadd.f32 %v619, %v715
  %v717 = vpop.f32.mrf.mxu0
  %v718 = vpop.f32.mrf.mxu0
  %v719 = vadd.f32 %v622, %v718
  %v720 = vpop.f32.mrf.mxu0
  %721 = vmatprep.mubr.bf16.mxu0 %v276
  %722 = vmatmul.mubr.bf16.gmra.mxu0 %v275
  %v723 = vpop.f32.mrf.mxu0
  %v724 = vadd.f32 %v627, %v723
  %v725 = vpop.f32.mrf.mxu0
  %v726 = vpop.f32.mrf.mxu0
  %v727 = vadd.f32 %v630, %v726
  %v728 = vpop.f32.mrf.mxu0
  %729 = vmatprep.mubr.bf16.mxu0 %v281
  %730 = vmatmul.mubr.bf16.gmra.mxu0 %v280
  %v731 = vpop.f32.mrf.mxu0
  %v732 = vadd.f32 %v635, %v731
  %v733 = vpop.f32.mrf.mxu0
  %v734 = vpop.f32.mrf.mxu0
  %v735 = vadd.f32 %v638, %v734
  %v736 = vpop.f32.mrf.mxu0
  %737 = vmatprep.mubr.bf16.mxu0 %v286
  %738 = vmatmul.mubr.bf16.gmra.mxu0 %v285
  %v739 = vpop.f32.mrf.mxu0
  %v740 = vadd.f32 %v643, %v739
  %v741 = vpop.f32.mrf.mxu0
  %v742 = vpop.f32.mrf.mxu0
  %v743 = vadd.f32 %v646, %v742
  %v744 = vpop.f32.mrf.mxu0
  %745 = vmatprep.mubr.bf16.mxu0 %v291
  %746 = vmatmul.mubr.bf16.gmra.mxu0 %v290
  %v747 = vpop.f32.mrf.mxu0
  %v748 = vadd.f32 %v651, %v747
  %v749 = vpop.f32.mrf.mxu0
  %v750 = vpop.f32.mrf.mxu0
  %v751 = vadd.f32 %v654, %v750
  %v752 = vpop.f32.mrf.mxu0
  %753 = vmatprep.mubr.bf16.mxu0 %v296
  %754 = vmatmul.mubr.bf16.gmra.mxu0 %v295
  %v755 = vpop.f32.mrf.mxu0
  %v756 = vadd.f32 %v659, %v755
  %v757 = vpop.f32.mrf.mxu0
  %v758 = vpop.f32.mrf.mxu0
  %v759 = vadd.f32 %v662, %v758
  %v760 = vpop.f32.mrf.mxu0
  %761 = vmatprep.mubr.bf16.mxu0 %v301
  %762 = vmatmul.mubr.bf16.gmra.mxu0 %v300
  %v763 = vpop.f32.mrf.mxu0
  %v764 = vadd.f32 %v667, %v763
  %v765 = vpop.f32.mrf.mxu0
  %v766 = vpop.f32.mrf.mxu0
  %v767 = vadd.f32 %v670, %v766
  %v768 = vpop.f32.mrf.mxu0
  %769 = vdwg.mxu0
  %770 = vmatprep.subr.bf16.mxu0 0
  %771 = vmatpush1.bf16.msra.mxu0 0
  %772 = vmatprep.subr.bf16.mxu0 0
  %773 = vmatpush1.bf16.msra.mxu0 0
  %774 = vmatprep.subr.bf16.mxu0 0
  %775 = vmatpush1.bf16.msra.mxu0 0
  %776 = vmatprep.subr.bf16.mxu0 0
  %777 = vmatpush1.bf16.msra.mxu0 0
  %778 = vmatprep.subr.bf16.mxu0 0
  %779 = vmatpush1.bf16.msra.mxu0 %v514
  %780 = vmatprep.subr.bf16.mxu0 0
  %781 = vmatpush1.bf16.msra.mxu0 %v513
  %782 = vmatprep.subr.bf16.mxu0 0
  %783 = vmatpush1.bf16.msra.mxu0 %v512
  %784 = vmatprep.subr.bf16.mxu0 0
  %785 = vmatpush1.bf16.msra.mxu0 %v511
  %786 = vmatprep.subr.bf16.mxu0 0
  %787 = vmatpush2.bf16.msra.mxu0 0
  %788 = vmatprep.subr.bf16.mxu0 0
  %789 = vmatpush2.bf16.msra.mxu0 0
  %790 = vmatprep.subr.bf16.mxu0 0
  %791 = vmatpush2.bf16.msra.mxu0 0
  %792 = vmatprep.subr.bf16.mxu0 0
  %793 = vmatpush2.bf16.msra.mxu0 0
  %794 = vmatprep.subr.bf16.mxu0 0
  %795 = vmatpush2.bf16.msra.mxu0 0
  %796 = vmatprep.subr.bf16.mxu0 0
  %797 = vmatpush2.bf16.msra.mxu0 0
  %798 = vmatprep.subr.bf16.mxu0 0
  %799 = vmatpush2.bf16.msra.mxu0 0
  %800 = vmatprep.subr.bf16.mxu0 0
  %801 = vmatpush2.bf16.msra.mxu0 0
  %802 = vmatprep.mubr.bf16.mxu0 0
  %803 = vmatmul.mubr.bf16.gmra.mxu0 %v553
  %v804 = vpop.f32.mrf.mxu0
  %v805 = vadd.f32 %v708, %v804
  %v806 = vpop.f32.mrf.mxu0
  %v807 = vpop.f32.mrf.mxu0
  %v808 = vadd.f32 %v711, %v807
  %v809 = vpop.f32.mrf.mxu0
  %810 = vmatprep.mubr.bf16.mxu0 0
  %811 = vmatmul.mubr.bf16.gmra.mxu0 %v556
  %v812 = vpop.f32.mrf.mxu0
  %v813 = vadd.f32 %v716, %v812
  %v814 = vpop.f32.mrf.mxu0
  %v815 = vpop.f32.mrf.mxu0
  %v816 = vadd.f32 %v719, %v815
  %v817 = vpop.f32.mrf.mxu0
  %818 = vmatprep.mubr.bf16.mxu0 0
  %819 = vmatmul.mubr.bf16.gmra.mxu0 %v559
  %v820 = vpop.f32.mrf.mxu0
  %v821 = vadd.f32 %v724, %v820
  %v822 = vpop.f32.mrf.mxu0
  %v823 = vpop.f32.mrf.mxu0
  %v824 = vadd.f32 %v727, %v823
  %v825 = vpop.f32.mrf.mxu0
  %826 = vmatprep.mubr.bf16.mxu0 0
  %827 = vmatmul.mubr.bf16.gmra.mxu0 %v562
  %v828 = vpop.f32.mrf.mxu0
  %v829 = vadd.f32 %v732, %v828
  %v830 = vpop.f32.mrf.mxu0
  %v831 = vpop.f32.mrf.mxu0
  %v832 = vadd.f32 %v735, %v831
  %v833 = vpop.f32.mrf.mxu0
  %834 = vmatprep.mubr.bf16.mxu0 0
  %835 = vmatmul.mubr.bf16.gmra.mxu0 %v565
  %v836 = vpop.f32.mrf.mxu0
  %v837 = vadd.f32 %v740, %v836
  %v838 = vpop.f32.mrf.mxu0
  %v839 = vpop.f32.mrf.mxu0
  %v840 = vadd.f32 %v743, %v839
  %v841 = vpop.f32.mrf.mxu0
  %842 = vmatprep.mubr.bf16.mxu0 0
  %843 = vmatmul.mubr.bf16.gmra.mxu0 %v568
  %v844 = vpop.f32.mrf.mxu0
  %v845 = vadd.f32 %v748, %v844
  %v846 = vpop.f32.mrf.mxu0
  %v847 = vpop.f32.mrf.mxu0
  %v848 = vadd.f32 %v751, %v847
  %v849 = vpop.f32.mrf.mxu0
  %850 = vmatprep.mubr.bf16.mxu0 0
  %851 = vmatmul.mubr.bf16.gmra.mxu0 %v571
  %v852 = vpop.f32.mrf.mxu0
  %v853 = vadd.f32 %v756, %v852
  %v854 = vpop.f32.mrf.mxu0
  %v855 = vpop.f32.mrf.mxu0
  %v856 = vadd.f32 %v759, %v855
  %v857 = vpop.f32.mrf.mxu0
  %858 = vmatprep.mubr.bf16.mxu0 0
  %859 = vmatmul.mubr.bf16.gmra.mxu0 %v574
  %v860 = vpop.f32.mrf.mxu0
  %v861 = vadd.f32 %v764, %v860
  %v862 = vpop.f32.mrf.mxu0
  %v863 = vpop.f32.mrf.mxu0
  %v864 = vadd.f32 %v767, %v863
  %v865 = vpop.f32.mrf.mxu0
  %866 = vdwg.mxu0
  %867 = vst.msk [vmem:[%s2] sm:$0xff] %vm551, %v805
  %868 = vst.msk [vmem:[%s2 + $0x8] sm:$0xff] %vm551, %v808
  %869 = vst.msk [vmem:[%s2 + $0x10] sm:$0xff] %vm551, %v813
  %870 = vst.msk [vmem:[%s2 + $0x18] sm:$0xff] %vm551, %v816
  %871 = vst.msk [vmem:[%s2 + $0x20] sm:$0xff] %vm551, %v821
  %872 = vst.msk [vmem:[%s2 + $0x28] sm:$0xff] %vm551, %v824
  %873 = vst.msk [vmem:[%s2 + $0x30] sm:$0xff] %vm551, %v829
  %874 = vst.msk [vmem:[%s2 + $0x38] sm:$0xff] %vm551, %v832
  %875 = vst.msk [vmem:[%s2 + $0x40] sm:$0xff] %vm551, %v837
  %876 = vst.msk [vmem:[%s2 + $0x48] sm:$0xff] %vm551, %v840
  %877 = vst.msk [vmem:[%s2 + $0x50] sm:$0xff] %vm551, %v845
  %878 = vst.msk [vmem:[%s2 + $0x58] sm:$0xff] %vm551, %v848
  %879 = vst.msk [vmem:[%s2 + $0x60] sm:$0xff] %vm551, %v853
  %880 = vst.msk [vmem:[%s2 + $0x68] sm:$0xff] %vm551, %v856
  %881 = vst.msk [vmem:[%s2 + $0x70] sm:$0xff] %vm551, %v861
  %882 = vst.msk [vmem:[%s2 + $0x78] sm:$0xff] %vm551, %v864
  %v883 = vsel %vm551, %v805, 0.0
  %v884 = vsel %vm551, %v808, 0.0
  %v885 = vadd.f32 %v883, %v884
  %v886 = vsel %vm551, %v813, 0.0
  %v887 = vadd.f32 %v885, %v886
  %v888 = vsel %vm551, %v816, 0.0
  %v889 = vadd.f32 %v887, %v888
  %v890 = vsel %vm551, %v821, 0.0
  %v891 = vadd.f32 %v889, %v890
  %v892 = vsel %vm551, %v824, 0.0
  %v893 = vadd.f32 %v891, %v892
  %v894 = vsel %vm551, %v829, 0.0
  %v895 = vadd.f32 %v893, %v894
  %v896 = vsel %vm551, %v832, 0.0
  %v897 = vadd.f32 %v895, %v896
  %v898 = vsel %vm551, %v837, 0.0
  %v899 = vadd.f32 %v897, %v898
  %v900 = vsel %vm551, %v840, 0.0
  %v901 = vadd.f32 %v899, %v900
  %v902 = vsel %vm551, %v845, 0.0
  %v903 = vadd.f32 %v901, %v902
  %v904 = vsel %vm551, %v848, 0.0
  %v905 = vadd.f32 %v903, %v904
  %v906 = vsel %vm551, %v853, 0.0
  %v907 = vadd.f32 %v905, %v906
  %v908 = vsel %vm551, %v856, 0.0
  %v909 = vadd.f32 %v907, %v908
  %v910 = vsel %vm551, %v861, 0.0
  %v911 = vadd.f32 %v909, %v910
  %v912 = vsel %vm551, %v864, 0.0
  %v913 = vadd.f32 %v911, %v912
  %v914 = vrot.slane %v913, 4
  %v915 = vadd.f32 %v913, %v914
  %v916 = vrot.slane %v915, 2
  %v917 = vadd.f32 %v915, %v916
  %v918 = vrot.slane %v917, 1
  %v919 = vadd.f32 %v917, %v918
  %vm920 = vcmask 516096
  %921 = vst.msk [vmem:[%s3] sm:$0x1] %vm920, %v919
  %v922 = vmul.f32 %v805, %v805
  %v923 = vmul.f32 %v808, %v808
  %v924 = vmul.f32 %v813, %v813
  %v925 = vmul.f32 %v816, %v816
  %v926 = vmul.f32 %v821, %v821
  %v927 = vmul.f32 %v824, %v824
  %v928 = vmul.f32 %v829, %v829
  %v929 = vmul.f32 %v832, %v832
  %v930 = vmul.f32 %v837, %v837
  %v931 = vmul.f32 %v840, %v840
  %v932 = vmul.f32 %v845, %v845
  %v933 = vmul.f32 %v848, %v848
  %v934 = vmul.f32 %v853, %v853
  %v935 = vmul.f32 %v856, %v856
  %v936 = vmul.f32 %v861, %v861
  %v937 = vmul.f32 %v864, %v864
  %v938 = vsel %vm551, %v922, 0.0
  %v939 = vsel %vm551, %v923, 0.0
  %v940 = vadd.f32 %v938, %v939
  %v941 = vsel %vm551, %v924, 0.0
  %v942 = vadd.f32 %v940, %v941
  %v943 = vsel %vm551, %v925, 0.0
  %v944 = vadd.f32 %v942, %v943
  %v945 = vsel %vm551, %v926, 0.0
  %v946 = vadd.f32 %v944, %v945
  %v947 = vsel %vm551, %v927, 0.0
  %v948 = vadd.f32 %v946, %v947
  %v949 = vsel %vm551, %v928, 0.0
  %v950 = vadd.f32 %v948, %v949
  %v951 = vsel %vm551, %v929, 0.0
  %v952 = vadd.f32 %v950, %v951
  %v953 = vsel %vm551, %v930, 0.0
  %v954 = vadd.f32 %v952, %v953
  %v955 = vsel %vm551, %v931, 0.0
  %v956 = vadd.f32 %v954, %v955
  %v957 = vsel %vm551, %v932, 0.0
  %v958 = vadd.f32 %v956, %v957
  %v959 = vsel %vm551, %v933, 0.0
  %v960 = vadd.f32 %v958, %v959
  %v961 = vsel %vm551, %v934, 0.0
  %v962 = vadd.f32 %v960, %v961
  %v963 = vsel %vm551, %v935, 0.0
  %v964 = vadd.f32 %v962, %v963
  %v965 = vsel %vm551, %v936, 0.0
  %v966 = vadd.f32 %v964, %v965
  %v967 = vsel %vm551, %v937, 0.0
  %v968 = vadd.f32 %v966, %v967
  %v969 = vrot.slane %v968, 4
  %v970 = vadd.f32 %v968, %v969
  %v971 = vrot.slane %v970, 2
  %v972 = vadd.f32 %v970, %v971
  %v973 = vrot.slane %v972, 1
  %v974 = vadd.f32 %v972, %v973
  %975 = vst.msk [vmem:[%s4] sm:$0x1] %vm920, %v974
  // Predicated region
  $region10: #{resnet18_forward.11} parent=0 // pred_check
    _
  $region11: #{resnet18_forward.11} parent=0 // pred_check_branch
    %977 = sbr.rel (0) target = $region13
  $region12: #{resnet18_forward.11} parent=0 // pred_region
    _
  $region13: #{resnet18_forward.11} parent=0 // pred_fallthru
    _
  // Predicated region
  $region14: #{resnet18_forward.11} parent=0 // pred_check
    _
  $region15: #{resnet18_forward.11} parent=0 // pred_check_branch
    %979 = sbr.rel (0) target = $region17
  $region16: #{resnet18_forward.11} parent=0 // pred_region
    _
  $region17: #{resnet18_forward.11} parent=0 // pred_fallthru
    _
  // Predicated region
  $region18: #{resnet18_forward.11} parent=0 // pred_check
    _
  $region19: #{resnet18_forward.11} parent=0 // pred_check_branch
    %981 = sbr.rel (0) target = $region21
  $region20: #{resnet18_forward.11} parent=0 // pred_region
    _
  $region21: #{resnet18_forward.11} parent=0 // pred_fallthru
    _
  // Predicated region
  $region22: #{resnet18_forward.11} parent=0 // pred_check
    _
  $region23: #{resnet18_forward.11} parent=0 // pred_check_branch
    %983 = sbr.rel (0) target = $region25
  $region24: #{resnet18_forward.11} parent=0 // pred_region
    _
  $region25: #{resnet18_forward.11} parent=0 // pred_fallthru
    _
  // Predicated region
  $region26: #{resnet18_forward.11} parent=0 // pred_check
    _
  $region27: #{resnet18_forward.11} parent=0 // pred_check_branch
    %985 = sbr.rel (0) target = $region29
  $region28: #{resnet18_forward.11} parent=0 // pred_region
    _
  $region29: #{resnet18_forward.11} parent=0 // pred_fallthru
    _
  // Predicated region
  $region30: #{resnet18_forward.11} parent=0 // pred_check
    _
  $region31: #{resnet18_forward.11} parent=0 // pred_check_branch
    %987 = sbr.rel (0) target = $region33
  $region32: #{resnet18_forward.11} parent=0 // pred_region
    _
  $region33: #{resnet18_forward.11} parent=0 // pred_fallthru
    _

// kernel: resnet18_forward.15
$region0: #{resnet18_forward.15}
  #allocation0 [shape = 'u32[]', space=smem, size = 0x4, offset = 0x4, fixed_abs, tag = 'smem constant byte address 0x4 - core index']
  #allocation1 [shape = 'u32[144,128]{1,0:T(1,128)}', space=vmem, size = 0x12000, scoped, tag = 'internal scratch']
  %s0 = inlined_call_operand.vmem [shape: bf16[32,576], index: 0, kind: input, shape index: {}]
  %s1 = inlined_call_operand.vmem [shape: bf16[576,128], index: 1, kind: input, shape index: {}]
  %s2 = inlined_call_operand.vmem [shape: f32[32,128], index: 2, kind: output, shape index: {0}]
  %s3 = inlined_call_operand.vmem [shape: f32[1,1,128], index: 3, kind: output, shape index: {1}]
  %s4 = inlined_call_operand.vmem [shape: f32[1,1,128], index: 4, kind: output, shape index: {2}]
  %5 = xla_tuple %s2, %s3, %s4
  %s6 = sld [smem:[#allocation0]]
  $region34: #{resnet18_forward.15} parent=0
    _
  %s8 = ssub.s32 1, %s6
  %s9 = scalar_select 0, %s8, %s6
  // Predicated region
  $region2: #{resnet18_forward.15} parent=0 // pred_check
    _
  $region3: #{resnet18_forward.15} parent=0 // pred_check_branch
    %11 = sbr.rel (0) target = $region5
  $region4: #{resnet18_forward.15} parent=0 // pred_region
    _
  $region5: #{resnet18_forward.15} parent=0 // pred_fallthru
    _
  // Predicated region
  $region6: #{resnet18_forward.15} parent=0 // pred_check
    _
  $region7: #{resnet18_forward.15} parent=0 // pred_check_branch
    %13 = sbr.rel (0) target = $region9
  $region8: #{resnet18_forward.15} parent=0 // pred_region
    _
  $region9: #{resnet18_forward.15} parent=0 // pred_fallthru
    _
  %v15 = vld [vmem:[%s0] sm:$0xff]
  %v16 = vld [vmem:[%s0 + $0x8] sm:$0xff]
  %v17 = vld [vmem:[%s0 + $0x10] sm:$0xf]
  %v18 = vld [vmem:[%s0 + $0x14] sm:$0xff]
  %v19 = vld [vmem:[%s0 + $0x1c] sm:$0xff]
  %v20 = vld [vmem:[%s0 + $0x24] sm:$0xf]
  %v21 = vld [vmem:[%s0 + $0x28] sm:$0xff]
  %v22 = vld [vmem:[%s0 + $0x30] sm:$0xff]
  %v23 = vld [vmem:[%s0 + $0x38] sm:$0xf]
  %v24 = vld [vmem:[%s0 + $0x3c] sm:$0xff]
  %v25 = vld [vmem:[%s0 + $0x44] sm:$0xff]
  %v26 = vld [vmem:[%s0 + $0x4c] sm:$0xf]
  %v27 = vld [vmem:[%s1] sm:$0xf]
  %v28 = vld [vmem:[%s1 + $0x4] sm:$0xf]
  %v29 = vld [vmem:[%s1 + $0x8] sm:$0xf]
  %v30 = vld [vmem:[%s1 + $0xc] sm:$0xf]
  %v31 = vld [vmem:[%s1 + $0x10] sm:$0xf]
  %v32 = vld [vmem:[%s1 + $0x14] sm:$0xf]
  %v33 = vld [vmem:[%s1 + $0x18] sm:$0xf]
  %v34 = vld [vmem:[%s1 + $0x1c] sm:$0xf]
  %v35 = vld [vmem:[%s1 + $0x20] sm:$0xf]
  %v36 = vld [vmem:[%s1 + $0x24] sm:$0xf]
  %v37 = vld [vmem:[%s1 + $0x28] sm:$0xf]
  %v38 = vld [vmem:[%s1 + $0x2c] sm:$0xf]
  %v39 = vld [vmem:[%s1 + $0x30] sm:$0xf]
  %v40 = vld [vmem:[%s1 + $0x34] sm:$0xf]
  %v41 = vld [vmem:[%s1 + $0x38] sm:$0xf]
  %v42 = vld [vmem:[%s1 + $0x3c] sm:$0xf]
  %v43 = vld [vmem:[%s1 + $0x40] sm:$0xf]
  %v44 = vld [vmem:[%s1 + $0x44] sm:$0xf]
  %v45 = vld [vmem:[%s1 + $0x48] sm:$0xf]
  %v46 = vld [vmem:[%s1 + $0x4c] sm:$0xf]
  %v47 = vld [vmem:[%s1 + $0x50] sm:$0xf]
  %v48 = vld [vmem:[%s1 + $0x54] sm:$0xf]
  %v49 = vld [vmem:[%s1 + $0x58] sm:$0xf]
  %v50 = vld [vmem:[%s1 + $0x5c] sm:$0xf]
  %v51 = vld [vmem:[%s1 + $0x60] sm:$0xf]
  %v52 = vld [vmem:[%s1 + $0x64] sm:$0xf]
  %v53 = vld [vmem:[%s1 + $0x68] sm:$0xf]
  %v54 = vld [vmem:[%s1 + $0x6c] sm:$0xf]
  %v55 = vld [vmem:[%s1 + $0x70] sm:$0xf]
  %v56 = vld [vmem:[%s1 + $0x74] sm:$0xf]
  %v57 = vld [vmem:[%s1 + $0x78] sm:$0xf]
  %v58 = vld [vmem:[%s1 + $0x7c] sm:$0xf]
  %v59 = vld [vmem:[%s1 + $0x80] sm:$0xf]
  %v60 = vld [vmem:[%s1 + $0x84] sm:$0xf]
  %v61 = vld [vmem:[%s1 + $0x88] sm:$0xf]
  %v62 = vld [vmem:[%s1 + $0x8c] sm:$0xf]
  %v63 = vld [vmem:[%s1 + $0x90] sm:$0xf]
  %v64 = vld [vmem:[%s1 + $0x94] sm:$0xf]
  %v65 = vld [vmem:[%s1 + $0x98] sm:$0xf]
  %v66 = vld [vmem:[%s1 + $0x9c] sm:$0xf]
  %v67 = vld [vmem:[%s1 + $0xa0] sm:$0xf]
  %v68 = vld [vmem:[%s1 + $0xa4] sm:$0xf]
  %v69 = vld [vmem:[%s1 + $0xa8] sm:$0xf]
  %v70 = vld [vmem:[%s1 + $0xac] sm:$0xf]
  %v71 = vld [vmem:[%s1 + $0xb0] sm:$0xf]
  %v72 = vld [vmem:[%s1 + $0xb4] sm:$0xf]
  %v73 = vld [vmem:[%s1 + $0xb8] sm:$0xf]
  %v74 = vld [vmem:[%s1 + $0xbc] sm:$0xf]
  %v75 = vld [vmem:[%s1 + $0xc0] sm:$0xf]
  %v76 = vld [vmem:[%s1 + $0xc4] sm:$0xf]
  %v77 = vld [vmem:[%s1 + $0xc8] sm:$0xf]
  %v78 = vld [vmem:[%s1 + $0xcc] sm:$0xf]
  %v79 = vld [vmem:[%s1 + $0xd0] sm:$0xf]
  %v80 = vld [vmem:[%s1 + $0xd4] sm:$0xf]
  %v81 = vld [vmem:[%s1 + $0xd8] sm:$0xf]
  %v82 = vld [vmem:[%s1 + $0xdc] sm:$0xf]
  %v83 = vld [vmem:[%s1 + $0xe0] sm:$0xf]
  %v84 = vld [vmem:[%s1 + $0xe4] sm:$0xf]
  %v85 = vld [vmem:[%s1 + $0xe8] sm:$0xf]
  %v86 = vld [vmem:[%s1 + $0xec] sm:$0xf]
  %v87 = vld [vmem:[%s1 + $0xf0] sm:$0xf]
  %v88 = vld [vmem:[%s1 + $0xf4] sm:$0xf]
  %v89 = vld [vmem:[%s1 + $0xf8] sm:$0xf]
  %v90 = vld [vmem:[%s1 + $0xfc] sm:$0xf]
  %v91 = vld [vmem:[%s1 + $0x100] sm:$0xf]
  %v92 = vld [vmem:[%s1 + $0x104] sm:$0xf]
  %v93 = vld [vmem:[%s1 + $0x108] sm:$0xf]
  %v94 = vld [vmem:[%s1 + $0x10c] sm:$0xf]
  %v95 = vld [vmem:[%s1 + $0x110] sm:$0xf]
  %v96 = vld [vmem:[%s1 + $0x114] sm:$0xf]
  %v97 = vld [vmem:[%s1 + $0x118] sm:$0xf]
  %v98 = vld [vmem:[%s1 + $0x11c] sm:$0xf]
  %v111 = vunpack.c.l.b16 %v15
  %v112 = vunpack.c.h.b16 %v15
  %v113 = vunpack.c.l.b16 %v16
  %v114 = vunpack.c.h.b16 %v16
  %v115 = vunpack.c.l.b16 %v17
  %v116 = vunpack.c.l.b16 %v18
  %v117 = vunpack.c.h.b16 %v18
  %v118 = vunpack.c.l.b16 %v19
  %v119 = vunpack.c.h.b16 %v19
  %v120 = vunpack.c.l.b16 %v20
  %v121 = vunpack.c.l.b16 %v21
  %v122 = vunpack.c.h.b16 %v21
  %v123 = vunpack.c.l.b16 %v22
  %v124 = vunpack.c.h.b16 %v22
  %v125 = vunpack.c.l.b16 %v23
  %v126 = vunpack.c.l.b16 %v24
  %v127 = vunpack.c.h.b16 %v24
  %v128 = vunpack.c.l.b16 %v25
  %v129 = vunpack.c.h.b16 %v25
  %v130 = vunpack.c.l.b16 %v26
  %v131 = vpack.c.b16 %v116, %v111
  %v132 = vpack.c.b16 %v117, %v112
  %v133 = vpack.c.b16 %v118, %v113
  %v134 = vpack.c.b16 %v119, %v114
  %v135 = vpack.c.b16 %v120, %v115
  %v136 = vpack.c.b16 %v126, %v121
  %v137 = vpack.c.b16 %v127, %v122
  %v138 = vpack.c.b16 %v128, %v123
  %v139 = vpack.c.b16 %v129, %v124
  %v140 = vpack.c.b16 %v130, %v125
  %v221 = vunpack.c.l.b16 %v27
  %v222 = vunpack.c.l.b16 %v28
  %v223 = vunpack.c.l.b16 %v29
  %v224 = vunpack.c.l.b16 %v30
  %v225 = vunpack.c.l.b16 %v31
  %v226 = vunpack.c.l.b16 %v32
  %v227 = vunpack.c.l.b16 %v33
  %v228 = vunpack.c.l.b16 %v34
  %v229 = vunpack.c.l.b16 %v35
  %v230 = vunpack.c.l.b16 %v36
  %v231 = vunpack.c.l.b16 %v37
  %v232 = vunpack.c.l.b16 %v38
  %v233 = vunpack.c.l.b16 %v39
  %v234 = vunpack.c.l.b16 %v40
  %v235 = vunpack.c.l.b16 %v41
  %v236 = vunpack.c.l.b16 %v42
  %v237 = vunpack.c.l.b16 %v43
  %v238 = vunpack.c.l.b16 %v44
  %v239 = vunpack.c.l.b16 %v45
  %v240 = vunpack.c.l.b16 %v46
  %v241 = vunpack.c.l.b16 %v47
  %v242 = vunpack.c.l.b16 %v48
  %v243 = vunpack.c.l.b16 %v49
  %v244 = vunpack.c.l.b16 %v50
  %v245 = vunpack.c.l.b16 %v51
  %v246 = vunpack.c.l.b16 %v52
  %v247 = vunpack.c.l.b16 %v53
  %v248 = vunpack.c.l.b16 %v54
  %v249 = vunpack.c.l.b16 %v55
  %v250 = vunpack.c.l.b16 %v56
  %v251 = vunpack.c.l.b16 %v57
  %v252 = vunpack.c.l.b16 %v58
  %v253 = vunpack.c.l.b16 %v59
  %v254 = vunpack.c.l.b16 %v60
  %v255 = vunpack.c.l.b16 %v61
  %v256 = vunpack.c.l.b16 %v62
  %v257 = vunpack.c.l.b16 %v63
  %v258 = vunpack.c.l.b16 %v64
  %v259 = vunpack.c.l.b16 %v65
  %v260 = vunpack.c.l.b16 %v66
  %v261 = vunpack.c.l.b16 %v67
  %v262 = vunpack.c.l.b16 %v68
  %v263 = vunpack.c.l.b16 %v69
  %v264 = vunpack.c.l.b16 %v70
  %v265 = vunpack.c.l.b16 %v71
  %v266 = vunpack.c.l.b16 %v72
  %v267 = vunpack.c.l.b16 %v73
  %v268 = vunpack.c.l.b16 %v74
  %v269 = vunpack.c.l.b16 %v75
  %v270 = vunpack.c.l.b16 %v76
  %v271 = vunpack.c.l.b16 %v77
  %v272 = vunpack.c.l.b16 %v78
  %v273 = vunpack.c.l.b16 %v79
  %v274 = vunpack.c.l.b16 %v80
  %v275 = vunpack.c.l.b16 %v81
  %v276 = vunpack.c.l.b16 %v82
  %v277 = vunpack.c.l.b16 %v83
  %v278 = vunpack.c.l.b16 %v84
  %v279 = vunpack.c.l.b16 %v85
  %v280 = vunpack.c.l.b16 %v86
  %v281 = vunpack.c.l.b16 %v87
  %v282 = vunpack.c.l.b16 %v88
  %v283 = vunpack.c.l.b16 %v89
  %v284 = vunpack.c.l.b16 %v90
  %v285 = vunpack.c.l.b16 %v91
  %v286 = vunpack.c.l.b16 %v92
  %v287 = vunpack.c.l.b16 %v93
  %v288 = vunpack.c.l.b16 %v94
  %v289 = vunpack.c.l.b16 %v95
  %v290 = vunpack.c.l.b16 %v96
  %v291 = vunpack.c.l.b16 %v97
  %v292 = vunpack.c.l.b16 %v98
  %v293 = vpack.c.b16 %v222, %v221
  %v294 = vpack.c.b16 %v224, %v223
  %v295 = vpack.c.b16 %v226, %v225
  %v296 = vpack.c.b16 %v228, %v227
  %v297 = vpack.c.b16 %v230, %v229
  %v298 = vpack.c.b16 %v232, %v231
  %v299 = vpack.c.b16 %v234, %v233
  %v300 = vpack.c.b16 %v236, %v235
  %v301 = vpack.c.b16 %v238, %v237
  %v302 = vpack.c.b16 %v240, %v239
  %v303 = vpack.c.b16 %v242, %v241
  %v304 = vpack.c.b16 %v244, %v243
  %v305 = vpack.c.b16 %v246, %v245
  %v306 = vpack.c.b16 %v248, %v247
  %v307 = vpack.c.b16 %v250, %v249
  %v308 = vpack.c.b16 %v252, %v251
  %v309 = vpack.c.b16 %v254, %v253
  %v310 = vpack.c.b16 %v256, %v255
  %v311 = vpack.c.b16 %v258, %v257
  %v312 = vpack.c.b16 %v260, %v259
  %v313 = vpack.c.b16 %v262, %v261
  %v314 = vpack.c.b16 %v264, %v263
  %v315 = vpack.c.b16 %v266, %v265
  %v316 = vpack.c.b16 %v268, %v267
  %v317 = vpack.c.b16 %v270, %v269
  %v318 = vpack.c.b16 %v272, %v271
  %v319 = vpack.c.b16 %v274, %v273
  %v320 = vpack.c.b16 %v276, %v275
  %v321 = vpack.c.b16 %v278, %v277
  %v322 = vpack.c.b16 %v280, %v279
  %v323 = vpack.c.b16 %v282, %v281
  %v324 = vpack.c.b16 %v284, %v283
  %v325 = vpack.c.b16 %v286, %v285
  %v326 = vpack.c.b16 %v288, %v287
  %v327 = vpack.c.b16 %v290, %v289
  %v328 = vpack.c.b16 %v292, %v291
  %vm365 = vcmask 523264
  %v367 = vsel %vm365, %v135, 0
  %v370 = vsel %vm365, %v140, 0
  %372 = vmatprep.subr.bf16.mxu0 0
  %373 = vmatpush1.bf16.msra.mxu0 %v300
  %374 = vmatprep.subr.bf16.mxu0 0
  %375 = vmatpush1.bf16.msra.mxu0 %v299
  %376 = vmatprep.subr.bf16.mxu0 0
  %377 = vmatpush1.bf16.msra.mxu0 %v298
  %378 = vmatprep.subr.bf16.mxu0 0
  %379 = vmatpush1.bf16.msra.mxu0 %v297
  %380 = vmatprep.subr.bf16.mxu0 0
  %381 = vmatpush1.bf16.msra.mxu0 %v296
  %382 = vmatprep.subr.bf16.mxu0 0
  %383 = vmatpush1.bf16.msra.mxu0 %v295
  %384 = vmatprep.subr.bf16.mxu0 0
  %385 = vmatpush1.bf16.msra.mxu0 %v294
  %386 = vmatprep.subr.bf16.mxu0 0
  %387 = vmatpush1.bf16.msra.mxu0 %v293
  %388 = vmatprep.subr.bf16.mxu0 0
  %389 = vmatpush2.bf16.msra.mxu0 %v308
  %390 = vmatprep.subr.bf16.mxu0 0
  %391 = vmatpush2.bf16.msra.mxu0 %v307
  %392 = vmatprep.subr.bf16.mxu0 0
  %393 = vmatpush2.bf16.msra.mxu0 %v306
  %394 = vmatprep.subr.bf16.mxu0 0
  %395 = vmatpush2.bf16.msra.mxu0 %v305
  %396 = vmatprep.subr.bf16.mxu0 0
  %397 = vmatpush2.bf16.msra.mxu0 %v304
  %398 = vmatprep.subr.bf16.mxu0 0
  %399 = vmatpush2.bf16.msra.mxu0 %v303
  %400 = vmatprep.subr.bf16.mxu0 0
  %401 = vmatpush2.bf16.msra.mxu0 %v302
  %402 = vmatprep.subr.bf16.mxu0 0
  %403 = vmatpush2.bf16.msra.mxu0 %v301
  %404 = vmatprep.mubr.bf16.mxu0 %v132
  %405 = vmatmul.mubr.bf16.gmra.mxu0 %v131
  %v406 = vpop.f32.mrf.mxu0
  %v407 = vadd.f32 0.0, %v406
  %v408 = vpop.f32.mrf.mxu0
  %v409 = vpop.f32.mrf.mxu0
  %v410 = vadd.f32 0.0, %v409
  %v411 = vpop.f32.mrf.mxu0
  %412 = vmatprep.mubr.bf16.mxu0 %v137
  %413 = vmatmul.mubr.bf16.gmra.mxu0 %v136
  %v414 = vpop.f32.mrf.mxu0
  %v415 = vadd.f32 0.0, %v414
  %v416 = vpop.f32.mrf.mxu0
  %v417 = vpop.f32.mrf.mxu0
  %v418 = vadd.f32 0.0, %v417
  %v419 = vpop.f32.mrf.mxu0
  %420 = vdwg.mxu0
  %421 = vmatprep.subr.bf16.mxu0 0
  %422 = vmatpush1.bf16.msra.mxu0 %v316
  %423 = vmatprep.subr.bf16.mxu0 0
  %424 = vmatpush1.bf16.msra.mxu0 %v315
  %425 = vmatprep.subr.bf16.mxu0 0
  %426 = vmatpush1.bf16.msra.mxu0 %v314
  %427 = vmatprep.subr.bf16.mxu0 0
  %428 = vmatpush1.bf16.msra.mxu0 %v313
  %429 = vmatprep.subr.bf16.mxu0 0
  %430 = vmatpush1.bf16.msra.mxu0 %v312
  %431 = vmatprep.subr.bf16.mxu0 0
  %432 = vmatpush1.bf16.msra.mxu0 %v311
  %433 = vmatprep.subr.bf16.mxu0 0
  %434 = vmatpush1.bf16.msra.mxu0 %v310
  %435 = vmatprep.subr.bf16.mxu0 0
  %436 = vmatpush1.bf16.msra.mxu0 %v309
  %437 = vmatprep.subr.bf16.mxu0 0
  %438 = vmatpush2.bf16.msra.mxu0 %v324
  %439 = vmatprep.subr.bf16.mxu0 0
  %440 = vmatpush2.bf16.msra.mxu0 %v323
  %441 = vmatprep.subr.bf16.mxu0 0
  %442 = vmatpush2.bf16.msra.mxu0 %v322
  %443 = vmatprep.subr.bf16.mxu0 0
  %444 = vmatpush2.bf16.msra.mxu0 %v321
  %445 = vmatprep.subr.bf16.mxu0 0
  %446 = vmatpush2.bf16.msra.mxu0 %v320
  %447 = vmatprep.subr.bf16.mxu0 0
  %448 = vmatpush2.bf16.msra.mxu0 %v319
  %449 = vmatprep.subr.bf16.mxu0 0
  %450 = vmatpush2.bf16.msra.mxu0 %v318
  %451 = vmatprep.subr.bf16.mxu0 0
  %452 = vmatpush2.bf16.msra.mxu0 %v317
  %453 = vmatprep.mubr.bf16.mxu0 %v134
  %454 = vmatmul.mubr.bf16.gmra.mxu0 %v133
  %v455 = vpop.f32.mrf.mxu0
  %v456 = vadd.f32 %v407, %v455
  %v457 = vpop.f32.mrf.mxu0
  %v458 = vpop.f32.mrf.mxu0
  %v459 = vadd.f32 %v410, %v458
  %v460 = vpop.f32.mrf.mxu0
  %461 = vmatprep.mubr.bf16.mxu0 %v139
  %462 = vmatmul.mubr.bf16.gmra.mxu0 %v138
  %v463 = vpop.f32.mrf.mxu0
  %v464 = vadd.f32 %v415, %v463
  %v465 = vpop.f32.mrf.mxu0
  %v466 = vpop.f32.mrf.mxu0
  %v467 = vadd.f32 %v418, %v466
  %v468 = vpop.f32.mrf.mxu0
  %469 = vdwg.mxu0
  %470 = vmatprep.subr.bf16.mxu0 0
  %471 = vmatpush1.bf16.msra.mxu0 0
  %472 = vmatprep.subr.bf16.mxu0 0
  %473 = vmatpush1.bf16.msra.mxu0 0
  %474 = vmatprep.subr.bf16.mxu0 0
  %475 = vmatpush1.bf16.msra.mxu0 0
  %476 = vmatprep.subr.bf16.mxu0 0
  %477 = vmatpush1.bf16.msra.mxu0 0
  %478 = vmatprep.subr.bf16.mxu0 0
  %479 = vmatpush1.bf16.msra.mxu0 %v328
  %480 = vmatprep.subr.bf16.mxu0 0
  %481 = vmatpush1.bf16.msra.mxu0 %v327
  %482 = vmatprep.subr.bf16.mxu0 0
  %483 = vmatpush1.bf16.msra.mxu0 %v326
  %484 = vmatprep.subr.bf16.mxu0 0
  %485 = vmatpush1.bf16.msra.mxu0 %v325
  %486 = vmatprep.subr.bf16.mxu0 0
  %487 = vmatpush2.bf16.msra.mxu0 0
  %488 = vmatprep.subr.bf16.mxu0 0
  %489 = vmatpush2.bf16.msra.mxu0 0
  %490 = vmatprep.subr.bf16.mxu0 0
  %491 = vmatpush2.bf16.msra.mxu0 0
  %492 = vmatprep.subr.bf16.mxu0 0
  %493 = vmatpush2.bf16.msra.mxu0 0
  %494 = vmatprep.subr.bf16.mxu0 0
  %495 = vmatpush2.bf16.msra.mxu0 0
  %496 = vmatprep.subr.bf16.mxu0 0
  %497 = vmatpush2.bf16.msra.mxu0 0
  %498 = vmatprep.subr.bf16.mxu0 0
  %499 = vmatpush2.bf16.msra.mxu0 0
  %500 = vmatprep.subr.bf16.mxu0 0
  %501 = vmatpush2.bf16.msra.mxu0 0
  %502 = vmatprep.mubr.bf16.mxu0 0
  %503 = vmatmul.mubr.bf16.gmra.mxu0 %v367
  %v504 = vpop.f32.mrf.mxu0
  %v505 = vadd.f32 %v456, %v504
  %v506 = vpop.f32.mrf.mxu0
  %v507 = vpop.f32.mrf.mxu0
  %v508 = vadd.f32 %v459, %v507
  %v509 = vpop.f32.mrf.mxu0
  %510 = vmatprep.mubr.bf16.mxu0 0
  %511 = vmatmul.mubr.bf16.gmra.mxu0 %v370
  %v512 = vpop.f32.mrf.mxu0
  %v513 = vadd.f32 %v464, %v512
  %v514 = vpop.f32.mrf.mxu0
  %v515 = vpop.f32.mrf.mxu0
  %v516 = vadd.f32 %v467, %v515
  %v517 = vpop.f32.mrf.mxu0
  %518 = vdwg.mxu0
  %519 = vst [vmem:[%s2] sm:$0xff] %v505
  %520 = vst [vmem:[%s2 + $0x8] sm:$0xff] %v508
  %521 = vst [vmem:[%s2 + $0x10] sm:$0xff] %v513
  %522 = vst [vmem:[%s2 + $0x18] sm:$0xff] %v516
  %v523 = vadd.f32 %v505, %v508
  %v524 = vadd.f32 %v523, %v513
  %v525 = vadd.f32 %v524, %v516
  %v526 = vrot.slane %v525, 4
  %v527 = vadd.f32 %v525, %v526
  %v528 = vrot.slane %v527, 2
  %v529 = vadd.f32 %v527, %v528
  %v530 = vrot.slane %v529, 1
  %v531 = vadd.f32 %v529, %v530
  %532 = vst [vmem:[%s3] sm:$0x1] %v531
  %v533 = vmul.f32 %v505, %v505
  %v534 = vmul.f32 %v508, %v508
  %v535 = vmul.f32 %v513, %v513
  %v536 = vmul.f32 %v516, %v516
  %v537 = vadd.f32 %v533, %v534
  %v538 = vadd.f32 %v537, %v535
  %v539 = vadd.f32 %v538, %v536
  %v540 = vrot.slane %v539, 4
  %v541 = vadd.f32 %v539, %v540
  %v542 = vrot.slane %v541, 2
  %v543 = vadd.f32 %v541, %v542
  %v544 = vrot.slane %v543, 1
  %v545 = vadd.f32 %v543, %v544
  %546 = vst [vmem:[%s4] sm:$0x1] %v545
  // Predicated region
  $region10: #{resnet18_forward.15} parent=0 // pred_check
    _
  $region11: #{resnet18_forward.15} parent=0 // pred_check_branch
    %548 = sbr.rel (0) target = $region13
  $region12: #{resnet18_forward.15} parent=0 // pred_region
    _
  $region13: #{resnet18_forward.15} parent=0 // pred_fallthru
    _
  // Predicated region
  $region14: #{resnet18_forward.15} parent=0 // pred_check
    _
  $region15: #{resnet18_forward.15} parent=0 // pred_check_branch
    %550 = sbr.rel (0) target = $region17
  $region16: #{resnet18_forward.15} parent=0 // pred_region
    _
  $region17: #{resnet18_forward.15} parent=0 // pred_fallthru
    _
  // Predicated region
  $region18: #{resnet18_forward.15} parent=0 // pred_check
    _
  $region19: #{resnet18_forward.15} parent=0 // pred_check_branch
    %552 = sbr.rel (0) target = $region21
  $region20: #{resnet18_forward.15} parent=0 // pred_region
    _
  $region21: #{resnet18_forward.15} parent=0 // pred_fallthru
    _
  // Predicated region
  $region22: #{resnet18_forward.15} parent=0 // pred_check
    _
  $region23: #{resnet18_forward.15} parent=0 // pred_check_branch
    %554 = sbr.rel (0) target = $region25
  $region24: #{resnet18_forward.15} parent=0 // pred_region
    _
  $region25: #{resnet18_forward.15} parent=0 // pred_fallthru
    _
  // Predicated region
  $region26: #{resnet18_forward.15} parent=0 // pred_check
    _
  $region27: #{resnet18_forward.15} parent=0 // pred_check_branch
    %556 = sbr.rel (0) target = $region29
  $region28: #{resnet18_forward.15} parent=0 // pred_region
    _
  $region29: #{resnet18_forward.15} parent=0 // pred_fallthru
    _
  // Predicated region
  $region30: #{resnet18_forward.15} parent=0 // pred_check
    _
  $region31: #{resnet18_forward.15} parent=0 // pred_check_branch
    %558 = sbr.rel (0) target = $region33
  $region32: #{resnet18_forward.15} parent=0 // pred_region
    _
  $region33: #{resnet18_forward.15} parent=0 // pred_fallthru
    _

// kernel: resnet18_forward.17
$region0: #{resnet18_forward.17}
  #allocation0 [shape = 'u32[]', space=smem, size = 0x4, offset = 0x4, fixed_abs, tag = 'smem constant byte address 0x4 - core index']
  #allocation1 [shape = 'u32[144,128]{1,0:T(1,128)}', space=vmem, size = 0x12000, scoped, tag = 'internal scratch']
  %s0 = inlined_call_operand.vmem [shape: bf16[32,64], index: 0, kind: input, shape index: {}]
  %s1 = inlined_call_operand.vmem [shape: bf16[64,128], index: 1, kind: input, shape index: {}]
  %s2 = inlined_call_operand.vmem [shape: f32[32,128], index: 2, kind: output, shape index: {0}]
  %s3 = inlined_call_operand.vmem [shape: f32[1,1,128], index: 3, kind: output, shape index: {1}]
  %s4 = inlined_call_operand.vmem [shape: f32[1,1,128], index: 4, kind: output, shape index: {2}]
  %5 = xla_tuple %s2, %s3, %s4
  %s6 = sld [smem:[#allocation0]]
  $region34: #{resnet18_forward.17} parent=0
    _
  %s8 = ssub.s32 1, %s6
  %s9 = scalar_select 0, %s8, %s6
  // Predicated region
  $region2: #{resnet18_forward.17} parent=0 // pred_check
    _
  $region3: #{resnet18_forward.17} parent=0 // pred_check_branch
    %11 = sbr.rel (0) target = $region5
  $region4: #{resnet18_forward.17} parent=0 // pred_region
    _
  $region5: #{resnet18_forward.17} parent=0 // pred_fallthru
    _
  // Predicated region
  $region6: #{resnet18_forward.17} parent=0 // pred_check
    _
  $region7: #{resnet18_forward.17} parent=0 // pred_check_branch
    %13 = sbr.rel (0) target = $region9
  $region8: #{resnet18_forward.17} parent=0 // pred_region
    _
  $region9: #{resnet18_forward.17} parent=0 // pred_fallthru
    _
  %v15 = vld [vmem:[%s0] sm:$0xf]
  %v16 = vld [vmem:[%s0 + $0x4] sm:$0xf]
  %v17 = vld [vmem:[%s0 + $0x8] sm:$0xf]
  %v18 = vld [vmem:[%s0 + $0xc] sm:$0xf]
  %v19 = vld [vmem:[%s1] sm:$0xf]
  %v20 = vld [vmem:[%s1 + $0x4] sm:$0xf]
  %v21 = vld [vmem:[%s1 + $0x8] sm:$0xf]
  %v22 = vld [vmem:[%s1 + $0xc] sm:$0xf]
  %v23 = vld [vmem:[%s1 + $0x10] sm:$0xf]
  %v24 = vld [vmem:[%s1 + $0x14] sm:$0xf]
  %v25 = vld [vmem:[%s1 + $0x18] sm:$0xf]
  %v26 = vld [vmem:[%s1 + $0x1c] sm:$0xf]
  %v31 = vunpack.c.l.b16 %v15
  %v32 = vunpack.c.l.b16 %v16
  %v33 = vunpack.c.l.b16 %v17
  %v34 = vunpack.c.l.b16 %v18
  %v35 = vpack.c.b16 %v32, %v31
  %v36 = vpack.c.b16 %v34, %v33
  %v45 = vunpack.c.l.b16 %v19
  %v46 = vunpack.c.l.b16 %v20
  %v47 = vunpack.c.l.b16 %v21
  %v48 = vunpack.c.l.b16 %v22
  %v49 = vunpack.c.l.b16 %v23
  %v50 = vunpack.c.l.b16 %v24
  %v51 = vunpack.c.l.b16 %v25
  %v52 = vunpack.c.l.b16 %v26
  %v53 = vpack.c.b16 %v46, %v45
  %v54 = vpack.c.b16 %v48, %v47
  %v55 = vpack.c.b16 %v50, %v49
  %v56 = vpack.c.b16 %v52, %v51
  %vm61 = vcmask 523264
  %v63 = vsel %vm61, %v35, 0
  %v66 = vsel %vm61, %v36, 0
  %68 = vmatprep.subr.bf16.mxu0 0
  %69 = vmatpush1.bf16.msra.mxu0 0
  %70 = vmatprep.subr.bf16.mxu0 0
  %71 = vmatpush1.bf16.msra.mxu0 0
  %72 = vmatprep.subr.bf16.mxu0 0
  %73 = vmatpush1.bf16.msra.mxu0 0
  %74 = vmatprep.subr.bf16.mxu0 0
  %75 = vmatpush1.bf16.msra.mxu0 0
  %76 = vmatprep.subr.bf16.mxu0 0
  %77 = vmatpush1.bf16.msra.mxu0 %v56
  %78 = vmatprep.subr.bf16.mxu0 0
  %79 = vmatpush1.bf16.msra.mxu0 %v55
  %80 = vmatprep.subr.bf16.mxu0 0
  %81 = vmatpush1.bf16.msra.mxu0 %v54
  %82 = vmatprep.subr.bf16.mxu0 0
  %83 = vmatpush1.bf16.msra.mxu0 %v53
  %84 = vmatprep.subr.bf16.mxu0 0
  %85 = vmatpush2.bf16.msra.mxu0 0
  %86 = vmatprep.subr.bf16.mxu0 0
  %87 = vmatpush2.bf16.msra.mxu0 0
  %88 = vmatprep.subr.bf16.mxu0 0
  %89 = vmatpush2.bf16.msra.mxu0 0
  %90 = vmatprep.subr.bf16.mxu0 0
  %91 = vmatpush2.bf16.msra.mxu0 0
  %92 = vmatprep.subr.bf16.mxu0 0
  %93 = vmatpush2.bf16.msra.mxu0 0
  %94 = vmatprep.subr.bf16.mxu0 0
  %95 = vmatpush2.bf16.msra.mxu0 0
  %96 = vmatprep.subr.bf16.mxu0 0
  %97 = vmatpush2.bf16.msra.mxu0 0
  %98 = vmatprep.subr.bf16.mxu0 0
  %99 = vmatpush2.bf16.msra.mxu0 0
  %100 = vmatprep.mubr.bf16.mxu0 0
  %101 = vmatmul.mubr.bf16.gmra.mxu0 %v63
  %v102 = vpop.f32.mrf.mxu0
  %v103 = vadd.f32 0.0, %v102
  %v104 = vpop.f32.mrf.mxu0
  %v105 = vpop.f32.mrf.mxu0
  %v106 = vadd.f32 0.0, %v105
  %v107 = vpop.f32.mrf.mxu0
  %108 = vmatprep.mubr.bf16.mxu0 0
  %109 = vmatmul.mubr.bf16.gmra.mxu0 %v66
  %v110 = vpop.f32.mrf.mxu0
  %v111 = vadd.f32 0.0, %v110
  %v112 = vpop.f32.mrf.mxu0
  %v113 = vpop.f32.mrf.mxu0
  %v114 = vadd.f32 0.0, %v113
  %v115 = vpop.f32.mrf.mxu0
  %116 = vdwg.mxu0
  %117 = vst [vmem:[%s2] sm:$0xff] %v103
  %118 = vst [vmem:[%s2 + $0x8] sm:$0xff] %v106
  %119 = vst [vmem:[%s2 + $0x10] sm:$0xff] %v111
  %120 = vst [vmem:[%s2 + $0x18] sm:$0xff] %v114
  %v121 = vadd.f32 %v103, %v106
  %v122 = vadd.f32 %v121, %v111
  %v123 = vadd.f32 %v122, %v114
  %v124 = vrot.slane %v123, 4
  %v125 = vadd.f32 %v123, %v124
  %v126 = vrot.slane %v125, 2
  %v127 = vadd.f32 %v125, %v126
  %v128 = vrot.slane %v127, 1
  %v129 = vadd.f32 %v127, %v128
  %130 = vst [vmem:[%s3] sm:$0x1] %v129
  %v131 = vmul.f32 %v103, %v103
  %v132 = vmul.f32 %v106, %v106
  %v133 = vmul.f32 %v111, %v111
  %v134 = vmul.f32 %v114, %v114
  %v135 = vadd.f32 %v131, %v132
  %v136 = vadd.f32 %v135, %v133
  %v137 = vadd.f32 %v136, %v134
  %v138 = vrot.slane %v137, 4
  %v139 = vadd.f32 %v137, %v138
  %v140 = vrot.slane %v139, 2
  %v141 = vadd.f32 %v139, %v140
  %v142 = vrot.slane %v141, 1
  %v143 = vadd.f32 %v141, %v142
  %144 = vst [vmem:[%s4] sm:$0x1] %v143
  // Predicated region
  $region10: #{resnet18_forward.17} parent=0 // pred_check
    _
  $region11: #{resnet18_forward.17} parent=0 // pred_check_branch
    %146 = sbr.rel (0) target = $region13
  $region12: #{resnet18_forward.17} parent=0 // pred_region
    _
  $region13: #{resnet18_forward.17} parent=0 // pred_fallthru
    _
  // Predicated region
  $region14: #{resnet18_forward.17} parent=0 // pred_check
    _
  $region15: #{resnet18_forward.17} parent=0 // pred_check_branch
    %148 = sbr.rel (0) target = $region17
  $region16: #{resnet18_forward.17} parent=0 // pred_region
    _
  $region17: #{resnet18_forward.17} parent=0 // pred_fallthru
    _
  // Predicated region
  $region18: #{resnet18_forward.17} parent=0 // pred_check
    _
  $region19: #{resnet18_forward.17} parent=0 // pred_check_branch
    %150 = sbr.rel (0) target = $region21
  $region20: #{resnet18_forward.17} parent=0 // pred_region
    _
  $region21: #{resnet18_forward.17} parent=0 // pred_fallthru
    _
  // Predicated region
  $region22: #{resnet18_forward.17} parent=0 // pred_check
    _
  $region23: #{resnet18_forward.17} parent=0 // pred_check_branch
    %152 = sbr.rel (0) target = $region25
  $region24: #{resnet18_forward.17} parent=0 // pred_region
    _
  $region25: #{resnet18_forward.17} parent=0 // pred_fallthru
    _
  // Predicated region
  $region26: #{resnet18_forward.17} parent=0 // pred_check
    _
  $region27: #{resnet18_forward.17} parent=0 // pred_check_branch
    %154 = sbr.rel (0) target = $region29
  $region28: #{resnet18_forward.17} parent=0 // pred_region
    _
  $region29: #{resnet18_forward.17} parent=0 // pred_fallthru
    _
  // Predicated region
  $region30: #{resnet18_forward.17} parent=0 // pred_check
    _
  $region31: #{resnet18_forward.17} parent=0 // pred_check_branch
    %156 = sbr.rel (0) target = $region33
  $region32: #{resnet18_forward.17} parent=0 // pred_region
    _
  $region33: #{resnet18_forward.17} parent=0 // pred_fallthru
    _

// kernel: resnet18_forward.16
$region0: #{resnet18_forward.16}
  #allocation0 [shape = 'u32[]', space=smem, size = 0x4, offset = 0x4, fixed_abs, tag = 'smem constant byte address 0x4 - core index']
  #allocation1 [shape = 'u32[144,128]{1,0:T(1,128)}', space=vmem, size = 0x12000, scoped, tag = 'internal scratch']
  %s0 = inlined_call_operand.vmem [shape: bf16[32,1152], index: 0, kind: input, shape index: {}]
  %s1 = inlined_call_operand.vmem [shape: bf16[1152,128], index: 1, kind: input, shape index: {}]
  %s2 = inlined_call_operand.vmem [shape: f32[32,128], index: 2, kind: output, shape index: {0}]
  %s3 = inlined_call_operand.vmem [shape: f32[1,1,128], index: 3, kind: output, shape index: {1}]
  %s4 = inlined_call_operand.vmem [shape: f32[1,1,128], index: 4, kind: output, shape index: {2}]
  %5 = xla_tuple %s2, %s3, %s4
  %s6 = sld [smem:[#allocation0]]
  $region34: #{resnet18_forward.16} parent=0
    _
  %s8 = ssub.s32 1, %s6
  %s9 = scalar_select 0, %s8, %s6
  // Predicated region
  $region2: #{resnet18_forward.16} parent=0 // pred_check
    _
  $region3: #{resnet18_forward.16} parent=0 // pred_check_branch
    %11 = sbr.rel (0) target = $region5
  $region4: #{resnet18_forward.16} parent=0 // pred_region
    _
  $region5: #{resnet18_forward.16} parent=0 // pred_fallthru
    _
  // Predicated region
  $region6: #{resnet18_forward.16} parent=0 // pred_check
    _
  $region7: #{resnet18_forward.16} parent=0 // pred_check_branch
    %13 = sbr.rel (0) target = $region9
  $region8: #{resnet18_forward.16} parent=0 // pred_region
    _
  $region9: #{resnet18_forward.16} parent=0 // pred_fallthru
    _
  %v15 = vld [vmem:[%s0] sm:$0xff]
  %v16 = vld [vmem:[%s0 + $0x8] sm:$0xff]
  %v17 = vld [vmem:[%s0 + $0x10] sm:$0xff]
  %v18 = vld [vmem:[%s0 + $0x18] sm:$0xff]
  %v19 = vld [vmem:[%s0 + $0x20] sm:$0xf]
  %v20 = vld [vmem:[%s0 + $0x24] sm:$0xff]
  %v21 = vld [vmem:[%s0 + $0x2c] sm:$0xff]
  %v22 = vld [vmem:[%s0 + $0x34] sm:$0xff]
  %v23 = vld [vmem:[%s0 + $0x3c] sm:$0xff]
  %v24 = vld [vmem:[%s0 + $0x44] sm:$0xf]
  %v25 = vld [vmem:[%s0 + $0x48] sm:$0xff]
  %v26 = vld [vmem:[%s0 + $0x50] sm:$0xff]
  %v27 = vld [vmem:[%s0 + $0x58] sm:$0xff]
  %v28 = vld [vmem:[%s0 + $0x60] sm:$0xff]
  %v29 = vld [vmem:[%s0 + $0x68] sm:$0xf]
  %v30 = vld [vmem:[%s0 + $0x6c] sm:$0xff]
  %v31 = vld [vmem:[%s0 + $0x74] sm:$0xff]
  %v32 = vld [vmem:[%s0 + $0x7c] sm:$0xff]
  %v33 = vld [vmem:[%s0 + $0x84] sm:$0xff]
  %v34 = vld [vmem:[%s0 + $0x8c] sm:$0xf]
  %v35 = vld [vmem:[%s1] sm:$0xf]
  %v36 = vld [vmem:[%s1 + $0x4] sm:$0xf]
  %v37 = vld [vmem:[%s1 + $0x8] sm:$0xf]
  %v38 = vld [vmem:[%s1 + $0xc] sm:$0xf]
  %v39 = vld [vmem:[%s1 + $0x10] sm:$0xf]
  %v40 = vld [vmem:[%s1 + $0x14] sm:$0xf]
  %v41 = vld [vmem:[%s1 + $0x18] sm:$0xf]
  %v42 = vld [vmem:[%s1 + $0x1c] sm:$0xf]
  %v43 = vld [vmem:[%s1 + $0x20] sm:$0xf]
  %v44 = vld [vmem:[%s1 + $0x24] sm:$0xf]
  %v45 = vld [vmem:[%s1 + $0x28] sm:$0xf]
  %v46 = vld [vmem:[%s1 + $0x2c] sm:$0xf]
  %v47 = vld [vmem:[%s1 + $0x30] sm:$0xf]
  %v48 = vld [vmem:[%s1 + $0x34] sm:$0xf]
  %v49 = vld [vmem:[%s1 + $0x38] sm:$0xf]
  %v50 = vld [vmem:[%s1 + $0x3c] sm:$0xf]
  %v51 = vld [vmem:[%s1 + $0x40] sm:$0xf]
  %v52 = vld [vmem:[%s1 + $0x44] sm:$0xf]
  %v53 = vld [vmem:[%s1 + $0x48] sm:$0xf]
  %v54 = vld [vmem:[%s1 + $0x4c] sm:$0xf]
  %v55 = vld [vmem:[%s1 + $0x50] sm:$0xf]
  %v56 = vld [vmem:[%s1 + $0x54] sm:$0xf]
  %v57 = vld [vmem:[%s1 + $0x58] sm:$0xf]
  %v58 = vld [vmem:[%s1 + $0x5c] sm:$0xf]
  %v59 = vld [vmem:[%s1 + $0x60] sm:$0xf]
  %v60 = vld [vmem:[%s1 + $0x64] sm:$0xf]
  %v61 = vld [vmem:[%s1 + $0x68] sm:$0xf]
  %v62 = vld [vmem:[%s1 + $0x6c] sm:$0xf]
  %v63 = vld [vmem:[%s1 + $0x70] sm:$0xf]
  %v64 = vld [vmem:[%s1 + $0x74] sm:$0xf]
  %v65 = vld [vmem:[%s1 + $0x78] sm:$0xf]
  %v66 = vld [vmem:[%s1 + $0x7c] sm:$0xf]
  %v67 = vld [vmem:[%s1 + $0x80] sm:$0xf]
  %v68 = vld [vmem:[%s1 + $0x84] sm:$0xf]
  %v69 = vld [vmem:[%s1 + $0x88] sm:$0xf]
  %v70 = vld [vmem:[%s1 + $0x8c] sm:$0xf]
  %v71 = vld [vmem:[%s1 + $0x90] sm:$0xf]
  %v72 = vld [vmem:[%s1 + $0x94] sm:$0xf]
  %v73 = vld [vmem:[%s1 + $0x98] sm:$0xf]
  %v74 = vld [vmem:[%s1 + $0x9c] sm:$0xf]
  %v75 = vld [vmem:[%s1 + $0xa0] sm:$0xf]
  %v76 = vld [vmem:[%s1 + $0xa4] sm:$0xf]
  %v77 = vld [vmem:[%s1 + $0xa8] sm:$0xf]
  %v78 = vld [vmem:[%s1 + $0xac] sm:$0xf]
  %v79 = vld [vmem:[%s1 + $0xb0] sm:$0xf]
  %v80 = vld [vmem:[%s1 + $0xb4] sm:$0xf]
  %v81 = vld [vmem:[%s1 + $0xb8] sm:$0xf]
  %v82 = vld [vmem:[%s1 + $0xbc] sm:$0xf]
  %v83 = vld [vmem:[%s1 + $0xc0] sm:$0xf]
  %v84 = vld [vmem:[%s1 + $0xc4] sm:$0xf]
  %v85 = vld [vmem:[%s1 + $0xc8] sm:$0xf]
  %v86 = vld [vmem:[%s1 + $0xcc] sm:$0xf]
  %v87 = vld [vmem:[%s1 + $0xd0] sm:$0xf]
  %v88 = vld [vmem:[%s1 + $0xd4] sm:$0xf]
  %v89 = vld [vmem:[%s1 + $0xd8] sm:$0xf]
  %v90 = vld [vmem:[%s1 + $0xdc] sm:$0xf]
  %v91 = vld [vmem:[%s1 + $0xe0] sm:$0xf]
  %v92 = vld [vmem:[%s1 + $0xe4] sm:$0xf]
  %v93 = vld [vmem:[%s1 + $0xe8] sm:$0xf]
  %v94 = vld [vmem:[%s1 + $0xec] sm:$0xf]
  %v95 = vld [vmem:[%s1 + $0xf0] sm:$0xf]
  %v96 = vld [vmem:[%s1 + $0xf4] sm:$0xf]
  %v97 = vld [vmem:[%s1 + $0xf8] sm:$0xf]
  %v98 = vld [vmem:[%s1 + $0xfc] sm:$0xf]
  %v99 = vld [vmem:[%s1 + $0x100] sm:$0xf]
  %v100 = vld [vmem:[%s1 + $0x104] sm:$0xf]
  %v101 = vld [vmem:[%s1 + $0x108] sm:$0xf]
  %v102 = vld [vmem:[%s1 + $0x10c] sm:$0xf]
  %v103 = vld [vmem:[%s1 + $0x110] sm:$0xf]
  %v104 = vld [vmem:[%s1 + $0x114] sm:$0xf]
  %v105 = vld [vmem:[%s1 + $0x118] sm:$0xf]
  %v106 = vld [vmem:[%s1 + $0x11c] sm:$0xf]
  %v107 = vld [vmem:[%s1 + $0x120] sm:$0xf]
  %v108 = vld [vmem:[%s1 + $0x124] sm:$0xf]
  %v109 = vld [vmem:[%s1 + $0x128] sm:$0xf]
  %v110 = vld [vmem:[%s1 + $0x12c] sm:$0xf]
  %v111 = vld [vmem:[%s1 + $0x130] sm:$0xf]
  %v112 = vld [vmem:[%s1 + $0x134] sm:$0xf]
  %v113 = vld [vmem:[%s1 + $0x138] sm:$0xf]
  %v114 = vld [vmem:[%s1 + $0x13c] sm:$0xf]
  %v115 = vld [vmem:[%s1 + $0x140] sm:$0xf]
  %v116 = vld [vmem:[%s1 + $0x144] sm:$0xf]
  %v117 = vld [vmem:[%s1 + $0x148] sm:$0xf]
  %v118 = vld [vmem:[%s1 + $0x14c] sm:$0xf]
  %v119 = vld [vmem:[%s1 + $0x150] sm:$0xf]
  %v120 = vld [vmem:[%s1 + $0x154] sm:$0xf]
  %v121 = vld [vmem:[%s1 + $0x158] sm:$0xf]
  %v122 = vld [vmem:[%s1 + $0x15c] sm:$0xf]
  %v123 = vld [vmem:[%s1 + $0x160] sm:$0xf]
  %v124 = vld [vmem:[%s1 + $0x164] sm:$0xf]
  %v125 = vld [vmem:[%s1 + $0x168] sm:$0xf]
  %v126 = vld [vmem:[%s1 + $0x16c] sm:$0xf]
  %v127 = vld [vmem:[%s1 + $0x170] sm:$0xf]
  %v128 = vld [vmem:[%s1 + $0x174] sm:$0xf]
  %v129 = vld [vmem:[%s1 + $0x178] sm:$0xf]
  %v130 = vld [vmem:[%s1 + $0x17c] sm:$0xf]
  %v131 = vld [vmem:[%s1 + $0x180] sm:$0xf]
  %v132 = vld [vmem:[%s1 + $0x184] sm:$0xf]
  %v133 = vld [vmem:[%s1 + $0x188] sm:$0xf]
  %v134 = vld [vmem:[%s1 + $0x18c] sm:$0xf]
  %v135 = vld [vmem:[%s1 + $0x190] sm:$0xf]
  %v136 = vld [vmem:[%s1 + $0x194] sm:$0xf]
  %v137 = vld [vmem:[%s1 + $0x198] sm:$0xf]
  %v138 = vld [vmem:[%s1 + $0x19c] sm:$0xf]
  %v139 = vld [vmem:[%s1 + $0x1a0] sm:$0xf]
  %v140 = vld [vmem:[%s1 + $0x1a4] sm:$0xf]
  %v141 = vld [vmem:[%s1 + $0x1a8] sm:$0xf]
  %v142 = vld [vmem:[%s1 + $0x1ac] sm:$0xf]
  %v143 = vld [vmem:[%s1 + $0x1b0] sm:$0xf]
  %v144 = vld [vmem:[%s1 + $0x1b4] sm:$0xf]
  %v145 = vld [vmem:[%s1 + $0x1b8] sm:$0xf]
  %v146 = vld [vmem:[%s1 + $0x1bc] sm:$0xf]
  %v147 = vld [vmem:[%s1 + $0x1c0] sm:$0xf]
  %v148 = vld [vmem:[%s1 + $0x1c4] sm:$0xf]
  %v149 = vld [vmem:[%s1 + $0x1c8] sm:$0xf]
  %v150 = vld [vmem:[%s1 + $0x1cc] sm:$0xf]
  %v151 = vld [vmem:[%s1 + $0x1d0] sm:$0xf]
  %v152 = vld [vmem:[%s1 + $0x1d4] sm:$0xf]
  %v153 = vld [vmem:[%s1 + $0x1d8] sm:$0xf]
  %v154 = vld [vmem:[%s1 + $0x1dc] sm:$0xf]
  %v155 = vld [vmem:[%s1 + $0x1e0] sm:$0xf]
  %v156 = vld [vmem:[%s1 + $0x1e4] sm:$0xf]
  %v157 = vld [vmem:[%s1 + $0x1e8] sm:$0xf]
  %v158 = vld [vmem:[%s1 + $0x1ec] sm:$0xf]
  %v159 = vld [vmem:[%s1 + $0x1f0] sm:$0xf]
  %v160 = vld [vmem:[%s1 + $0x1f4] sm:$0xf]
  %v161 = vld [vmem:[%s1 + $0x1f8] sm:$0xf]
  %v162 = vld [vmem:[%s1 + $0x1fc] sm:$0xf]
  %v163 = vld [vmem:[%s1 + $0x200] sm:$0xf]
  %v164 = vld [vmem:[%s1 + $0x204] sm:$0xf]
  %v165 = vld [vmem:[%s1 + $0x208] sm:$0xf]
  %v166 = vld [vmem:[%s1 + $0x20c] sm:$0xf]
  %v167 = vld [vmem:[%s1 + $0x210] sm:$0xf]
  %v168 = vld [vmem:[%s1 + $0x214] sm:$0xf]
  %v169 = vld [vmem:[%s1 + $0x218] sm:$0xf]
  %v170 = vld [vmem:[%s1 + $0x21c] sm:$0xf]
  %v171 = vld [vmem:[%s1 + $0x220] sm:$0xf]
  %v172 = vld [vmem:[%s1 + $0x224] sm:$0xf]
  %v173 = vld [vmem:[%s1 + $0x228] sm:$0xf]
  %v174 = vld [vmem:[%s1 + $0x22c] sm:$0xf]
  %v175 = vld [vmem:[%s1 + $0x230] sm:$0xf]
  %v176 = vld [vmem:[%s1 + $0x234] sm:$0xf]
  %v177 = vld [vmem:[%s1 + $0x238] sm:$0xf]
  %v178 = vld [vmem:[%s1 + $0x23c] sm:$0xf]
  %v199 = vunpack.c.l.b16 %v15
  %v200 = vunpack.c.h.b16 %v15
  %v201 = vunpack.c.l.b16 %v16
  %v202 = vunpack.c.h.b16 %v16
  %v203 = vunpack.c.l.b16 %v17
  %v204 = vunpack.c.h.b16 %v17
  %v205 = vunpack.c.l.b16 %v18
  %v206 = vunpack.c.h.b16 %v18
  %v207 = vunpack.c.l.b16 %v19
  %v208 = vunpack.c.l.b16 %v20
  %v209 = vunpack.c.h.b16 %v20
  %v210 = vunpack.c.l.b16 %v21
  %v211 = vunpack.c.h.b16 %v21
  %v212 = vunpack.c.l.b16 %v22
  %v213 = vunpack.c.h.b16 %v22
  %v214 = vunpack.c.l.b16 %v23
  %v215 = vunpack.c.h.b16 %v23
  %v216 = vunpack.c.l.b16 %v24
  %v217 = vunpack.c.l.b16 %v25
  %v218 = vunpack.c.h.b16 %v25
  %v219 = vunpack.c.l.b16 %v26
  %v220 = vunpack.c.h.b16 %v26
  %v221 = vunpack.c.l.b16 %v27
  %v222 = vunpack.c.h.b16 %v27
  %v223 = vunpack.c.l.b16 %v28
  %v224 = vunpack.c.h.b16 %v28
  %v225 = vunpack.c.l.b16 %v29
  %v226 = vunpack.c.l.b16 %v30
  %v227 = vunpack.c.h.b16 %v30
  %v228 = vunpack.c.l.b16 %v31
  %v229 = vunpack.c.h.b16 %v31
  %v230 = vunpack.c.l.b16 %v32
  %v231 = vunpack.c.h.b16 %v32
  %v232 = vunpack.c.l.b16 %v33
  %v233 = vunpack.c.h.b16 %v33
  %v234 = vunpack.c.l.b16 %v34
  %v235 = vpack.c.b16 %v208, %v199
  %v236 = vpack.c.b16 %v209, %v200
  %v237 = vpack.c.b16 %v210, %v201
  %v238 = vpack.c.b16 %v211, %v202
  %v239 = vpack.c.b16 %v212, %v203
  %v240 = vpack.c.b16 %v213, %v204
  %v241 = vpack.c.b16 %v214, %v205
  %v242 = vpack.c.b16 %v215, %v206
  %v243 = vpack.c.b16 %v216, %v207
  %v244 = vpack.c.b16 %v226, %v217
  %v245 = vpack.c.b16 %v227, %v218
  %v246 = vpack.c.b16 %v228, %v219
  %v247 = vpack.c.b16 %v229, %v220
  %v248 = vpack.c.b16 %v230, %v221
  %v249 = vpack.c.b16 %v231, %v222
  %v250 = vpack.c.b16 %v232, %v223
  %v251 = vpack.c.b16 %v233, %v224
  %v252 = vpack.c.b16 %v234, %v225
  %v415 = vunpack.c.l.b16 %v35
  %v416 = vunpack.c.l.b16 %v36
  %v417 = vunpack.c.l.b16 %v37
  %v418 = vunpack.c.l.b16 %v38
  %v419 = vunpack.c.l.b16 %v39
  %v420 = vunpack.c.l.b16 %v40
  %v421 = vunpack.c.l.b16 %v41
  %v422 = vunpack.c.l.b16 %v42
  %v423 = vunpack.c.l.b16 %v43
  %v424 = vunpack.c.l.b16 %v44
  %v425 = vunpack.c.l.b16 %v45
  %v426 = vunpack.c.l.b16 %v46
  %v427 = vunpack.c.l.b16 %v47
  %v428 = vunpack.c.l.b16 %v48
  %v429 = vunpack.c.l.b16 %v49
  %v430 = vunpack.c.l.b16 %v50
  %v431 = vunpack.c.l.b16 %v51
  %v432 = vunpack.c.l.b16 %v52
  %v433 = vunpack.c.l.b16 %v53
  %v434 = vunpack.c.l.b16 %v54
  %v435 = vunpack.c.l.b16 %v55
  %v436 = vunpack.c.l.b16 %v56
  %v437 = vunpack.c.l.b16 %v57
  %v438 = vunpack.c.l.b16 %v58
  %v439 = vunpack.c.l.b16 %v59
  %v440 = vunpack.c.l.b16 %v60
  %v441 = vunpack.c.l.b16 %v61
  %v442 = vunpack.c.l.b16 %v62
  %v443 = vunpack.c.l.b16 %v63
  %v444 = vunpack.c.l.b16 %v64
  %v445 = vunpack.c.l.b16 %v65
  %v446 = vunpack.c.l.b16 %v66
  %v447 = vunpack.c.l.b16 %v67
  %v448 = vunpack.c.l.b16 %v68
  %v449 = vunpack.c.l.b16 %v69
  %v450 = vunpack.c.l.b16 %v70
  %v451 = vunpack.c.l.b16 %v71
  %v452 = vunpack.c.l.b16 %v72
  %v453 = vunpack.c.l.b16 %v73
  %v454 = vunpack.c.l.b16 %v74
  %v455 = vunpack.c.l.b16 %v75
  %v456 = vunpack.c.l.b16 %v76
  %v457 = vunpack.c.l.b16 %v77
  %v458 = vunpack.c.l.b16 %v78
  %v459 = vunpack.c.l.b16 %v79
  %v460 = vunpack.c.l.b16 %v80
  %v461 = vunpack.c.l.b16 %v81
  %v462 = vunpack.c.l.b16 %v82
  %v463 = vunpack.c.l.b16 %v83
  %v464 = vunpack.c.l.b16 %v84
  %v465 = vunpack.c.l.b16 %v85
  %v466 = vunpack.c.l.b16 %v86
  %v467 = vunpack.c.l.b16 %v87
  %v468 = vunpack.c.l.b16 %v88
  %v469 = vunpack.c.l.b16 %v89
  %v470 = vunpack.c.l.b16 %v90
  %v471 = vunpack.c.l.b16 %v91
  %v472 = vunpack.c.l.b16 %v92
  %v473 = vunpack.c.l.b16 %v93
  %v474 = vunpack.c.l.b16 %v94
  %v475 = vunpack.c.l.b16 %v95
  %v476 = vunpack.c.l.b16 %v96
  %v477 = vunpack.c.l.b16 %v97
  %v478 = vunpack.c.l.b16 %v98
  %v479 = vunpack.c.l.b16 %v99
  %v480 = vunpack.c.l.b16 %v100
  %v481 = vunpack.c.l.b16 %v101
  %v482 = vunpack.c.l.b16 %v102
  %v483 = vunpack.c.l.b16 %v103
  %v484 = vunpack.c.l.b16 %v104
  %v485 = vunpack.c.l.b16 %v105
  %v486 = vunpack.c.l.b16 %v106
  %v487 = vunpack.c.l.b16 %v107
  %v488 = vunpack.c.l.b16 %v108
  %v489 = vunpack.c.l.b16 %v109
  %v490 = vunpack.c.l.b16 %v110
  %v491 = vunpack.c.l.b16 %v111
  %v492 = vunpack.c.l.b16 %v112
  %v493 = vunpack.c.l.b16 %v113
  %v494 = vunpack.c.l.b16 %v114
  %v495 = vunpack.c.l.b16 %v115
  %v496 = vunpack.c.l.b16 %v116
  %v497 = vunpack.c.l.b16 %v117
  %v498 = vunpack.c.l.b16 %v118
  %v499 = vunpack.c.l.b16 %v119
  %v500 = vunpack.c.l.b16 %v120
  %v501 = vunpack.c.l.b16 %v121
  %v502 = vunpack.c.l.b16 %v122
  %v503 = vunpack.c.l.b16 %v123
  %v504 = vunpack.c.l.b16 %v124
  %v505 = vunpack.c.l.b16 %v125
  %v506 = vunpack.c.l.b16 %v126
  %v507 = vunpack.c.l.b16 %v127
  %v508 = vunpack.c.l.b16 %v128
  %v509 = vunpack.c.l.b16 %v129
  %v510 = vunpack.c.l.b16 %v130
  %v511 = vunpack.c.l.b16 %v131
  %v512 = vunpack.c.l.b16 %v132
  %v513 = vunpack.c.l.b16 %v133
  %v514 = vunpack.c.l.b16 %v134
  %v515 = vunpack.c.l.b16 %v135
  %v516 = vunpack.c.l.b16 %v136
  %v517 = vunpack.c.l.b16 %v137
  %v518 = vunpack.c.l.b16 %v138
  %v519 = vunpack.c.l.b16 %v139
  %v520 = vunpack.c.l.b16 %v140
  %v521 = vunpack.c.l.b16 %v141
  %v522 = vunpack.c.l.b16 %v142
  %v523 = vunpack.c.l.b16 %v143
  %v524 = vunpack.c.l.b16 %v144
  %v525 = vunpack.c.l.b16 %v145
  %v526 = vunpack.c.l.b16 %v146
  %v527 = vunpack.c.l.b16 %v147
  %v528 = vunpack.c.l.b16 %v148
  %v529 = vunpack.c.l.b16 %v149
  %v530 = vunpack.c.l.b16 %v150
  %v531 = vunpack.c.l.b16 %v151
  %v532 = vunpack.c.l.b16 %v152
  %v533 = vunpack.c.l.b16 %v153
  %v534 = vunpack.c.l.b16 %v154
  %v535 = vunpack.c.l.b16 %v155
  %v536 = vunpack.c.l.b16 %v156
  %v537 = vunpack.c.l.b16 %v157
  %v538 = vunpack.c.l.b16 %v158
  %v539 = vunpack.c.l.b16 %v159
  %v540 = vunpack.c.l.b16 %v160
  %v541 = vunpack.c.l.b16 %v161
  %v542 = vunpack.c.l.b16 %v162
  %v543 = vunpack.c.l.b16 %v163
  %v544 = vunpack.c.l.b16 %v164
  %v545 = vunpack.c.l.b16 %v165
  %v546 = vunpack.c.l.b16 %v166
  %v547 = vunpack.c.l.b16 %v167
  %v548 = vunpack.c.l.b16 %v168
  %v549 = vunpack.c.l.b16 %v169
  %v550 = vunpack.c.l.b16 %v170
  %v551 = vunpack.c.l.b16 %v171
  %v552 = vunpack.c.l.b16 %v172
  %v553 = vunpack.c.l.b16 %v173
  %v554 = vunpack.c.l.b16 %v174
  %v555 = vunpack.c.l.b16 %v175
  %v556 = vunpack.c.l.b16 %v176
  %v557 = vunpack.c.l.b16 %v177
  %v558 = vunpack.c.l.b16 %v178
  %v559 = vpack.c.b16 %v416, %v415
  %v560 = vpack.c.b16 %v418, %v417
  %v561 = vpack.c.b16 %v420, %v419
  %v562 = vpack.c.b16 %v422, %v421
  %v563 = vpack.c.b16 %v424, %v423
  %v564 = vpack.c.b16 %v426, %v425
  %v565 = vpack.c.b16 %v428, %v427
  %v566 = vpack.c.b16 %v430, %v429
  %v567 = vpack.c.b16 %v432, %v431
  %v568 = vpack.c.b16 %v434, %v433
  %v569 = vpack.c.b16 %v436, %v435
  %v570 = vpack.c.b16 %v438, %v437
  %v571 = vpack.c.b16 %v440, %v439
  %v572 = vpack.c.b16 %v442, %v441
  %v573 = vpack.c.b16 %v444, %v443
  %v574 = vpack.c.b16 %v446, %v445
  %v575 = vpack.c.b16 %v448, %v447
  %v576 = vpack.c.b16 %v450, %v449
  %v577 = vpack.c.b16 %v452, %v451
  %v578 = vpack.c.b16 %v454, %v453
  %v579 = vpack.c.b16 %v456, %v455
  %v580 = vpack.c.b16 %v458, %v457
  %v581 = vpack.c.b16 %v460, %v459
  %v582 = vpack.c.b16 %v462, %v461
  %v583 = vpack.c.b16 %v464, %v463
  %v584 = vpack.c.b16 %v466, %v465
  %v585 = vpack.c.b16 %v468, %v467
  %v586 = vpack.c.b16 %v470, %v469
  %v587 = vpack.c.b16 %v472, %v471
  %v588 = vpack.c.b16 %v474, %v473
  %v589 = vpack.c.b16 %v476, %v475
  %v590 = vpack.c.b16 %v478, %v477
  %v591 = vpack.c.b16 %v480, %v479
  %v592 = vpack.c.b16 %v482, %v481
  %v593 = vpack.c.b16 %v484, %v483
  %v594 = vpack.c.b16 %v486, %v485
  %v595 = vpack.c.b16 %v488, %v487
  %v596 = vpack.c.b16 %v490, %v489
  %v597 = vpack.c.b16 %v492, %v491
  %v598 = vpack.c.b16 %v494, %v493
  %v599 = vpack.c.b16 %v496, %v495
  %v600 = vpack.c.b16 %v498, %v497
  %v601 = vpack.c.b16 %v500, %v499
  %v602 = vpack.c.b16 %v502, %v501
  %v603 = vpack.c.b16 %v504, %v503
  %v604 = vpack.c.b16 %v506, %v505
  %v605 = vpack.c.b16 %v508, %v507
  %v606 = vpack.c.b16 %v510, %v509
  %v607 = vpack.c.b16 %v512, %v511
  %v608 = vpack.c.b16 %v514, %v513
  %v609 = vpack.c.b16 %v516, %v515
  %v610 = vpack.c.b16 %v518, %v517
  %v611 = vpack.c.b16 %v520, %v519
  %v612 = vpack.c.b16 %v522, %v521
  %v613 = vpack.c.b16 %v524, %v523
  %v614 = vpack.c.b16 %v526, %v525
  %v615 = vpack.c.b16 %v528, %v527
  %v616 = vpack.c.b16 %v530, %v529
  %v617 = vpack.c.b16 %v532, %v531
  %v618 = vpack.c.b16 %v534, %v533
  %v619 = vpack.c.b16 %v536, %v535
  %v620 = vpack.c.b16 %v538, %v537
  %v621 = vpack.c.b16 %v540, %v539
  %v622 = vpack.c.b16 %v542, %v541
  %v623 = vpack.c.b16 %v544, %v543
  %v624 = vpack.c.b16 %v546, %v545
  %v625 = vpack.c.b16 %v548, %v547
  %v626 = vpack.c.b16 %v550, %v549
  %v627 = vpack.c.b16 %v552, %v551
  %v628 = vpack.c.b16 %v554, %v553
  %v629 = vpack.c.b16 %v556, %v555
  %v630 = vpack.c.b16 %v558, %v557
  %703 = vmatprep.subr.bf16.mxu0 0
  %704 = vmatpush1.bf16.msra.mxu0 %v566
  %705 = vmatprep.subr.bf16.mxu0 0
  %706 = vmatpush1.bf16.msra.mxu0 %v565
  %707 = vmatprep.subr.bf16.mxu0 0
  %708 = vmatpush1.bf16.msra.mxu0 %v564
  %709 = vmatprep.subr.bf16.mxu0 0
  %710 = vmatpush1.bf16.msra.mxu0 %v563
  %711 = vmatprep.subr.bf16.mxu0 0
  %712 = vmatpush1.bf16.msra.mxu0 %v562
  %713 = vmatprep.subr.bf16.mxu0 0
  %714 = vmatpush1.bf16.msra.mxu0 %v561
  %715 = vmatprep.subr.bf16.mxu0 0
  %716 = vmatpush1.bf16.msra.mxu0 %v560
  %717 = vmatprep.subr.bf16.mxu0 0
  %718 = vmatpush1.bf16.msra.mxu0 %v559
  %719 = vmatprep.subr.bf16.mxu0 0
  %720 = vmatpush2.bf16.msra.mxu0 %v574
  %721 = vmatprep.subr.bf16.mxu0 0
  %722 = vmatpush2.bf16.msra.mxu0 %v573
  %723 = vmatprep.subr.bf16.mxu0 0
  %724 = vmatpush2.bf16.msra.mxu0 %v572
  %725 = vmatprep.subr.bf16.mxu0 0
  %726 = vmatpush2.bf16.msra.mxu0 %v571
  %727 = vmatprep.subr.bf16.mxu0 0
  %728 = vmatpush2.bf16.msra.mxu0 %v570
  %729 = vmatprep.subr.bf16.mxu0 0
  %730 = vmatpush2.bf16.msra.mxu0 %v569
  %731 = vmatprep.subr.bf16.mxu0 0
  %732 = vmatpush2.bf16.msra.mxu0 %v568
  %733 = vmatprep.subr.bf16.mxu0 0
  %734 = vmatpush2.bf16.msra.mxu0 %v567
  %735 = vmatprep.mubr.bf16.mxu0 %v236
  %736 = vmatmul.mubr.bf16.gmra.mxu0 %v235
  %v737 = vpop.f32.mrf.mxu0
  %v738 = vadd.f32 0.0, %v737
  %v739 = vpop.f32.mrf.mxu0
  %v740 = vpop.f32.mrf.mxu0
  %v741 = vadd.f32 0.0, %v740
  %v742 = vpop.f32.mrf.mxu0
  %743 = vmatprep.mubr.bf16.mxu0 %v245
  %744 = vmatmul.mubr.bf16.gmra.mxu0 %v244
  %v745 = vpop.f32.mrf.mxu0
  %v746 = vadd.f32 0.0, %v745
  %v747 = vpop.f32.mrf.mxu0
  %v748 = vpop.f32.mrf.mxu0
  %v749 = vadd.f32 0.0, %v748
  %v750 = vpop.f32.mrf.mxu0
  %751 = vdwg.mxu0
  %752 = vmatprep.subr.bf16.mxu0 0
  %753 = vmatpush1.bf16.msra.mxu0 %v582
  %754 = vmatprep.subr.bf16.mxu0 0
  %755 = vmatpush1.bf16.msra.mxu0 %v581
  %756 = vmatprep.subr.bf16.mxu0 0
  %757 = vmatpush1.bf16.msra.mxu0 %v580
  %758 = vmatprep.subr.bf16.mxu0 0
  %759 = vmatpush1.bf16.msra.mxu0 %v579
  %760 = vmatprep.subr.bf16.mxu0 0
  %761 = vmatpush1.bf16.msra.mxu0 %v578
  %762 = vmatprep.subr.bf16.mxu0 0
  %763 = vmatpush1.bf16.msra.mxu0 %v577
  %764 = vmatprep.subr.bf16.mxu0 0
  %765 = vmatpush1.bf16.msra.mxu0 %v576
  %766 = vmatprep.subr.bf16.mxu0 0
  %767 = vmatpush1.bf16.msra.mxu0 %v575
  %768 = vmatprep.subr.bf16.mxu0 0
  %769 = vmatpush2.bf16.msra.mxu0 %v590
  %770 = vmatprep.subr.bf16.mxu0 0
  %771 = vmatpush2.bf16.msra.mxu0 %v589
  %772 = vmatprep.subr.bf16.mxu0 0
  %773 = vmatpush2.bf16.msra.mxu0 %v588
  %774 = vmatprep.subr.bf16.mxu0 0
  %775 = vmatpush2.bf16.msra.mxu0 %v587
  %776 = vmatprep.subr.bf16.mxu0 0
  %777 = vmatpush2.bf16.msra.mxu0 %v586
  %778 = vmatprep.subr.bf16.mxu0 0
  %779 = vmatpush2.bf16.msra.mxu0 %v585
  %780 = vmatprep.subr.bf16.mxu0 0
  %781 = vmatpush2.bf16.msra.mxu0 %v584
  %782 = vmatprep.subr.bf16.mxu0 0
  %783 = vmatpush2.bf16.msra.mxu0 %v583
  %784 = vmatprep.mubr.bf16.mxu0 %v238
  %785 = vmatmul.mubr.bf16.gmra.mxu0 %v237
  %v786 = vpop.f32.mrf.mxu0
  %v787 = vadd.f32 %v738, %v786
  %v788 = vpop.f32.mrf.mxu0
  %v789 = vpop.f32.mrf.mxu0
  %v790 = vadd.f32 %v741, %v789
  %v791 = vpop.f32.mrf.mxu0
  %792 = vmatprep.mubr.bf16.mxu0 %v247
  %793 = vmatmul.mubr.bf16.gmra.mxu0 %v246
  %v794 = vpop.f32.mrf.mxu0
  %v795 = vadd.f32 %v746, %v794
  %v796 = vpop.f32.mrf.mxu0
  %v797 = vpop.f32.mrf.mxu0
  %v798 = vadd.f32 %v749, %v797
  %v799 = vpop.f32.mrf.mxu0
  %800 = vdwg.mxu0
  %801 = vmatprep.subr.bf16.mxu0 0
  %802 = vmatpush1.bf16.msra.mxu0 %v598
  %803 = vmatprep.subr.bf16.mxu0 0
  %804 = vmatpush1.bf16.msra.mxu0 %v597
  %805 = vmatprep.subr.bf16.mxu0 0
  %806 = vmatpush1.bf16.msra.mxu0 %v596
  %807 = vmatprep.subr.bf16.mxu0 0
  %808 = vmatpush1.bf16.msra.mxu0 %v595
  %809 = vmatprep.subr.bf16.mxu0 0
  %810 = vmatpush1.bf16.msra.mxu0 %v594
  %811 = vmatprep.subr.bf16.mxu0 0
  %812 = vmatpush1.bf16.msra.mxu0 %v593
  %813 = vmatprep.subr.bf16.mxu0 0
  %814 = vmatpush1.bf16.msra.mxu0 %v592
  %815 = vmatprep.subr.bf16.mxu0 0
  %816 = vmatpush1.bf16.msra.mxu0 %v591
  %817 = vmatprep.subr.bf16.mxu0 0
  %818 = vmatpush2.bf16.msra.mxu0 %v606
  %819 = vmatprep.subr.bf16.mxu0 0
  %820 = vmatpush2.bf16.msra.mxu0 %v605
  %821 = vmatprep.subr.bf16.mxu0 0
  %822 = vmatpush2.bf16.msra.mxu0 %v604
  %823 = vmatprep.subr.bf16.mxu0 0
  %824 = vmatpush2.bf16.msra.mxu0 %v603
  %825 = vmatprep.subr.bf16.mxu0 0
  %826 = vmatpush2.bf16.msra.mxu0 %v602
  %827 = vmatprep.subr.bf16.mxu0 0
  %828 = vmatpush2.bf16.msra.mxu0 %v601
  %829 = vmatprep.subr.bf16.mxu0 0
  %830 = vmatpush2.bf16.msra.mxu0 %v600
  %831 = vmatprep.subr.bf16.mxu0 0
  %832 = vmatpush2.bf16.msra.mxu0 %v599
  %833 = vmatprep.mubr.bf16.mxu0 %v240
  %834 = vmatmul.mubr.bf16.gmra.mxu0 %v239
  %v835 = vpop.f32.mrf.mxu0
  %v836 = vadd.f32 %v787, %v835
  %v837 = vpop.f32.mrf.mxu0
  %v838 = vpop.f32.mrf.mxu0
  %v839 = vadd.f32 %v790, %v838
  %v840 = vpop.f32.mrf.mxu0
  %841 = vmatprep.mubr.bf16.mxu0 %v249
  %842 = vmatmul.mubr.bf16.gmra.mxu0 %v248
  %v843 = vpop.f32.mrf.mxu0
  %v844 = vadd.f32 %v795, %v843
  %v845 = vpop.f32.mrf.mxu0
  %v846 = vpop.f32.mrf.mxu0
  %v847 = vadd.f32 %v798, %v846
  %v848 = vpop.f32.mrf.mxu0
  %849 = vdwg.mxu0
  %850 = vmatprep.subr.bf16.mxu0 0
  %851 = vmatpush1.bf16.msra.mxu0 %v614
  %852 = vmatprep.subr.bf16.mxu0 0
  %853 = vmatpush1.bf16.msra.mxu0 %v613
  %854 = vmatprep.subr.bf16.mxu0 0
  %855 = vmatpush1.bf16.msra.mxu0 %v612
  %856 = vmatprep.subr.bf16.mxu0 0
  %857 = vmatpush1.bf16.msra.mxu0 %v611
  %858 = vmatprep.subr.bf16.mxu0 0
  %859 = vmatpush1.bf16.msra.mxu0 %v610
  %860 = vmatprep.subr.bf16.mxu0 0
  %861 = vmatpush1.bf16.msra.mxu0 %v609
  %862 = vmatprep.subr.bf16.mxu0 0
  %863 = vmatpush1.bf16.msra.mxu0 %v608
  %864 = vmatprep.subr.bf16.mxu0 0
  %865 = vmatpush1.bf16.msra.mxu0 %v607
  %866 = vmatprep.subr.bf16.mxu0 0
  %867 = vmatpush2.bf16.msra.mxu0 %v622
  %868 = vmatprep.subr.bf16.mxu0 0
  %869 = vmatpush2.bf16.msra.mxu0 %v621
  %870 = vmatprep.subr.bf16.mxu0 0
  %871 = vmatpush2.bf16.msra.mxu0 %v620
  %872 = vmatprep.subr.bf16.mxu0 0
  %873 = vmatpush2.bf16.msra.mxu0 %v619
  %874 = vmatprep.subr.bf16.mxu0 0
  %875 = vmatpush2.bf16.msra.mxu0 %v618
  %876 = vmatprep.subr.bf16.mxu0 0
  %877 = vmatpush2.bf16.msra.mxu0 %v617
  %878 = vmatprep.subr.bf16.mxu0 0
  %879 = vmatpush2.bf16.msra.mxu0 %v616
  %880 = vmatprep.subr.bf16.mxu0 0
  %881 = vmatpush2.bf16.msra.mxu0 %v615
  %882 = vmatprep.mubr.bf16.mxu0 %v242
  %883 = vmatmul.mubr.bf16.gmra.mxu0 %v241
  %v884 = vpop.f32.mrf.mxu0
  %v885 = vadd.f32 %v836, %v884
  %v886 = vpop.f32.mrf.mxu0
  %v887 = vpop.f32.mrf.mxu0
  %v888 = vadd.f32 %v839, %v887
  %v889 = vpop.f32.mrf.mxu0
  %890 = vmatprep.mubr.bf16.mxu0 %v251
  %891 = vmatmul.mubr.bf16.gmra.mxu0 %v250
  %v892 = vpop.f32.mrf.mxu0
  %v893 = vadd.f32 %v844, %v892
  %v894 = vpop.f32.mrf.mxu0
  %v895 = vpop.f32.mrf.mxu0
  %v896 = vadd.f32 %v847, %v895
  %v897 = vpop.f32.mrf.mxu0
  %898 = vdwg.mxu0
  %899 = vmatprep.subr.bf16.mxu0 0
  %900 = vmatpush1.bf16.msra.mxu0 %v630
  %901 = vmatprep.subr.bf16.mxu0 0
  %902 = vmatpush1.bf16.msra.mxu0 %v629
  %903 = vmatprep.subr.bf16.mxu0 0
  %904 = vmatpush1.bf16.msra.mxu0 %v628
  %905 = vmatprep.subr.bf16.mxu0 0
  %906 = vmatpush1.bf16.msra.mxu0 %v627
  %907 = vmatprep.subr.bf16.mxu0 0
  %908 = vmatpush1.bf16.msra.mxu0 %v626
  %909 = vmatprep.subr.bf16.mxu0 0
  %910 = vmatpush1.bf16.msra.mxu0 %v625
  %911 = vmatprep.subr.bf16.mxu0 0
  %912 = vmatpush1.bf16.msra.mxu0 %v624
  %913 = vmatprep.subr.bf16.mxu0 0
  %914 = vmatpush1.bf16.msra.mxu0 %v623
  %915 = vmatprep.subr.bf16.mxu0 0
  %916 = vmatpush2.bf16.msra.mxu0 0
  %917 = vmatprep.subr.bf16.mxu0 0
  %918 = vmatpush2.bf16.msra.mxu0 0
  %919 = vmatprep.subr.bf16.mxu0 0
  %920 = vmatpush2.bf16.msra.mxu0 0
  %921 = vmatprep.subr.bf16.mxu0 0
  %922 = vmatpush2.bf16.msra.mxu0 0
  %923 = vmatprep.subr.bf16.mxu0 0
  %924 = vmatpush2.bf16.msra.mxu0 0
  %925 = vmatprep.subr.bf16.mxu0 0
  %926 = vmatpush2.bf16.msra.mxu0 0
  %927 = vmatprep.subr.bf16.mxu0 0
  %928 = vmatpush2.bf16.msra.mxu0 0
  %929 = vmatprep.subr.bf16.mxu0 0
  %930 = vmatpush2.bf16.msra.mxu0 0
  %931 = vmatprep.mubr.bf16.mxu0 0
  %932 = vmatmul.mubr.bf16.gmra.mxu0 %v243
  %v933 = vpop.f32.mrf.mxu0
  %v934 = vadd.f32 %v885, %v933
  %v935 = vpop.f32.mrf.mxu0
  %v936 = vpop.f32.mrf.mxu0
  %v937 = vadd.f32 %v888, %v936
  %v938 = vpop.f32.mrf.mxu0
  %939 = vmatprep.mubr.bf16.mxu0 0
  %940 = vmatmul.mubr.bf16.gmra.mxu0 %v252
  %v941 = vpop.f32.mrf.mxu0
  %v942 = vadd.f32 %v893, %v941
  %v943 = vpop.f32.mrf.mxu0
  %v944 = vpop.f32.mrf.mxu0
  %v945 = vadd.f32 %v896, %v944
  %v946 = vpop.f32.mrf.mxu0
  %947 = vdwg.mxu0
  %948 = vst [vmem:[%s2] sm:$0xff] %v934
  %949 = vst [vmem:[%s2 + $0x8] sm:$0xff] %v937
  %950 = vst [vmem:[%s2 + $0x10] sm:$0xff] %v942
  %951 = vst [vmem:[%s2 + $0x18] sm:$0xff] %v945
  %v952 = vadd.f32 %v934, %v937
  %v953 = vadd.f32 %v952, %v942
  %v954 = vadd.f32 %v953, %v945
  %v955 = vrot.slane %v954, 4
  %v956 = vadd.f32 %v954, %v955
  %v957 = vrot.slane %v956, 2
  %v958 = vadd.f32 %v956, %v957
  %v959 = vrot.slane %v958, 1
  %v960 = vadd.f32 %v958, %v959
  %961 = vst [vmem:[%s3] sm:$0x1] %v960
  %v962 = vmul.f32 %v934, %v934
  %v963 = vmul.f32 %v937, %v937
  %v964 = vmul.f32 %v942, %v942
  %v965 = vmul.f32 %v945, %v945
  %v966 = vadd.f32 %v962, %v963
  %v967 = vadd.f32 %v966, %v964
  %v968 = vadd.f32 %v967, %v965
  %v969 = vrot.slane %v968, 4
  %v970 = vadd.f32 %v968, %v969
  %v971 = vrot.slane %v970, 2
  %v972 = vadd.f32 %v970, %v971
  %v973 = vrot.slane %v972, 1
  %v974 = vadd.f32 %v972, %v973
  %975 = vst [vmem:[%s4] sm:$0x1] %v974
  // Predicated region
  $region10: #{resnet18_forward.16} parent=0 // pred_check
    _
  $region11: #{resnet18_forward.16} parent=0 // pred_check_branch
    %977 = sbr.rel (0) target = $region13
  $region12: #{resnet18_forward.16} parent=0 // pred_region
    _
  $region13: #{resnet18_forward.16} parent=0 // pred_fallthru
    _
  // Predicated region
  $region14: #{resnet18_forward.16} parent=0 // pred_check
    _
  $region15: #{resnet18_forward.16} parent=0 // pred_check_branch
    %979 = sbr.rel (0) target = $region17
  $region16: #{resnet18_forward.16} parent=0 // pred_region
    _
  $region17: #{resnet18_forward.16} parent=0 // pred_fallthru
    _
  // Predicated region
  $region18: #{resnet18_forward.16} parent=0 // pred_check
    _
  $region19: #{resnet18_forward.16} parent=0 // pred_check_branch
    %981 = sbr.rel (0) target = $region21
  $region20: #{resnet18_forward.16} parent=0 // pred_region
    _
  $region21: #{resnet18_forward.16} parent=0 // pred_fallthru
    _
  // Predicated region
  $region22: #{resnet18_forward.16} parent=0 // pred_check
    _
  $region23: #{resnet18_forward.16} parent=0 // pred_check_branch
    %983 = sbr.rel (0) target = $region25
  $region24: #{resnet18_forward.16} parent=0 // pred_region
    _
  $region25: #{resnet18_forward.16} parent=0 // pred_fallthru
    _
  // Predicated region
  $region26: #{resnet18_forward.16} parent=0 // pred_check
    _
  $region27: #{resnet18_forward.16} parent=0 // pred_check_branch
    %985 = sbr.rel (0) target = $region29
  $region28: #{resnet18_forward.16} parent=0 // pred_region
    _
  $region29: #{resnet18_forward.16} parent=0 // pred_fallthru
    _
  // Predicated region
  $region30: #{resnet18_forward.16} parent=0 // pred_check
    _
  $region31: #{resnet18_forward.16} parent=0 // pred_check_branch
    %987 = sbr.rel (0) target = $region33
  $region32: #{resnet18_forward.16} parent=0 // pred_region
    _
  $region33: #{resnet18_forward.16} parent=0 // pred_fallthru
    _

</llo_original>
